<compile_context>
chip_gen: v5e
topology: v5e:2x2
jax: 0.10.0
libtpu: 0.0.40
codegen_flags: <defaults>
</compile_context>

<pallas_src>
import math

import jax
import jax.numpy as jnp
from jax import lax
from jax.experimental import pallas as pl
from jax.experimental.pallas import tpu as pltpu

# ---------------- model hyper-parameters (small, synthetic) ----------------
NUM_LAYERS = 2        # num_decoder_layers
NHEAD      = 4
EMB        = 32       # emb_size
VOCAB      = 16       # tgt_vocab_size
FFN        = 64       # dim_feedforward
HEAD_DIM   = EMB // NHEAD


# ----------------------------- pure-JAX glue --------------------------------
def positional_encoding_table(maxlen):
    den = jnp.exp(-jnp.arange(0, EMB, 2, dtype=jnp.float32) * math.log(10000.0) / EMB)
    pos = jnp.arange(maxlen, dtype=jnp.float32)[:, None]
    pe = jnp.zeros((maxlen, EMB), jnp.float32)
    pe = pe.at[:, 0::2].set(jnp.sin(pos * den))
    pe = pe.at[:, 1::2].set(jnp.cos(pos * den))
    return pe


def generate_square_subsequent_mask(sz):
    lower = jnp.tril(jnp.ones((sz, sz), jnp.float32))
    return jnp.where(lower == 1.0, 0.0, -jnp.inf).astype(jnp.float32)


def init_params(key):
    L, E, F, V = NUM_LAYERS, EMB, FFN, VOCAB
    keys = iter(jax.random.split(key, 40))

    def w(shape, scale=0.05):
        return jax.random.normal(next(keys), shape, jnp.float32) * scale

    return {
        'emb_w':  w((V, E), 0.2),
        'sa_in_w':  w((L, 3 * E, E)),  'sa_in_b':  w((L, 1, 3 * E), 0.01),
        'sa_out_w': w((L, E, E)),      'sa_out_b': w((L, 1, E), 0.01),
        'ca_in_w':  w((L, 3 * E, E)),  'ca_in_b':  w((L, 1, 3 * E), 0.01),
        'ca_out_w': w((L, E, E)),      'ca_out_b': w((L, 1, E), 0.01),
        'ff1_w': w((L, F, E)),         'ff1_b': w((L, 1, F), 0.01),
        'ff2_w': w((L, E, F)),         'ff2_b': w((L, 1, E), 0.01),
        'n1_w': 1.0 + w((L, 1, E), 0.02), 'n1_b': w((L, 1, E), 0.02),
        'n2_w': 1.0 + w((L, 1, E), 0.02), 'n2_b': w((L, 1, E), 0.02),
        'n3_w': 1.0 + w((L, 1, E), 0.02), 'n3_b': w((L, 1, E), 0.02),
        'fn_w': 1.0 + w((1, E), 0.02),    'fn_b': w((1, E), 0.02),
        'gen_w': w((V, E)),               'gen_b': w((1, V), 0.01),
    }


# ------------------------------ Pallas kernel --------------------------------
def _make_kernel(T, S):
    E, H, DH, F, V, L = EMB, NHEAD, HEAD_DIM, FFN, VOCAB, NUM_LAYERS
    f32, bf16 = jnp.float32, jnp.bfloat16
    sqrt_e = math.sqrt(E)
    inv_sqrt_dh = 1.0 / math.sqrt(DH)

    def layer_norm(x2, w, b):                      # x2: (N, E), w/b: (1, E), f32
        mu = jnp.mean(x2, axis=-1, keepdims=True)
        xc = x2 - mu
        var = jnp.mean(xc * xc, axis=-1, keepdims=True)
        return xc * lax.rsqrt(var + 1e-5) * w + b

    def split_heads(x2):                           # (Tx, E) f32 -> (H, Tx, DH) bf16
        xb = x2.astype(bf16)
        return jnp.stack([xb[:, h * DH:(h + 1) * DH] for h in range(H)], axis=0)

    def mha(xq2, xkv2, in_w, in_b, out_w, mask, is_self):
        # xq2 (Tq,E)/xkv2 (Tk,E) f32; in_w (E,3E) bf16; in_b (1,3E) f32;
        # out_w (E,E) bf16.  Output-proj bias is added by the caller.
        if is_self:
            qkv = jnp.dot(xq2.astype(bf16), in_w, preferred_element_type=f32) + in_b
            q2, k2, v2 = qkv[:, :E], qkv[:, E:2 * E], qkv[:, 2 * E:]
        else:
            q2 = (jnp.dot(xq2.astype(bf16), in_w[:, :E],
                          preferred_element_type=f32) + in_b[:, :E])
            kv = (jnp.dot(xkv2.astype(bf16), in_w[:, E:],
                          preferred_element_type=f32) + in_b[:, E:])
            k2, v2 = kv[:, :E], kv[:, E:]
        q, k, v = split_heads(q2), split_heads(k2), split_heads(v2)
        s = jnp.einsum('htd,hsd->hts', q, k,
                       preferred_element_type=f32) * inv_sqrt_dh    # (H,Tq,Tk) f32
        if mask is not None:
            s = s + mask[None]
        s = s - jnp.max(s, axis=-1, keepdims=True)
        p = jnp.exp(s)
        p = p * pl.reciprocal(jnp.sum(p, axis=-1, keepdims=True), approx=True)
        ctx = jnp.einsum('hts,hsd->htd', p.astype(bf16), v,
                         preferred_element_type=f32)                # (H,Tq,DH)
        ctx2 = jnp.concatenate([ctx[h] for h in range(H)], axis=1)  # (Tq, E)
        return jnp.dot(ctx2.astype(bf16), out_w, preferred_element_type=f32)

    def kernel(trg_ref, mem_ref, pe_ref, mask_ref, emb_w_ref,
               attn_in_w_ref, attn_in_b_ref, attn_out_w_ref,
               ff1_w_ref, ff1_b_ref, ff2_w_ref,
               vecs_ref, fn_ref, gen_w_ref, gen_b_ref, out_ref):
        # --- TokenEmbedding: one-hot built (V,T) (no id relayout) @ table ---
        ids = trg_ref[0]                                            # (1, T) int32
        onehot_vt = (lax.broadcasted_iota(jnp.int32, (V, T), 0) == ids).astype(bf16)
        tok = lax.dot_general(onehot_vt, emb_w_ref[...],
                              (((0,), (0,)), ((), ())),
                              preferred_element_type=f32)           # (T, E)

        # --- PositionalEncoding (dropout == identity at inference) ---
        pe = pe_ref[...]                                            # (P, E)
        x2 = tok * sqrt_e + pe[:T]                                  # (T, E) f32
        mem2 = mem_ref[0] + pe[:S]                                  # (S, E) f32
        mask = mask_ref[...]                                        # (T, T)

        for l in range(L):                                          # post-norm layers
            vec = vecs_ref[l]                                       # (9, E) f32
            sa_ob, ca_ob, ff2_b = vec[0:1], vec[1:2], vec[2:3]
            n1_w, n1_b = vec[3:4], vec[4:5]
            n2_w, n2_b = vec[5:6], vec[6:7]
            n3_w, n3_b = vec[7:8], vec[8:9]

            # masked self-attention block
            sa = mha(x2, x2, attn_in_w_ref[l, 0], attn_in_b_ref[l, 0],
                     attn_out_w_ref[l, 0], mask, True) + sa_ob
            x2 = layer_norm(x2 + sa, n1_w, n1_b)

            # cross-attention block (no mask)
            ca = mha(x2, mem2, attn_in_w_ref[l, 1], attn_in_b_ref[l, 1],
                     attn_out_w_ref[l, 1], None, False) + ca_ob
            x2 = layer_norm(x2 + ca, n2_w, n2_b)

            # feed-forward block (ReLU)
            h1 = jnp.maximum(
                jnp.dot(x2.astype(bf16), ff1_w_ref[l],
                        preferred_element_type=f32) + ff1_b_ref[l], 0.0)
            h2 = jnp.dot(h1.astype(bf16), ff2_w_ref[l],
                         preferred_element_type=f32) + ff2_b
            x2 = layer_norm(x2 + h2, n3_w, n3_b)

        # final decoder LayerNorm + generator Linear
        xf = layer_norm(x2, fn_ref[0:1], fn_ref[1:2])
        logits = (jnp.dot(xf.astype(bf16), gen_w_ref[...],
                          preferred_element_type=f32) + gen_b_ref[...])   # (T, V)

        # lane-dense store: last dim T*V (=128) -> unmasked vst
        flat = jnp.concatenate([logits[t:t + 1, :] for t in range(T)], axis=1)
        out_ref[...] = flat.reshape(1, 1, T * V)

    return kernel


# ------------------------------ wrapper --------------------------------------
def seq2seq_forward(params, src, trg, tgt_mask):
    """src: (B, S*EMB) f32, trg: (T, B) int, tgt_mask: (T, T) f32 -> (T, B, V)."""
    E, F, L, V = EMB, FFN, NUM_LAYERS, VOCAB
    B = src.shape[0]
    S = src.shape[1] // E
    T = trg.shape[0]
    P = max(S, T)
    f32, bf16 = jnp.float32, jnp.bfloat16
    p = params

    mem = src.reshape(B, S, E).astype(f32)                     # (B, S, E)
    trg_b = jnp.transpose(trg).astype(jnp.int32).reshape(B, 1, T)
    pe = positional_encoding_table(P).astype(f32)              # (P, E)

    # Pack weights into a few slabs (fewer DMAs). Matmul weights are bf16 and
    # pre-transposed to (in_features, out_features) so the kernel only does
    # x @ W MXU matmuls; biases / norm params stay f32.
    attn_in_w = jnp.stack([jnp.transpose(p['sa_in_w'], (0, 2, 1)),
                           jnp.transpose(p['ca_in_w'], (0, 2, 1))], axis=1).astype(bf16)
    attn_in_b = jnp.stack([p['sa_in_b'], p['ca_in_b']], axis=1).astype(f32)
    attn_out_w = jnp.stack([jnp.transpose(p['sa_out_w'], (0, 2, 1)),
                            jnp.transpose(p['ca_out_w'], (0, 2, 1))], axis=1).astype(bf16)
    ff1_w = jnp.transpose(p['ff1_w'], (0, 2, 1)).astype(bf16)  # (L, E, F)
    ff2_w = jnp.transpose(p['ff2_w'], (0, 2, 1)).astype(bf16)  # (L, F, E)
    vecs = jnp.concatenate([p['sa_out_b'], p['ca_out_b'], p['ff2_b'],
                            p['n1_w'], p['n1_b'], p['n2_w'], p['n2_b'],
                            p['n3_w'], p['n3_b']], axis=1).astype(f32)   # (L, 9, E)
    fn = jnp.concatenate([p['fn_w'], p['fn_b']], axis=0).astype(f32)      # (2, E)
    emb_w = p['emb_w'].astype(bf16)                            # (V, E)
    gen_w = jnp.transpose(p['gen_w']).astype(bf16)             # (E, V)
    gen_b = p['gen_b'].astype(f32)                             # (1, V)

    inputs = [trg_b, mem, pe, tgt_mask.astype(f32), emb_w,
              attn_in_w, attn_in_b, attn_out_w,
              ff1_w, p['ff1_b'].astype(f32), ff2_w,
              vecs, fn, gen_w, gen_b]

    def full_spec(shape):
        zeros = (0,) * len(shape)
        return pl.BlockSpec(shape, lambda b: zeros)

    in_specs = [
        pl.BlockSpec((1, 1, T), lambda b: (b, 0, 0)),          # trg  (per-batch)
        pl.BlockSpec((1, S, E), lambda b: (b, 0, 0)),          # memory (per-batch)
        full_spec((P, E)),                                     # positional table
        full_spec((T, T)),                                     # causal mask
        full_spec((V, E)),                                     # embedding table
        full_spec((L, 2, E, 3 * E)),                           # in_proj W (sa|ca)
        full_spec((L, 2, 1, 3 * E)),                           # in_proj b (sa|ca)
        full_spec((L, 2, E, E)),                               # out_proj W (sa|ca)
        full_spec((L, E, F)),                                  # FFN W1
        full_spec((L, 1, F)),                                  # FFN b1
        full_spec((L, F, E)),                                  # FFN W2
        full_spec((L, 9, E)),                                  # packed E-wide vecs
        full_spec((2, E)),                                     # final norm w/b
        full_spec((E, V)),                                     # generator W
        full_spec((1, V)),                                     # generator b
    ]

    out_bf = pl.pallas_call(
        _make_kernel(T, S),
        grid=(B,),
        out_shape=jax.ShapeDtypeStruct((B, 1, T * V), f32),
        in_specs=in_specs,
        out_specs=pl.BlockSpec((1, 1, T * V), lambda b: (b, 0, 0)),
        compiler_params=pltpu.CompilerParams(
            dimension_semantics=("parallel",)),
    )(*inputs)

    return jnp.transpose(out_bf.reshape(B, T, V), (1, 0, 2))   # (T, B, V)


# --------------------------- pure-JAX reference -------------------------------
def reference_forward(params, src, trg, tgt_mask):
    E, H, DH = EMB, NHEAD, HEAD_DIM
    B = src.shape[0]
    S = src.shape[1] // E
    T = trg.shape[0]
    p = params

    mem = src.reshape(B, S, E) + positional_encoding_table(S)[None]
    x = p['emb_w'][jnp.transpose(trg)] * math.sqrt(E) + positional_encoding_table(T)[None]

    def ln(v, w, b):
        mu = v.mean(-1, keepdims=True)
        var = ((v - mu) ** 2).mean(-1, keepdims=True)
        return (v - mu) / jnp.sqrt(var + 1e-5) * w + b

    def mha(xq, xkv, in_w, in_b, out_w, out_b, mask):
        in_b, out_b = in_b[0], out_b[0]
        q = xq @ in_w[:E].T + in_b[:E]
        k = xkv @ in_w[E:2 * E].T + in_b[E:2 * E]
        v = xkv @ in_w[2 * E:].T + in_b[2 * E:]
        q = q.reshape(B, -1, H, DH)
        k = k.reshape(B, -1, H, DH)
        v = v.reshape(B, -1, H, DH)
        s = jnp.einsum('bthd,bshd->bhts', q, k) / math.sqrt(DH)
        if mask is not None:
            s = s + mask
        a = jax.nn.softmax(s, axis=-1)
        o = jnp.einsum('bhts,bshd->bthd', a, v).reshape(B, -1, E)
        return o @ out_w.T + out_b

    for l in range(NUM_LAYERS):
        x = ln(x + mha(x, x, p['sa_in_w'][l], p['sa_in_b'][l],
                       p['sa_out_w'][l], p['sa_out_b'][l], tgt_mask),
               p['n1_w'][l], p['n1_b'][l])
        x = ln(x + mha(x, mem, p['ca_in_w'][l], p['ca_in_b'][l],
                       p['ca_out_w'][l], p['ca_out_b'][l], None),
               p['n2_w'][l], p['n2_b'][l])
        h = jax.nn.relu(x @ p['ff1_w'][l].T + p['ff1_b'][l][0])
        x = ln(x + (h @ p['ff2_w'][l].T + p['ff2_b'][l][0]),
               p['n3_w'][l], p['n3_b'][l])
    x = ln(x, p['fn_w'], p['fn_b'])
    logits = x @ p['gen_w'].T + p['gen_b']
    return jnp.transpose(logits, (1, 0, 2))


# ------------------------------- main -----------------------------------------
if __name__ == "__main__":
    B, S_SRC, T_TGT = 2, 4, 8
    key = jax.random.PRNGKey(0)
    k_p, k_src, k_trg = jax.random.split(key, 3)

    params = init_params(k_p)
    src = jax.random.normal(k_src, (B, S_SRC * EMB), jnp.float32)     # (2, 128)
    trg = jax.random.randint(k_trg, (T_TGT, B), 0, VOCAB, jnp.int32)  # (8, 2)
    tgt_mask = generate_square_subsequent_mask(T_TGT)                 # (8, 8)

    out = jax.block_until_ready(seq2seq_forward(params, src, trg, tgt_mask))
    ref = reference_forward(params, src, trg, tgt_mask)

    assert out.shape == (T_TGT, B, VOCAB), out.shape
    # tolerance widened vs f32-only version: kernel uses bf16 MXU inputs
    # (f32 accumulate) and an approx EUP reciprocal in softmax.
    assert jnp.allclose(out, ref, rtol=5e-2, atol=5e-2), \
        float(jnp.max(jnp.abs(out - ref)))
    print("KERNEL_OK")
</pallas_src>

<mosaic_0001>
module attributes {stable_mosaic.version = 11 : i64} {
  func.func @kernel(%arg0: i32, %arg1: memref<1x1x8xi32, #tpu.memory_space<vmem>>, %arg2: memref<1x4x32xf32, #tpu.memory_space<vmem>>, %arg3: memref<8x32xf32, #tpu.memory_space<vmem>>, %arg4: memref<8x8xf32, #tpu.memory_space<vmem>>, %arg5: memref<16x32xbf16, #tpu.memory_space<vmem>>, %arg6: memref<2x2x32x96xbf16, #tpu.memory_space<vmem>>, %arg7: memref<2x2x1x96xf32, #tpu.memory_space<vmem>>, %arg8: memref<2x2x32x32xbf16, #tpu.memory_space<vmem>>, %arg9: memref<2x32x64xbf16, #tpu.memory_space<vmem>>, %arg10: memref<2x1x64xf32, #tpu.memory_space<vmem>>, %arg11: memref<2x64x32xbf16, #tpu.memory_space<vmem>>, %arg12: memref<2x9x32xf32, #tpu.memory_space<vmem>>, %arg13: memref<2x32xf32, #tpu.memory_space<vmem>>, %arg14: memref<32x16xbf16, #tpu.memory_space<vmem>>, %arg15: memref<1x16xf32, #tpu.memory_space<vmem>>, %arg16: memref<1x1x128xf32, #tpu.memory_space<vmem>>) attributes {dimension_semantics = [#tpu.dimension_semantics<parallel>], iteration_bounds = array<i64: 2>, scalar_prefetch = 0 : i64, scratch_operands = 0 : i64, tpu.core_type = #tpu.core_type<tc>, window_params = [{transform_indices = @transform_0, window_bounds = array<i64: 1, 1, 8>}, {transform_indices = @transform_1, window_bounds = array<i64: 1, 4, 32>}, {pipeline_mode = #tpu.pipeline_mode<synchronous>, transform_indices = @transform_2, window_bounds = array<i64: 8, 32>}, {pipeline_mode = #tpu.pipeline_mode<synchronous>, transform_indices = @transform_3, window_bounds = array<i64: 8, 8>}, {pipeline_mode = #tpu.pipeline_mode<synchronous>, transform_indices = @transform_4, window_bounds = array<i64: 16, 32>}, {pipeline_mode = #tpu.pipeline_mode<synchronous>, transform_indices = @transform_5, window_bounds = array<i64: 2, 2, 32, 96>}, {pipeline_mode = #tpu.pipeline_mode<synchronous>, transform_indices = @transform_6, window_bounds = array<i64: 2, 2, 1, 96>}, {pipeline_mode = #tpu.pipeline_mode<synchronous>, transform_indices = @transform_7, window_bounds = array<i64: 2, 2, 32, 32>}, {pipeline_mode = #tpu.pipeline_mode<synchronous>, transform_indices = @transform_8, window_bounds = array<i64: 2, 32, 64>}, {pipeline_mode = #tpu.pipeline_mode<synchronous>, transform_indices = @transform_9, window_bounds = array<i64: 2, 1, 64>}, {pipeline_mode = #tpu.pipeline_mode<synchronous>, transform_indices = @transform_10, window_bounds = array<i64: 2, 64, 32>}, {pipeline_mode = #tpu.pipeline_mode<synchronous>, transform_indices = @transform_11, window_bounds = array<i64: 2, 9, 32>}, {pipeline_mode = #tpu.pipeline_mode<synchronous>, transform_indices = @transform_12, window_bounds = array<i64: 2, 32>}, {pipeline_mode = #tpu.pipeline_mode<synchronous>, transform_indices = @transform_13, window_bounds = array<i64: 32, 16>}, {pipeline_mode = #tpu.pipeline_mode<synchronous>, transform_indices = @transform_14, window_bounds = array<i64: 1, 16>}, {transform_indices = @transform_15, window_bounds = array<i64: 1, 1, 128>}]} {
    %c0 = arith.constant 0 : index
    %c0_0 = arith.constant 0 : index
    %c0_1 = arith.constant 0 : index
    %0 = vector.load %arg1[%c0, %c0_0, %c0_1] : memref<1x1x8xi32, #tpu.memory_space<vmem>>, vector<1x1x8xi32>
    %1 = vector.shape_cast %0 : vector<1x1x8xi32> to vector<1x8xi32>
    %2 = tpu.iota {dimensions = array<i32: 0>} : vector<16x8xi32>
    %3 = vector.broadcast %1 : vector<1x8xi32> to vector<16x8xi32>
    %4 = arith.cmpi eq, %2, %3 : vector<16x8xi32>
    %5 = arith.extui %4 : vector<16x8xi1> to vector<16x8xi32>
    %6 = arith.sitofp %5 : vector<16x8xi32> to vector<16x8xf32>
    %7 = arith.truncf %6 : vector<16x8xf32> to vector<16x8xbf16>
    %c0_2 = arith.constant 0 : index
    %c0_3 = arith.constant 0 : index
    %8 = vector.load %arg5[%c0_2, %c0_3] : memref<16x32xbf16, #tpu.memory_space<vmem>>, vector<16x32xbf16>
    %cst = arith.constant dense<0.000000e+00> : vector<8x32xf32>
    %9 = tpu.matmul %7, %8, %cst {dimension_numbers = #tpu.dot_dimension_numbers<[0], [0], [1], [1], [0, 1, 1, 1], [], []>} : vector<16x8xbf16>, vector<16x32xbf16>, vector<8x32xf32> -> vector<8x32xf32>
    %c0_4 = arith.constant 0 : index
    %c0_5 = arith.constant 0 : index
    %10 = vector.load %arg3[%c0_4, %c0_5] : memref<8x32xf32, #tpu.memory_space<vmem>>, vector<8x32xf32>
    %cst_6 = arith.constant 5.65685415 : f32
    %11 = vector.broadcast %cst_6 : f32 to vector<8x32xf32>
    %12 = arith.mulf %9, %11 : vector<8x32xf32>
    %13 = arith.addf %12, %10 : vector<8x32xf32>
    %c0_7 = arith.constant 0 : index
    %c0_8 = arith.constant 0 : index
    %c0_9 = arith.constant 0 : index
    %14 = vector.load %arg2[%c0_7, %c0_8, %c0_9] : memref<1x4x32xf32, #tpu.memory_space<vmem>>, vector<1x4x32xf32>
    %15 = vector.shape_cast %14 : vector<1x4x32xf32> to vector<4x32xf32>
    %16 = vector.extract_strided_slice %10 {offsets = [0, 0], sizes = [4, 32], strides = [1, 1]} : vector<8x32xf32> to vector<4x32xf32>
    %17 = arith.addf %15, %16 : vector<4x32xf32>
    %c0_10 = arith.constant 0 : index
    %c0_11 = arith.constant 0 : index
    %18 = vector.load %arg4[%c0_10, %c0_11] : memref<8x8xf32, #tpu.memory_space<vmem>>, vector<8x8xf32>
    %c0_12 = arith.constant 0 : index
    %c0_13 = arith.constant 0 : index
    %c0_14 = arith.constant 0 : index
    %19 = vector.load %arg12[%c0_12, %c0_13, %c0_14] : memref<2x9x32xf32, #tpu.memory_space<vmem>>, vector<1x9x32xf32>
    %20 = vector.shape_cast %19 : vector<1x9x32xf32> to vector<9x32xf32>
    %21 = vector.extract_strided_slice %20 {offsets = [0, 0], sizes = [1, 32], strides = [1, 1]} : vector<9x32xf32> to vector<1x32xf32>
    %22 = vector.extract_strided_slice %20 {offsets = [1, 0], sizes = [1, 32], strides = [1, 1]} : vector<9x32xf32> to vector<1x32xf32>
    %23 = vector.extract_strided_slice %20 {offsets = [2, 0], sizes = [1, 32], strides = [1, 1]} : vector<9x32xf32> to vector<1x32xf32>
    %24 = vector.extract_strided_slice %20 {offsets = [3, 0], sizes = [1, 32], strides = [1, 1]} : vector<9x32xf32> to vector<1x32xf32>
    %25 = vector.extract_strided_slice %20 {offsets = [4, 0], sizes = [1, 32], strides = [1, 1]} : vector<9x32xf32> to vector<1x32xf32>
    %26 = vector.extract_strided_slice %20 {offsets = [5, 0], sizes = [1, 32], strides = [1, 1]} : vector<9x32xf32> to vector<1x32xf32>
    %27 = vector.extract_strided_slice %20 {offsets = [6, 0], sizes = [1, 32], strides = [1, 1]} : vector<9x32xf32> to vector<1x32xf32>
    %28 = vector.extract_strided_slice %20 {offsets = [7, 0], sizes = [1, 32], strides = [1, 1]} : vector<9x32xf32> to vector<1x32xf32>
    %29 = vector.extract_strided_slice %20 {offsets = [8, 0], sizes = [1, 32], strides = [1, 1]} : vector<9x32xf32> to vector<1x32xf32>
    %c0_15 = arith.constant 0 : index
    %c0_16 = arith.constant 0 : index
    %c0_17 = arith.constant 0 : index
    %c0_18 = arith.constant 0 : index
    %30 = vector.load %arg6[%c0_15, %c0_16, %c0_17, %c0_18] : memref<2x2x32x96xbf16, #tpu.memory_space<vmem>>, vector<1x1x32x96xbf16>
    %31 = vector.shape_cast %30 : vector<1x1x32x96xbf16> to vector<32x96xbf16>
    %c0_19 = arith.constant 0 : index
    %c0_20 = arith.constant 0 : index
    %c0_21 = arith.constant 0 : index
    %c0_22 = arith.constant 0 : index
    %32 = vector.load %arg7[%c0_19, %c0_20, %c0_21, %c0_22] : memref<2x2x1x96xf32, #tpu.memory_space<vmem>>, vector<1x1x1x96xf32>
    %33 = vector.shape_cast %32 : vector<1x1x1x96xf32> to vector<1x96xf32>
    %c0_23 = arith.constant 0 : index
    %c0_24 = arith.constant 0 : index
    %c0_25 = arith.constant 0 : index
    %c0_26 = arith.constant 0 : index
    %34 = vector.load %arg8[%c0_23, %c0_24, %c0_25, %c0_26] : memref<2x2x32x32xbf16, #tpu.memory_space<vmem>>, vector<1x1x32x32xbf16>
    %35 = vector.shape_cast %34 : vector<1x1x32x32xbf16> to vector<32x32xbf16>
    %36 = arith.truncf %13 : vector<8x32xf32> to vector<8x32xbf16>
    %cst_27 = arith.constant dense<0.000000e+00> : vector<8x96xf32>
    %37 = tpu.matmul %36, %31, %cst_27 {dimension_numbers = #tpu.dot_dimension_numbers<[1], [0], [0], [1], [0, 0, 1, 1], [], []>} : vector<8x32xbf16>, vector<32x96xbf16>, vector<8x96xf32> -> vector<8x96xf32>
    %38 = vector.broadcast %33 : vector<1x96xf32> to vector<8x96xf32>
    %39 = arith.addf %37, %38 : vector<8x96xf32>
    %40 = vector.extract_strided_slice %39 {offsets = [0, 0], sizes = [8, 32], strides = [1, 1]} : vector<8x96xf32> to vector<8x32xf32>
    %41 = vector.extract_strided_slice %39 {offsets = [0, 32], sizes = [8, 32], strides = [1, 1]} : vector<8x96xf32> to vector<8x32xf32>
    %42 = vector.extract_strided_slice %39 {offsets = [0, 64], sizes = [8, 32], strides = [1, 1]} : vector<8x96xf32> to vector<8x32xf32>
    %43 = arith.truncf %40 : vector<8x32xf32> to vector<8x32xbf16>
    %44 = vector.extract_strided_slice %43 {offsets = [0, 0], sizes = [8, 8], strides = [1, 1]} : vector<8x32xbf16> to vector<8x8xbf16>
    %45 = vector.extract_strided_slice %43 {offsets = [0, 8], sizes = [8, 8], strides = [1, 1]} : vector<8x32xbf16> to vector<8x8xbf16>
    %46 = vector.extract_strided_slice %43 {offsets = [0, 16], sizes = [8, 8], strides = [1, 1]} : vector<8x32xbf16> to vector<8x8xbf16>
    %47 = vector.extract_strided_slice %43 {offsets = [0, 24], sizes = [8, 8], strides = [1, 1]} : vector<8x32xbf16> to vector<8x8xbf16>
    %48 = vector.shape_cast %44 : vector<8x8xbf16> to vector<1x8x8xbf16>
    %49 = vector.shape_cast %45 : vector<8x8xbf16> to vector<1x8x8xbf16>
    %50 = vector.shape_cast %46 : vector<8x8xbf16> to vector<1x8x8xbf16>
    %51 = vector.shape_cast %47 : vector<8x8xbf16> to vector<1x8x8xbf16>
    %52 = tpu.concatenate %48, %49, %50, %51 in 0 : vector<1x8x8xbf16>, vector<1x8x8xbf16>, vector<1x8x8xbf16>, vector<1x8x8xbf16> -> vector<4x8x8xbf16>
    %53 = arith.truncf %41 : vector<8x32xf32> to vector<8x32xbf16>
    %54 = vector.extract_strided_slice %53 {offsets = [0, 0], sizes = [8, 8], strides = [1, 1]} : vector<8x32xbf16> to vector<8x8xbf16>
    %55 = vector.extract_strided_slice %53 {offsets = [0, 8], sizes = [8, 8], strides = [1, 1]} : vector<8x32xbf16> to vector<8x8xbf16>
    %56 = vector.extract_strided_slice %53 {offsets = [0, 16], sizes = [8, 8], strides = [1, 1]} : vector<8x32xbf16> to vector<8x8xbf16>
    %57 = vector.extract_strided_slice %53 {offsets = [0, 24], sizes = [8, 8], strides = [1, 1]} : vector<8x32xbf16> to vector<8x8xbf16>
    %58 = vector.shape_cast %54 : vector<8x8xbf16> to vector<1x8x8xbf16>
    %59 = vector.shape_cast %55 : vector<8x8xbf16> to vector<1x8x8xbf16>
    %60 = vector.shape_cast %56 : vector<8x8xbf16> to vector<1x8x8xbf16>
    %61 = vector.shape_cast %57 : vector<8x8xbf16> to vector<1x8x8xbf16>
    %62 = tpu.concatenate %58, %59, %60, %61 in 0 : vector<1x8x8xbf16>, vector<1x8x8xbf16>, vector<1x8x8xbf16>, vector<1x8x8xbf16> -> vector<4x8x8xbf16>
    %63 = arith.truncf %42 : vector<8x32xf32> to vector<8x32xbf16>
    %64 = vector.extract_strided_slice %63 {offsets = [0, 0], sizes = [8, 8], strides = [1, 1]} : vector<8x32xbf16> to vector<8x8xbf16>
    %65 = vector.extract_strided_slice %63 {offsets = [0, 8], sizes = [8, 8], strides = [1, 1]} : vector<8x32xbf16> to vector<8x8xbf16>
    %66 = vector.extract_strided_slice %63 {offsets = [0, 16], sizes = [8, 8], strides = [1, 1]} : vector<8x32xbf16> to vector<8x8xbf16>
    %67 = vector.extract_strided_slice %63 {offsets = [0, 24], sizes = [8, 8], strides = [1, 1]} : vector<8x32xbf16> to vector<8x8xbf16>
    %68 = vector.shape_cast %64 : vector<8x8xbf16> to vector<1x8x8xbf16>
    %69 = vector.shape_cast %65 : vector<8x8xbf16> to vector<1x8x8xbf16>
    %70 = vector.shape_cast %66 : vector<8x8xbf16> to vector<1x8x8xbf16>
    %71 = vector.shape_cast %67 : vector<8x8xbf16> to vector<1x8x8xbf16>
    %72 = tpu.concatenate %68, %69, %70, %71 in 0 : vector<1x8x8xbf16>, vector<1x8x8xbf16>, vector<1x8x8xbf16>, vector<1x8x8xbf16> -> vector<4x8x8xbf16>
    "tpu.trace_start"() <{level = 10 : i32, message = "htd,hsd->hts"}> : () -> ()
    %cst_28 = arith.constant dense<0.000000e+00> : vector<4x8x8xf32>
    %73 = tpu.matmul %52, %62, %cst_28 {dimension_numbers = #tpu.dot_dimension_numbers<[2], [2], [1], [1], [0, 0, 0, 1, 1, 1], [0], [0]>} : vector<4x8x8xbf16>, vector<4x8x8xbf16>, vector<4x8x8xf32> -> vector<4x8x8xf32>
    "tpu.trace_stop"() : () -> ()
    %cst_29 = arith.constant 0.353553385 : f32
    %74 = vector.broadcast %cst_29 : f32 to vector<4x8x8xf32>
    %75 = arith.mulf %73, %74 : vector<4x8x8xf32>
    %76 = vector.shape_cast %18 : vector<8x8xf32> to vector<1x8x8xf32>
    %77 = vector.broadcast %76 : vector<1x8x8xf32> to vector<4x8x8xf32>
    %78 = arith.addf %75, %77 : vector<4x8x8xf32>
    %cst_30 = arith.constant dense<0xFF800000> : vector<4x8xf32>
    %79 = vector.multi_reduction <maximumf>, %78, %cst_30 [2] : vector<4x8x8xf32> to vector<4x8xf32>
    %80 = vector.shape_cast %79 : vector<4x8xf32> to vector<4x8x1xf32>
    %81 = vector.broadcast %80 : vector<4x8x1xf32> to vector<4x8x8xf32>
    %82 = arith.subf %78, %81 : vector<4x8x8xf32>
    %83 = math.exp %82 : vector<4x8x8xf32>
    %cst_31 = arith.constant dense<0.000000e+00> : vector<4x8xf32>
    %84 = vector.multi_reduction <add>, %83, %cst_31 [2] : vector<4x8x8xf32> to vector<4x8xf32>
    %85 = vector.shape_cast %84 : vector<4x8xf32> to vector<4x8x1xf32>
    %86 = tpu.reciprocal %85 {approx = true} : vector<4x8x1xf32> -> vector<4x8x1xf32>
    %87 = vector.broadcast %86 : vector<4x8x1xf32> to vector<4x8x8xf32>
    %88 = arith.mulf %83, %87 : vector<4x8x8xf32>
    %89 = arith.truncf %88 : vector<4x8x8xf32> to vector<4x8x8xbf16>
    "tpu.trace_start"() <{level = 10 : i32, message = "hts,hsd->htd"}> : () -> ()
    %cst_32 = arith.constant dense<0.000000e+00> : vector<4x8x8xf32>
    %90 = tpu.matmul %89, %72, %cst_32 {dimension_numbers = #tpu.dot_dimension_numbers<[2], [1], [1], [2], [0, 0, 0, 1, 1, 2], [0], [0]>} : vector<4x8x8xbf16>, vector<4x8x8xbf16>, vector<4x8x8xf32> -> vector<4x8x8xf32>
    "tpu.trace_stop"() : () -> ()
    %91 = vector.extract_strided_slice %90 {offsets = [0, 0, 0], sizes = [1, 8, 8], strides = [1, 1, 1]} : vector<4x8x8xf32> to vector<1x8x8xf32>
    %92 = vector.shape_cast %91 : vector<1x8x8xf32> to vector<8x8xf32>
    %93 = vector.extract_strided_slice %90 {offsets = [1, 0, 0], sizes = [1, 8, 8], strides = [1, 1, 1]} : vector<4x8x8xf32> to vector<1x8x8xf32>
    %94 = vector.shape_cast %93 : vector<1x8x8xf32> to vector<8x8xf32>
    %95 = vector.extract_strided_slice %90 {offsets = [2, 0, 0], sizes = [1, 8, 8], strides = [1, 1, 1]} : vector<4x8x8xf32> to vector<1x8x8xf32>
    %96 = vector.shape_cast %95 : vector<1x8x8xf32> to vector<8x8xf32>
    %97 = vector.extract_strided_slice %90 {offsets = [3, 0, 0], sizes = [1, 8, 8], strides = [1, 1, 1]} : vector<4x8x8xf32> to vector<1x8x8xf32>
    %98 = vector.shape_cast %97 : vector<1x8x8xf32> to vector<8x8xf32>
    %99 = tpu.concatenate %92, %94, %96, %98 in 1 : vector<8x8xf32>, vector<8x8xf32>, vector<8x8xf32>, vector<8x8xf32> -> vector<8x32xf32>
    %100 = arith.truncf %99 : vector<8x32xf32> to vector<8x32xbf16>
    %cst_33 = arith.constant dense<0.000000e+00> : vector<8x32xf32>
    %101 = tpu.matmul %100, %35, %cst_33 {dimension_numbers = #tpu.dot_dimension_numbers<[1], [0], [0], [1], [0, 0, 1, 1], [], []>} : vector<8x32xbf16>, vector<32x32xbf16>, vector<8x32xf32> -> vector<8x32xf32>
    %102 = vector.broadcast %21 : vector<1x32xf32> to vector<8x32xf32>
    %103 = arith.addf %101, %102 : vector<8x32xf32>
    %104 = arith.addf %13, %103 : vector<8x32xf32>
    %cst_34 = arith.constant dense<0.000000e+00> : vector<8xf32>
    %105 = vector.multi_reduction <add>, %104, %cst_34 [1] : vector<8x32xf32> to vector<8xf32>
    %106 = vector.shape_cast %105 : vector<8xf32> to vector<8x1xf32>
    %cst_35 = arith.constant 3.200000e+01 : f32
    %107 = vector.broadcast %cst_35 : f32 to vector<8x1xf32>
    %108 = arith.divf %106, %107 : vector<8x1xf32>
    %109 = vector.broadcast %108 : vector<8x1xf32> to vector<8x32xf32>
    %110 = arith.subf %104, %109 : vector<8x32xf32>
    %111 = arith.mulf %110, %110 : vector<8x32xf32>
    %cst_36 = arith.constant dense<0.000000e+00> : vector<8xf32>
    %112 = vector.multi_reduction <add>, %111, %cst_36 [1] : vector<8x32xf32> to vector<8xf32>
    %113 = vector.shape_cast %112 : vector<8xf32> to vector<8x1xf32>
    %cst_37 = arith.constant 3.200000e+01 : f32
    %114 = vector.broadcast %cst_37 : f32 to vector<8x1xf32>
    %115 = arith.divf %113, %114 : vector<8x1xf32>
    %cst_38 = arith.constant 9.99999974E-6 : f32
    %116 = vector.broadcast %cst_38 : f32 to vector<8x1xf32>
    %117 = arith.addf %115, %116 : vector<8x1xf32>
    %118 = math.rsqrt %117 : vector<8x1xf32>
    %119 = vector.broadcast %118 : vector<8x1xf32> to vector<8x32xf32>
    %120 = arith.mulf %110, %119 : vector<8x32xf32>
    %121 = vector.broadcast %24 : vector<1x32xf32> to vector<8x32xf32>
    %122 = arith.mulf %120, %121 : vector<8x32xf32>
    %123 = vector.broadcast %25 : vector<1x32xf32> to vector<8x32xf32>
    %124 = arith.addf %122, %123 : vector<8x32xf32>
    %c0_39 = arith.constant 0 : index
    %c1 = arith.constant 1 : index
    %c0_40 = arith.constant 0 : index
    %c0_41 = arith.constant 0 : index
    %125 = vector.load %arg6[%c0_39, %c1, %c0_40, %c0_41] : memref<2x2x32x96xbf16, #tpu.memory_space<vmem>>, vector<1x1x32x96xbf16>
    %126 = vector.shape_cast %125 : vector<1x1x32x96xbf16> to vector<32x96xbf16>
    %c0_42 = arith.constant 0 : index
    %c1_43 = arith.constant 1 : index
    %c0_44 = arith.constant 0 : index
    %c0_45 = arith.constant 0 : index
    %127 = vector.load %arg7[%c0_42, %c1_43, %c0_44, %c0_45] : memref<2x2x1x96xf32, #tpu.memory_space<vmem>>, vector<1x1x1x96xf32>
    %128 = vector.shape_cast %127 : vector<1x1x1x96xf32> to vector<1x96xf32>
    %c0_46 = arith.constant 0 : index
    %c1_47 = arith.constant 1 : index
    %c0_48 = arith.constant 0 : index
    %c0_49 = arith.constant 0 : index
    %129 = vector.load %arg8[%c0_46, %c1_47, %c0_48, %c0_49] : memref<2x2x32x32xbf16, #tpu.memory_space<vmem>>, vector<1x1x32x32xbf16>
    %130 = vector.shape_cast %129 : vector<1x1x32x32xbf16> to vector<32x32xbf16>
    %131 = arith.truncf %124 : vector<8x32xf32> to vector<8x32xbf16>
    %132 = vector.extract_strided_slice %126 {offsets = [0, 0], sizes = [32, 32], strides = [1, 1]} : vector<32x96xbf16> to vector<32x32xbf16>
    %cst_50 = arith.constant dense<0.000000e+00> : vector<8x32xf32>
    %133 = tpu.matmul %131, %132, %cst_50 {dimension_numbers = #tpu.dot_dimension_numbers<[1], [0], [0], [1], [0, 0, 1, 1], [], []>} : vector<8x32xbf16>, vector<32x32xbf16>, vector<8x32xf32> -> vector<8x32xf32>
    %134 = vector.extract_strided_slice %128 {offsets = [0, 0], sizes = [1, 32], strides = [1, 1]} : vector<1x96xf32> to vector<1x32xf32>
    %135 = vector.broadcast %134 : vector<1x32xf32> to vector<8x32xf32>
    %136 = arith.addf %133, %135 : vector<8x32xf32>
    %137 = arith.truncf %17 : vector<4x32xf32> to vector<4x32xbf16>
    %138 = vector.extract_strided_slice %126 {offsets = [0, 32], sizes = [32, 64], strides = [1, 1]} : vector<32x96xbf16> to vector<32x64xbf16>
    %cst_51 = arith.constant dense<0.000000e+00> : vector<4x64xf32>
    %139 = tpu.matmul %137, %138, %cst_51 {dimension_numbers = #tpu.dot_dimension_numbers<[1], [0], [0], [1], [0, 0, 1, 1], [], []>} : vector<4x32xbf16>, vector<32x64xbf16>, vector<4x64xf32> -> vector<4x64xf32>
    %140 = vector.extract_strided_slice %128 {offsets = [0, 32], sizes = [1, 64], strides = [1, 1]} : vector<1x96xf32> to vector<1x64xf32>
    %141 = vector.broadcast %140 : vector<1x64xf32> to vector<4x64xf32>
    %142 = arith.addf %139, %141 : vector<4x64xf32>
    %143 = vector.extract_strided_slice %142 {offsets = [0, 0], sizes = [4, 32], strides = [1, 1]} : vector<4x64xf32> to vector<4x32xf32>
    %144 = vector.extract_strided_slice %142 {offsets = [0, 32], sizes = [4, 32], strides = [1, 1]} : vector<4x64xf32> to vector<4x32xf32>
    %145 = arith.truncf %136 : vector<8x32xf32> to vector<8x32xbf16>
    %146 = vector.extract_strided_slice %145 {offsets = [0, 0], sizes = [8, 8], strides = [1, 1]} : vector<8x32xbf16> to vector<8x8xbf16>
    %147 = vector.extract_strided_slice %145 {offsets = [0, 8], sizes = [8, 8], strides = [1, 1]} : vector<8x32xbf16> to vector<8x8xbf16>
    %148 = vector.extract_strided_slice %145 {offsets = [0, 16], sizes = [8, 8], strides = [1, 1]} : vector<8x32xbf16> to vector<8x8xbf16>
    %149 = vector.extract_strided_slice %145 {offsets = [0, 24], sizes = [8, 8], strides = [1, 1]} : vector<8x32xbf16> to vector<8x8xbf16>
    %150 = vector.shape_cast %146 : vector<8x8xbf16> to vector<1x8x8xbf16>
    %151 = vector.shape_cast %147 : vector<8x8xbf16> to vector<1x8x8xbf16>
    %152 = vector.shape_cast %148 : vector<8x8xbf16> to vector<1x8x8xbf16>
    %153 = vector.shape_cast %149 : vector<8x8xbf16> to vector<1x8x8xbf16>
    %154 = tpu.concatenate %150, %151, %152, %153 in 0 : vector<1x8x8xbf16>, vector<1x8x8xbf16>, vector<1x8x8xbf16>, vector<1x8x8xbf16> -> vector<4x8x8xbf16>
    %155 = arith.truncf %143 : vector<4x32xf32> to vector<4x32xbf16>
    %156 = vector.extract_strided_slice %155 {offsets = [0, 0], sizes = [4, 8], strides = [1, 1]} : vector<4x32xbf16> to vector<4x8xbf16>
    %157 = vector.extract_strided_slice %155 {offsets = [0, 8], sizes = [4, 8], strides = [1, 1]} : vector<4x32xbf16> to vector<4x8xbf16>
    %158 = vector.extract_strided_slice %155 {offsets = [0, 16], sizes = [4, 8], strides = [1, 1]} : vector<4x32xbf16> to vector<4x8xbf16>
    %159 = vector.extract_strided_slice %155 {offsets = [0, 24], sizes = [4, 8], strides = [1, 1]} : vector<4x32xbf16> to vector<4x8xbf16>
    %160 = vector.shape_cast %156 : vector<4x8xbf16> to vector<1x4x8xbf16>
    %161 = vector.shape_cast %157 : vector<4x8xbf16> to vector<1x4x8xbf16>
    %162 = vector.shape_cast %158 : vector<4x8xbf16> to vector<1x4x8xbf16>
    %163 = vector.shape_cast %159 : vector<4x8xbf16> to vector<1x4x8xbf16>
    %164 = tpu.concatenate %160, %161, %162, %163 in 0 : vector<1x4x8xbf16>, vector<1x4x8xbf16>, vector<1x4x8xbf16>, vector<1x4x8xbf16> -> vector<4x4x8xbf16>
    %165 = arith.truncf %144 : vector<4x32xf32> to vector<4x32xbf16>
    %166 = vector.extract_strided_slice %165 {offsets = [0, 0], sizes = [4, 8], strides = [1, 1]} : vector<4x32xbf16> to vector<4x8xbf16>
    %167 = vector.extract_strided_slice %165 {offsets = [0, 8], sizes = [4, 8], strides = [1, 1]} : vector<4x32xbf16> to vector<4x8xbf16>
    %168 = vector.extract_strided_slice %165 {offsets = [0, 16], sizes = [4, 8], strides = [1, 1]} : vector<4x32xbf16> to vector<4x8xbf16>
    %169 = vector.extract_strided_slice %165 {offsets = [0, 24], sizes = [4, 8], strides = [1, 1]} : vector<4x32xbf16> to vector<4x8xbf16>
    %170 = vector.shape_cast %166 : vector<4x8xbf16> to vector<1x4x8xbf16>
    %171 = vector.shape_cast %167 : vector<4x8xbf16> to vector<1x4x8xbf16>
    %172 = vector.shape_cast %168 : vector<4x8xbf16> to vector<1x4x8xbf16>
    %173 = vector.shape_cast %169 : vector<4x8xbf16> to vector<1x4x8xbf16>
    %174 = tpu.concatenate %170, %171, %172, %173 in 0 : vector<1x4x8xbf16>, vector<1x4x8xbf16>, vector<1x4x8xbf16>, vector<1x4x8xbf16> -> vector<4x4x8xbf16>
    "tpu.trace_start"() <{level = 10 : i32, message = "htd,hsd->hts"}> : () -> ()
    %cst_52 = arith.constant dense<0.000000e+00> : vector<4x8x4xf32>
    %175 = tpu.matmul %154, %164, %cst_52 {dimension_numbers = #tpu.dot_dimension_numbers<[2], [2], [1], [1], [0, 0, 0, 1, 1, 1], [0], [0]>} : vector<4x8x8xbf16>, vector<4x4x8xbf16>, vector<4x8x4xf32> -> vector<4x8x4xf32>
    "tpu.trace_stop"() : () -> ()
    %cst_53 = arith.constant 0.353553385 : f32
    %176 = vector.broadcast %cst_53 : f32 to vector<4x8x4xf32>
    %177 = arith.mulf %175, %176 : vector<4x8x4xf32>
    %cst_54 = arith.constant dense<0xFF800000> : vector<4x8xf32>
    %178 = vector.multi_reduction <maximumf>, %177, %cst_54 [2] : vector<4x8x4xf32> to vector<4x8xf32>
    %179 = vector.shape_cast %178 : vector<4x8xf32> to vector<4x8x1xf32>
    %180 = vector.broadcast %179 : vector<4x8x1xf32> to vector<4x8x4xf32>
    %181 = arith.subf %177, %180 : vector<4x8x4xf32>
    %182 = math.exp %181 : vector<4x8x4xf32>
    %cst_55 = arith.constant dense<0.000000e+00> : vector<4x8xf32>
    %183 = vector.multi_reduction <add>, %182, %cst_55 [2] : vector<4x8x4xf32> to vector<4x8xf32>
    %184 = vector.shape_cast %183 : vector<4x8xf32> to vector<4x8x1xf32>
    %185 = tpu.reciprocal %184 {approx = true} : vector<4x8x1xf32> -> vector<4x8x1xf32>
    %186 = vector.broadcast %185 : vector<4x8x1xf32> to vector<4x8x4xf32>
    %187 = arith.mulf %182, %186 : vector<4x8x4xf32>
    %188 = arith.truncf %187 : vector<4x8x4xf32> to vector<4x8x4xbf16>
    "tpu.trace_start"() <{level = 10 : i32, message = "hts,hsd->htd"}> : () -> ()
    %cst_56 = arith.constant dense<0.000000e+00> : vector<4x8x8xf32>
    %189 = tpu.matmul %188, %174, %cst_56 {dimension_numbers = #tpu.dot_dimension_numbers<[2], [1], [1], [2], [0, 0, 0, 1, 1, 2], [0], [0]>} : vector<4x8x4xbf16>, vector<4x4x8xbf16>, vector<4x8x8xf32> -> vector<4x8x8xf32>
    "tpu.trace_stop"() : () -> ()
    %190 = vector.extract_strided_slice %189 {offsets = [0, 0, 0], sizes = [1, 8, 8], strides = [1, 1, 1]} : vector<4x8x8xf32> to vector<1x8x8xf32>
    %191 = vector.shape_cast %190 : vector<1x8x8xf32> to vector<8x8xf32>
    %192 = vector.extract_strided_slice %189 {offsets = [1, 0, 0], sizes = [1, 8, 8], strides = [1, 1, 1]} : vector<4x8x8xf32> to vector<1x8x8xf32>
    %193 = vector.shape_cast %192 : vector<1x8x8xf32> to vector<8x8xf32>
    %194 = vector.extract_strided_slice %189 {offsets = [2, 0, 0], sizes = [1, 8, 8], strides = [1, 1, 1]} : vector<4x8x8xf32> to vector<1x8x8xf32>
    %195 = vector.shape_cast %194 : vector<1x8x8xf32> to vector<8x8xf32>
    %196 = vector.extract_strided_slice %189 {offsets = [3, 0, 0], sizes = [1, 8, 8], strides = [1, 1, 1]} : vector<4x8x8xf32> to vector<1x8x8xf32>
    %197 = vector.shape_cast %196 : vector<1x8x8xf32> to vector<8x8xf32>
    %198 = tpu.concatenate %191, %193, %195, %197 in 1 : vector<8x8xf32>, vector<8x8xf32>, vector<8x8xf32>, vector<8x8xf32> -> vector<8x32xf32>
    %199 = arith.truncf %198 : vector<8x32xf32> to vector<8x32xbf16>
    %cst_57 = arith.constant dense<0.000000e+00> : vector<8x32xf32>
    %200 = tpu.matmul %199, %130, %cst_57 {dimension_numbers = #tpu.dot_dimension_numbers<[1], [0], [0], [1], [0, 0, 1, 1], [], []>} : vector<8x32xbf16>, vector<32x32xbf16>, vector<8x32xf32> -> vector<8x32xf32>
    %201 = vector.broadcast %22 : vector<1x32xf32> to vector<8x32xf32>
    %202 = arith.addf %200, %201 : vector<8x32xf32>
    %203 = arith.addf %124, %202 : vector<8x32xf32>
    %cst_58 = arith.constant dense<0.000000e+00> : vector<8xf32>
    %204 = vector.multi_reduction <add>, %203, %cst_58 [1] : vector<8x32xf32> to vector<8xf32>
    %205 = vector.shape_cast %204 : vector<8xf32> to vector<8x1xf32>
    %cst_59 = arith.constant 3.200000e+01 : f32
    %206 = vector.broadcast %cst_59 : f32 to vector<8x1xf32>
    %207 = arith.divf %205, %206 : vector<8x1xf32>
    %208 = vector.broadcast %207 : vector<8x1xf32> to vector<8x32xf32>
    %209 = arith.subf %203, %208 : vector<8x32xf32>
    %210 = arith.mulf %209, %209 : vector<8x32xf32>
    %cst_60 = arith.constant dense<0.000000e+00> : vector<8xf32>
    %211 = vector.multi_reduction <add>, %210, %cst_60 [1] : vector<8x32xf32> to vector<8xf32>
    %212 = vector.shape_cast %211 : vector<8xf32> to vector<8x1xf32>
    %cst_61 = arith.constant 3.200000e+01 : f32
    %213 = vector.broadcast %cst_61 : f32 to vector<8x1xf32>
    %214 = arith.divf %212, %213 : vector<8x1xf32>
    %cst_62 = arith.constant 9.99999974E-6 : f32
    %215 = vector.broadcast %cst_62 : f32 to vector<8x1xf32>
    %216 = arith.addf %214, %215 : vector<8x1xf32>
    %217 = math.rsqrt %216 : vector<8x1xf32>
    %218 = vector.broadcast %217 : vector<8x1xf32> to vector<8x32xf32>
    %219 = arith.mulf %209, %218 : vector<8x32xf32>
    %220 = vector.broadcast %26 : vector<1x32xf32> to vector<8x32xf32>
    %221 = arith.mulf %219, %220 : vector<8x32xf32>
    %222 = vector.broadcast %27 : vector<1x32xf32> to vector<8x32xf32>
    %223 = arith.addf %221, %222 : vector<8x32xf32>
    %224 = arith.truncf %223 : vector<8x32xf32> to vector<8x32xbf16>
    %c0_63 = arith.constant 0 : index
    %c0_64 = arith.constant 0 : index
    %c0_65 = arith.constant 0 : index
    %225 = vector.load %arg9[%c0_63, %c0_64, %c0_65] : memref<2x32x64xbf16, #tpu.memory_space<vmem>>, vector<1x32x64xbf16>
    %226 = vector.shape_cast %225 : vector<1x32x64xbf16> to vector<32x64xbf16>
    %cst_66 = arith.constant dense<0.000000e+00> : vector<8x64xf32>
    %227 = tpu.matmul %224, %226, %cst_66 {dimension_numbers = #tpu.dot_dimension_numbers<[1], [0], [0], [1], [0, 0, 1, 1], [], []>} : vector<8x32xbf16>, vector<32x64xbf16>, vector<8x64xf32> -> vector<8x64xf32>
    %c0_67 = arith.constant 0 : index
    %c0_68 = arith.constant 0 : index
    %c0_69 = arith.constant 0 : index
    %228 = vector.load %arg10[%c0_67, %c0_68, %c0_69] : memref<2x1x64xf32, #tpu.memory_space<vmem>>, vector<1x1x64xf32>
    %229 = vector.shape_cast %228 : vector<1x1x64xf32> to vector<1x64xf32>
    %230 = vector.broadcast %229 : vector<1x64xf32> to vector<8x64xf32>
    %231 = arith.addf %227, %230 : vector<8x64xf32>
    %cst_70 = arith.constant 0.000000e+00 : f32
    %232 = vector.broadcast %cst_70 : f32 to vector<8x64xf32>
    %233 = arith.maximumf %231, %232 : vector<8x64xf32>
    %234 = arith.truncf %233 : vector<8x64xf32> to vector<8x64xbf16>
    %c0_71 = arith.constant 0 : index
    %c0_72 = arith.constant 0 : index
    %c0_73 = arith.constant 0 : index
    %235 = vector.load %arg11[%c0_71, %c0_72, %c0_73] : memref<2x64x32xbf16, #tpu.memory_space<vmem>>, vector<1x64x32xbf16>
    %236 = vector.shape_cast %235 : vector<1x64x32xbf16> to vector<64x32xbf16>
    %cst_74 = arith.constant dense<0.000000e+00> : vector<8x32xf32>
    %237 = tpu.matmul %234, %236, %cst_74 {dimension_numbers = #tpu.dot_dimension_numbers<[1], [0], [0], [1], [0, 0, 1, 1], [], []>} : vector<8x64xbf16>, vector<64x32xbf16>, vector<8x32xf32> -> vector<8x32xf32>
    %238 = vector.broadcast %23 : vector<1x32xf32> to vector<8x32xf32>
    %239 = arith.addf %237, %238 : vector<8x32xf32>
    %240 = arith.addf %223, %239 : vector<8x32xf32>
    %cst_75 = arith.constant dense<0.000000e+00> : vector<8xf32>
    %241 = vector.multi_reduction <add>, %240, %cst_75 [1] : vector<8x32xf32> to vector<8xf32>
    %242 = vector.shape_cast %241 : vector<8xf32> to vector<8x1xf32>
    %cst_76 = arith.constant 3.200000e+01 : f32
    %243 = vector.broadcast %cst_76 : f32 to vector<8x1xf32>
    %244 = arith.divf %242, %243 : vector<8x1xf32>
    %245 = vector.broadcast %244 : vector<8x1xf32> to vector<8x32xf32>
    %246 = arith.subf %240, %245 : vector<8x32xf32>
    %247 = arith.mulf %246, %246 : vector<8x32xf32>
    %cst_77 = arith.constant dense<0.000000e+00> : vector<8xf32>
    %248 = vector.multi_reduction <add>, %247, %cst_77 [1] : vector<8x32xf32> to vector<8xf32>
    %249 = vector.shape_cast %248 : vector<8xf32> to vector<8x1xf32>
    %cst_78 = arith.constant 3.200000e+01 : f32
    %250 = vector.broadcast %cst_78 : f32 to vector<8x1xf32>
    %251 = arith.divf %249, %250 : vector<8x1xf32>
    %cst_79 = arith.constant 9.99999974E-6 : f32
    %252 = vector.broadcast %cst_79 : f32 to vector<8x1xf32>
    %253 = arith.addf %251, %252 : vector<8x1xf32>
    %254 = math.rsqrt %253 : vector<8x1xf32>
    %255 = vector.broadcast %254 : vector<8x1xf32> to vector<8x32xf32>
    %256 = arith.mulf %246, %255 : vector<8x32xf32>
    %257 = vector.broadcast %28 : vector<1x32xf32> to vector<8x32xf32>
    %258 = arith.mulf %256, %257 : vector<8x32xf32>
    %259 = vector.broadcast %29 : vector<1x32xf32> to vector<8x32xf32>
    %260 = arith.addf %258, %259 : vector<8x32xf32>
    %c1_80 = arith.constant 1 : index
    %c0_81 = arith.constant 0 : index
    %c0_82 = arith.constant 0 : index
    %261 = vector.load %arg12[%c1_80, %c0_81, %c0_82] : memref<2x9x32xf32, #tpu.memory_space<vmem>>, vector<1x9x32xf32>
    %262 = vector.shape_cast %261 : vector<1x9x32xf32> to vector<9x32xf32>
    %263 = vector.extract_strided_slice %262 {offsets = [0, 0], sizes = [1, 32], strides = [1, 1]} : vector<9x32xf32> to vector<1x32xf32>
    %264 = vector.extract_strided_slice %262 {offsets = [1, 0], sizes = [1, 32], strides = [1, 1]} : vector<9x32xf32> to vector<1x32xf32>
    %265 = vector.extract_strided_slice %262 {offsets = [2, 0], sizes = [1, 32], strides = [1, 1]} : vector<9x32xf32> to vector<1x32xf32>
    %266 = vector.extract_strided_slice %262 {offsets = [3, 0], sizes = [1, 32], strides = [1, 1]} : vector<9x32xf32> to vector<1x32xf32>
    %267 = vector.extract_strided_slice %262 {offsets = [4, 0], sizes = [1, 32], strides = [1, 1]} : vector<9x32xf32> to vector<1x32xf32>
    %268 = vector.extract_strided_slice %262 {offsets = [5, 0], sizes = [1, 32], strides = [1, 1]} : vector<9x32xf32> to vector<1x32xf32>
    %269 = vector.extract_strided_slice %262 {offsets = [6, 0], sizes = [1, 32], strides = [1, 1]} : vector<9x32xf32> to vector<1x32xf32>
    %270 = vector.extract_strided_slice %262 {offsets = [7, 0], sizes = [1, 32], strides = [1, 1]} : vector<9x32xf32> to vector<1x32xf32>
    %271 = vector.extract_strided_slice %262 {offsets = [8, 0], sizes = [1, 32], strides = [1, 1]} : vector<9x32xf32> to vector<1x32xf32>
    %c1_83 = arith.constant 1 : index
    %c0_84 = arith.constant 0 : index
    %c0_85 = arith.constant 0 : index
    %c0_86 = arith.constant 0 : index
    %272 = vector.load %arg6[%c1_83, %c0_84, %c0_85, %c0_86] : memref<2x2x32x96xbf16, #tpu.memory_space<vmem>>, vector<1x1x32x96xbf16>
    %273 = vector.shape_cast %272 : vector<1x1x32x96xbf16> to vector<32x96xbf16>
    %c1_87 = arith.constant 1 : index
    %c0_88 = arith.constant 0 : index
    %c0_89 = arith.constant 0 : index
    %c0_90 = arith.constant 0 : index
    %274 = vector.load %arg7[%c1_87, %c0_88, %c0_89, %c0_90] : memref<2x2x1x96xf32, #tpu.memory_space<vmem>>, vector<1x1x1x96xf32>
    %275 = vector.shape_cast %274 : vector<1x1x1x96xf32> to vector<1x96xf32>
    %c1_91 = arith.constant 1 : index
    %c0_92 = arith.constant 0 : index
    %c0_93 = arith.constant 0 : index
    %c0_94 = arith.constant 0 : index
    %276 = vector.load %arg8[%c1_91, %c0_92, %c0_93, %c0_94] : memref<2x2x32x32xbf16, #tpu.memory_space<vmem>>, vector<1x1x32x32xbf16>
    %277 = vector.shape_cast %276 : vector<1x1x32x32xbf16> to vector<32x32xbf16>
    %278 = arith.truncf %260 : vector<8x32xf32> to vector<8x32xbf16>
    %cst_95 = arith.constant dense<0.000000e+00> : vector<8x96xf32>
    %279 = tpu.matmul %278, %273, %cst_95 {dimension_numbers = #tpu.dot_dimension_numbers<[1], [0], [0], [1], [0, 0, 1, 1], [], []>} : vector<8x32xbf16>, vector<32x96xbf16>, vector<8x96xf32> -> vector<8x96xf32>
    %280 = vector.broadcast %275 : vector<1x96xf32> to vector<8x96xf32>
    %281 = arith.addf %279, %280 : vector<8x96xf32>
    %282 = vector.extract_strided_slice %281 {offsets = [0, 0], sizes = [8, 32], strides = [1, 1]} : vector<8x96xf32> to vector<8x32xf32>
    %283 = vector.extract_strided_slice %281 {offsets = [0, 32], sizes = [8, 32], strides = [1, 1]} : vector<8x96xf32> to vector<8x32xf32>
    %284 = vector.extract_strided_slice %281 {offsets = [0, 64], sizes = [8, 32], strides = [1, 1]} : vector<8x96xf32> to vector<8x32xf32>
    %285 = arith.truncf %282 : vector<8x32xf32> to vector<8x32xbf16>
    %286 = vector.extract_strided_slice %285 {offsets = [0, 0], sizes = [8, 8], strides = [1, 1]} : vector<8x32xbf16> to vector<8x8xbf16>
    %287 = vector.extract_strided_slice %285 {offsets = [0, 8], sizes = [8, 8], strides = [1, 1]} : vector<8x32xbf16> to vector<8x8xbf16>
    %288 = vector.extract_strided_slice %285 {offsets = [0, 16], sizes = [8, 8], strides = [1, 1]} : vector<8x32xbf16> to vector<8x8xbf16>
    %289 = vector.extract_strided_slice %285 {offsets = [0, 24], sizes = [8, 8], strides = [1, 1]} : vector<8x32xbf16> to vector<8x8xbf16>
    %290 = vector.shape_cast %286 : vector<8x8xbf16> to vector<1x8x8xbf16>
    %291 = vector.shape_cast %287 : vector<8x8xbf16> to vector<1x8x8xbf16>
    %292 = vector.shape_cast %288 : vector<8x8xbf16> to vector<1x8x8xbf16>
    %293 = vector.shape_cast %289 : vector<8x8xbf16> to vector<1x8x8xbf16>
    %294 = tpu.concatenate %290, %291, %292, %293 in 0 : vector<1x8x8xbf16>, vector<1x8x8xbf16>, vector<1x8x8xbf16>, vector<1x8x8xbf16> -> vector<4x8x8xbf16>
    %295 = arith.truncf %283 : vector<8x32xf32> to vector<8x32xbf16>
    %296 = vector.extract_strided_slice %295 {offsets = [0, 0], sizes = [8, 8], strides = [1, 1]} : vector<8x32xbf16> to vector<8x8xbf16>
    %297 = vector.extract_strided_slice %295 {offsets = [0, 8], sizes = [8, 8], strides = [1, 1]} : vector<8x32xbf16> to vector<8x8xbf16>
    %298 = vector.extract_strided_slice %295 {offsets = [0, 16], sizes = [8, 8], strides = [1, 1]} : vector<8x32xbf16> to vector<8x8xbf16>
    %299 = vector.extract_strided_slice %295 {offsets = [0, 24], sizes = [8, 8], strides = [1, 1]} : vector<8x32xbf16> to vector<8x8xbf16>
    %300 = vector.shape_cast %296 : vector<8x8xbf16> to vector<1x8x8xbf16>
    %301 = vector.shape_cast %297 : vector<8x8xbf16> to vector<1x8x8xbf16>
    %302 = vector.shape_cast %298 : vector<8x8xbf16> to vector<1x8x8xbf16>
    %303 = vector.shape_cast %299 : vector<8x8xbf16> to vector<1x8x8xbf16>
    %304 = tpu.concatenate %300, %301, %302, %303 in 0 : vector<1x8x8xbf16>, vector<1x8x8xbf16>, vector<1x8x8xbf16>, vector<1x8x8xbf16> -> vector<4x8x8xbf16>
    %305 = arith.truncf %284 : vector<8x32xf32> to vector<8x32xbf16>
    %306 = vector.extract_strided_slice %305 {offsets = [0, 0], sizes = [8, 8], strides = [1, 1]} : vector<8x32xbf16> to vector<8x8xbf16>
    %307 = vector.extract_strided_slice %305 {offsets = [0, 8], sizes = [8, 8], strides = [1, 1]} : vector<8x32xbf16> to vector<8x8xbf16>
    %308 = vector.extract_strided_slice %305 {offsets = [0, 16], sizes = [8, 8], strides = [1, 1]} : vector<8x32xbf16> to vector<8x8xbf16>
    %309 = vector.extract_strided_slice %305 {offsets = [0, 24], sizes = [8, 8], strides = [1, 1]} : vector<8x32xbf16> to vector<8x8xbf16>
    %310 = vector.shape_cast %306 : vector<8x8xbf16> to vector<1x8x8xbf16>
    %311 = vector.shape_cast %307 : vector<8x8xbf16> to vector<1x8x8xbf16>
    %312 = vector.shape_cast %308 : vector<8x8xbf16> to vector<1x8x8xbf16>
    %313 = vector.shape_cast %309 : vector<8x8xbf16> to vector<1x8x8xbf16>
    %314 = tpu.concatenate %310, %311, %312, %313 in 0 : vector<1x8x8xbf16>, vector<1x8x8xbf16>, vector<1x8x8xbf16>, vector<1x8x8xbf16> -> vector<4x8x8xbf16>
    "tpu.trace_start"() <{level = 10 : i32, message = "htd,hsd->hts"}> : () -> ()
    %cst_96 = arith.constant dense<0.000000e+00> : vector<4x8x8xf32>
    %315 = tpu.matmul %294, %304, %cst_96 {dimension_numbers = #tpu.dot_dimension_numbers<[2], [2], [1], [1], [0, 0, 0, 1, 1, 1], [0], [0]>} : vector<4x8x8xbf16>, vector<4x8x8xbf16>, vector<4x8x8xf32> -> vector<4x8x8xf32>
    "tpu.trace_stop"() : () -> ()
    %cst_97 = arith.constant 0.353553385 : f32
    %316 = vector.broadcast %cst_97 : f32 to vector<4x8x8xf32>
    %317 = arith.mulf %315, %316 : vector<4x8x8xf32>
    %318 = vector.shape_cast %18 : vector<8x8xf32> to vector<1x8x8xf32>
    %319 = vector.broadcast %318 : vector<1x8x8xf32> to vector<4x8x8xf32>
    %320 = arith.addf %317, %319 : vector<4x8x8xf32>
    %cst_98 = arith.constant dense<0xFF800000> : vector<4x8xf32>
    %321 = vector.multi_reduction <maximumf>, %320, %cst_98 [2] : vector<4x8x8xf32> to vector<4x8xf32>
    %322 = vector.shape_cast %321 : vector<4x8xf32> to vector<4x8x1xf32>
    %323 = vector.broadcast %322 : vector<4x8x1xf32> to vector<4x8x8xf32>
    %324 = arith.subf %320, %323 : vector<4x8x8xf32>
    %325 = math.exp %324 : vector<4x8x8xf32>
    %cst_99 = arith.constant dense<0.000000e+00> : vector<4x8xf32>
    %326 = vector.multi_reduction <add>, %325, %cst_99 [2] : vector<4x8x8xf32> to vector<4x8xf32>
    %327 = vector.shape_cast %326 : vector<4x8xf32> to vector<4x8x1xf32>
    %328 = tpu.reciprocal %327 {approx = true} : vector<4x8x1xf32> -> vector<4x8x1xf32>
    %329 = vector.broadcast %328 : vector<4x8x1xf32> to vector<4x8x8xf32>
    %330 = arith.mulf %325, %329 : vector<4x8x8xf32>
    %331 = arith.truncf %330 : vector<4x8x8xf32> to vector<4x8x8xbf16>
    "tpu.trace_start"() <{level = 10 : i32, message = "hts,hsd->htd"}> : () -> ()
    %cst_100 = arith.constant dense<0.000000e+00> : vector<4x8x8xf32>
    %332 = tpu.matmul %331, %314, %cst_100 {dimension_numbers = #tpu.dot_dimension_numbers<[2], [1], [1], [2], [0, 0, 0, 1, 1, 2], [0], [0]>} : vector<4x8x8xbf16>, vector<4x8x8xbf16>, vector<4x8x8xf32> -> vector<4x8x8xf32>
    "tpu.trace_stop"() : () -> ()
    %333 = vector.extract_strided_slice %332 {offsets = [0, 0, 0], sizes = [1, 8, 8], strides = [1, 1, 1]} : vector<4x8x8xf32> to vector<1x8x8xf32>
    %334 = vector.shape_cast %333 : vector<1x8x8xf32> to vector<8x8xf32>
    %335 = vector.extract_strided_slice %332 {offsets = [1, 0, 0], sizes = [1, 8, 8], strides = [1, 1, 1]} : vector<4x8x8xf32> to vector<1x8x8xf32>
    %336 = vector.shape_cast %335 : vector<1x8x8xf32> to vector<8x8xf32>
    %337 = vector.extract_strided_slice %332 {offsets = [2, 0, 0], sizes = [1, 8, 8], strides = [1, 1, 1]} : vector<4x8x8xf32> to vector<1x8x8xf32>
    %338 = vector.shape_cast %337 : vector<1x8x8xf32> to vector<8x8xf32>
    %339 = vector.extract_strided_slice %332 {offsets = [3, 0, 0], sizes = [1, 8, 8], strides = [1, 1, 1]} : vector<4x8x8xf32> to vector<1x8x8xf32>
    %340 = vector.shape_cast %339 : vector<1x8x8xf32> to vector<8x8xf32>
    %341 = tpu.concatenate %334, %336, %338, %340 in 1 : vector<8x8xf32>, vector<8x8xf32>, vector<8x8xf32>, vector<8x8xf32> -> vector<8x32xf32>
    %342 = arith.truncf %341 : vector<8x32xf32> to vector<8x32xbf16>
    %cst_101 = arith.constant dense<0.000000e+00> : vector<8x32xf32>
    %343 = tpu.matmul %342, %277, %cst_101 {dimension_numbers = #tpu.dot_dimension_numbers<[1], [0], [0], [1], [0, 0, 1, 1], [], []>} : vector<8x32xbf16>, vector<32x32xbf16>, vector<8x32xf32> -> vector<8x32xf32>
    %344 = vector.broadcast %263 : vector<1x32xf32> to vector<8x32xf32>
    %345 = arith.addf %343, %344 : vector<8x32xf32>
    %346 = arith.addf %260, %345 : vector<8x32xf32>
    %cst_102 = arith.constant dense<0.000000e+00> : vector<8xf32>
    %347 = vector.multi_reduction <add>, %346, %cst_102 [1] : vector<8x32xf32> to vector<8xf32>
    %348 = vector.shape_cast %347 : vector<8xf32> to vector<8x1xf32>
    %cst_103 = arith.constant 3.200000e+01 : f32
    %349 = vector.broadcast %cst_103 : f32 to vector<8x1xf32>
    %350 = arith.divf %348, %349 : vector<8x1xf32>
    %351 = vector.broadcast %350 : vector<8x1xf32> to vector<8x32xf32>
    %352 = arith.subf %346, %351 : vector<8x32xf32>
    %353 = arith.mulf %352, %352 : vector<8x32xf32>
    %cst_104 = arith.constant dense<0.000000e+00> : vector<8xf32>
    %354 = vector.multi_reduction <add>, %353, %cst_104 [1] : vector<8x32xf32> to vector<8xf32>
    %355 = vector.shape_cast %354 : vector<8xf32> to vector<8x1xf32>
    %cst_105 = arith.constant 3.200000e+01 : f32
    %356 = vector.broadcast %cst_105 : f32 to vector<8x1xf32>
    %357 = arith.divf %355, %356 : vector<8x1xf32>
    %cst_106 = arith.constant 9.99999974E-6 : f32
    %358 = vector.broadcast %cst_106 : f32 to vector<8x1xf32>
    %359 = arith.addf %357, %358 : vector<8x1xf32>
    %360 = math.rsqrt %359 : vector<8x1xf32>
    %361 = vector.broadcast %360 : vector<8x1xf32> to vector<8x32xf32>
    %362 = arith.mulf %352, %361 : vector<8x32xf32>
    %363 = vector.broadcast %266 : vector<1x32xf32> to vector<8x32xf32>
    %364 = arith.mulf %362, %363 : vector<8x32xf32>
    %365 = vector.broadcast %267 : vector<1x32xf32> to vector<8x32xf32>
    %366 = arith.addf %364, %365 : vector<8x32xf32>
    %c1_107 = arith.constant 1 : index
    %c1_108 = arith.constant 1 : index
    %c0_109 = arith.constant 0 : index
    %c0_110 = arith.constant 0 : index
    %367 = vector.load %arg6[%c1_107, %c1_108, %c0_109, %c0_110] : memref<2x2x32x96xbf16, #tpu.memory_space<vmem>>, vector<1x1x32x96xbf16>
    %368 = vector.shape_cast %367 : vector<1x1x32x96xbf16> to vector<32x96xbf16>
    %c1_111 = arith.constant 1 : index
    %c1_112 = arith.constant 1 : index
    %c0_113 = arith.constant 0 : index
    %c0_114 = arith.constant 0 : index
    %369 = vector.load %arg7[%c1_111, %c1_112, %c0_113, %c0_114] : memref<2x2x1x96xf32, #tpu.memory_space<vmem>>, vector<1x1x1x96xf32>
    %370 = vector.shape_cast %369 : vector<1x1x1x96xf32> to vector<1x96xf32>
    %c1_115 = arith.constant 1 : index
    %c1_116 = arith.constant 1 : index
    %c0_117 = arith.constant 0 : index
    %c0_118 = arith.constant 0 : index
    %371 = vector.load %arg8[%c1_115, %c1_116, %c0_117, %c0_118] : memref<2x2x32x32xbf16, #tpu.memory_space<vmem>>, vector<1x1x32x32xbf16>
    %372 = vector.shape_cast %371 : vector<1x1x32x32xbf16> to vector<32x32xbf16>
    %373 = arith.truncf %366 : vector<8x32xf32> to vector<8x32xbf16>
    %374 = vector.extract_strided_slice %368 {offsets = [0, 0], sizes = [32, 32], strides = [1, 1]} : vector<32x96xbf16> to vector<32x32xbf16>
    %cst_119 = arith.constant dense<0.000000e+00> : vector<8x32xf32>
    %375 = tpu.matmul %373, %374, %cst_119 {dimension_numbers = #tpu.dot_dimension_numbers<[1], [0], [0], [1], [0, 0, 1, 1], [], []>} : vector<8x32xbf16>, vector<32x32xbf16>, vector<8x32xf32> -> vector<8x32xf32>
    %376 = vector.extract_strided_slice %370 {offsets = [0, 0], sizes = [1, 32], strides = [1, 1]} : vector<1x96xf32> to vector<1x32xf32>
    %377 = vector.broadcast %376 : vector<1x32xf32> to vector<8x32xf32>
    %378 = arith.addf %375, %377 : vector<8x32xf32>
    %379 = arith.truncf %17 : vector<4x32xf32> to vector<4x32xbf16>
    %380 = vector.extract_strided_slice %368 {offsets = [0, 32], sizes = [32, 64], strides = [1, 1]} : vector<32x96xbf16> to vector<32x64xbf16>
    %cst_120 = arith.constant dense<0.000000e+00> : vector<4x64xf32>
    %381 = tpu.matmul %379, %380, %cst_120 {dimension_numbers = #tpu.dot_dimension_numbers<[1], [0], [0], [1], [0, 0, 1, 1], [], []>} : vector<4x32xbf16>, vector<32x64xbf16>, vector<4x64xf32> -> vector<4x64xf32>
    %382 = vector.extract_strided_slice %370 {offsets = [0, 32], sizes = [1, 64], strides = [1, 1]} : vector<1x96xf32> to vector<1x64xf32>
    %383 = vector.broadcast %382 : vector<1x64xf32> to vector<4x64xf32>
    %384 = arith.addf %381, %383 : vector<4x64xf32>
    %385 = vector.extract_strided_slice %384 {offsets = [0, 0], sizes = [4, 32], strides = [1, 1]} : vector<4x64xf32> to vector<4x32xf32>
    %386 = vector.extract_strided_slice %384 {offsets = [0, 32], sizes = [4, 32], strides = [1, 1]} : vector<4x64xf32> to vector<4x32xf32>
    %387 = arith.truncf %378 : vector<8x32xf32> to vector<8x32xbf16>
    %388 = vector.extract_strided_slice %387 {offsets = [0, 0], sizes = [8, 8], strides = [1, 1]} : vector<8x32xbf16> to vector<8x8xbf16>
    %389 = vector.extract_strided_slice %387 {offsets = [0, 8], sizes = [8, 8], strides = [1, 1]} : vector<8x32xbf16> to vector<8x8xbf16>
    %390 = vector.extract_strided_slice %387 {offsets = [0, 16], sizes = [8, 8], strides = [1, 1]} : vector<8x32xbf16> to vector<8x8xbf16>
    %391 = vector.extract_strided_slice %387 {offsets = [0, 24], sizes = [8, 8], strides = [1, 1]} : vector<8x32xbf16> to vector<8x8xbf16>
    %392 = vector.shape_cast %388 : vector<8x8xbf16> to vector<1x8x8xbf16>
    %393 = vector.shape_cast %389 : vector<8x8xbf16> to vector<1x8x8xbf16>
    %394 = vector.shape_cast %390 : vector<8x8xbf16> to vector<1x8x8xbf16>
    %395 = vector.shape_cast %391 : vector<8x8xbf16> to vector<1x8x8xbf16>
    %396 = tpu.concatenate %392, %393, %394, %395 in 0 : vector<1x8x8xbf16>, vector<1x8x8xbf16>, vector<1x8x8xbf16>, vector<1x8x8xbf16> -> vector<4x8x8xbf16>
    %397 = arith.truncf %385 : vector<4x32xf32> to vector<4x32xbf16>
    %398 = vector.extract_strided_slice %397 {offsets = [0, 0], sizes = [4, 8], strides = [1, 1]} : vector<4x32xbf16> to vector<4x8xbf16>
    %399 = vector.extract_strided_slice %397 {offsets = [0, 8], sizes = [4, 8], strides = [1, 1]} : vector<4x32xbf16> to vector<4x8xbf16>
    %400 = vector.extract_strided_slice %397 {offsets = [0, 16], sizes = [4, 8], strides = [1, 1]} : vector<4x32xbf16> to vector<4x8xbf16>
    %401 = vector.extract_strided_slice %397 {offsets = [0, 24], sizes = [4, 8], strides = [1, 1]} : vector<4x32xbf16> to vector<4x8xbf16>
    %402 = vector.shape_cast %398 : vector<4x8xbf16> to vector<1x4x8xbf16>
    %403 = vector.shape_cast %399 : vector<4x8xbf16> to vector<1x4x8xbf16>
    %404 = vector.shape_cast %400 : vector<4x8xbf16> to vector<1x4x8xbf16>
    %405 = vector.shape_cast %401 : vector<4x8xbf16> to vector<1x4x8xbf16>
    %406 = tpu.concatenate %402, %403, %404, %405 in 0 : vector<1x4x8xbf16>, vector<1x4x8xbf16>, vector<1x4x8xbf16>, vector<1x4x8xbf16> -> vector<4x4x8xbf16>
    %407 = arith.truncf %386 : vector<4x32xf32> to vector<4x32xbf16>
    %408 = vector.extract_strided_slice %407 {offsets = [0, 0], sizes = [4, 8], strides = [1, 1]} : vector<4x32xbf16> to vector<4x8xbf16>
    %409 = vector.extract_strided_slice %407 {offsets = [0, 8], sizes = [4, 8], strides = [1, 1]} : vector<4x32xbf16> to vector<4x8xbf16>
    %410 = vector.extract_strided_slice %407 {offsets = [0, 16], sizes = [4, 8], strides = [1, 1]} : vector<4x32xbf16> to vector<4x8xbf16>
    %411 = vector.extract_strided_slice %407 {offsets = [0, 24], sizes = [4, 8], strides = [1, 1]} : vector<4x32xbf16> to vector<4x8xbf16>
    %412 = vector.shape_cast %408 : vector<4x8xbf16> to vector<1x4x8xbf16>
    %413 = vector.shape_cast %409 : vector<4x8xbf16> to vector<1x4x8xbf16>
    %414 = vector.shape_cast %410 : vector<4x8xbf16> to vector<1x4x8xbf16>
    %415 = vector.shape_cast %411 : vector<4x8xbf16> to vector<1x4x8xbf16>
    %416 = tpu.concatenate %412, %413, %414, %415 in 0 : vector<1x4x8xbf16>, vector<1x4x8xbf16>, vector<1x4x8xbf16>, vector<1x4x8xbf16> -> vector<4x4x8xbf16>
    "tpu.trace_start"() <{level = 10 : i32, message = "htd,hsd->hts"}> : () -> ()
    %cst_121 = arith.constant dense<0.000000e+00> : vector<4x8x4xf32>
    %417 = tpu.matmul %396, %406, %cst_121 {dimension_numbers = #tpu.dot_dimension_numbers<[2], [2], [1], [1], [0, 0, 0, 1, 1, 1], [0], [0]>} : vector<4x8x8xbf16>, vector<4x4x8xbf16>, vector<4x8x4xf32> -> vector<4x8x4xf32>
    "tpu.trace_stop"() : () -> ()
    %cst_122 = arith.constant 0.353553385 : f32
    %418 = vector.broadcast %cst_122 : f32 to vector<4x8x4xf32>
    %419 = arith.mulf %417, %418 : vector<4x8x4xf32>
    %cst_123 = arith.constant dense<0xFF800000> : vector<4x8xf32>
    %420 = vector.multi_reduction <maximumf>, %419, %cst_123 [2] : vector<4x8x4xf32> to vector<4x8xf32>
    %421 = vector.shape_cast %420 : vector<4x8xf32> to vector<4x8x1xf32>
    %422 = vector.broadcast %421 : vector<4x8x1xf32> to vector<4x8x4xf32>
    %423 = arith.subf %419, %422 : vector<4x8x4xf32>
    %424 = math.exp %423 : vector<4x8x4xf32>
    %cst_124 = arith.constant dense<0.000000e+00> : vector<4x8xf32>
    %425 = vector.multi_reduction <add>, %424, %cst_124 [2] : vector<4x8x4xf32> to vector<4x8xf32>
    %426 = vector.shape_cast %425 : vector<4x8xf32> to vector<4x8x1xf32>
    %427 = tpu.reciprocal %426 {approx = true} : vector<4x8x1xf32> -> vector<4x8x1xf32>
    %428 = vector.broadcast %427 : vector<4x8x1xf32> to vector<4x8x4xf32>
    %429 = arith.mulf %424, %428 : vector<4x8x4xf32>
    %430 = arith.truncf %429 : vector<4x8x4xf32> to vector<4x8x4xbf16>
    "tpu.trace_start"() <{level = 10 : i32, message = "hts,hsd->htd"}> : () -> ()
    %cst_125 = arith.constant dense<0.000000e+00> : vector<4x8x8xf32>
    %431 = tpu.matmul %430, %416, %cst_125 {dimension_numbers = #tpu.dot_dimension_numbers<[2], [1], [1], [2], [0, 0, 0, 1, 1, 2], [0], [0]>} : vector<4x8x4xbf16>, vector<4x4x8xbf16>, vector<4x8x8xf32> -> vector<4x8x8xf32>
    "tpu.trace_stop"() : () -> ()
    %432 = vector.extract_strided_slice %431 {offsets = [0, 0, 0], sizes = [1, 8, 8], strides = [1, 1, 1]} : vector<4x8x8xf32> to vector<1x8x8xf32>
    %433 = vector.shape_cast %432 : vector<1x8x8xf32> to vector<8x8xf32>
    %434 = vector.extract_strided_slice %431 {offsets = [1, 0, 0], sizes = [1, 8, 8], strides = [1, 1, 1]} : vector<4x8x8xf32> to vector<1x8x8xf32>
    %435 = vector.shape_cast %434 : vector<1x8x8xf32> to vector<8x8xf32>
    %436 = vector.extract_strided_slice %431 {offsets = [2, 0, 0], sizes = [1, 8, 8], strides = [1, 1, 1]} : vector<4x8x8xf32> to vector<1x8x8xf32>
    %437 = vector.shape_cast %436 : vector<1x8x8xf32> to vector<8x8xf32>
    %438 = vector.extract_strided_slice %431 {offsets = [3, 0, 0], sizes = [1, 8, 8], strides = [1, 1, 1]} : vector<4x8x8xf32> to vector<1x8x8xf32>
    %439 = vector.shape_cast %438 : vector<1x8x8xf32> to vector<8x8xf32>
    %440 = tpu.concatenate %433, %435, %437, %439 in 1 : vector<8x8xf32>, vector<8x8xf32>, vector<8x8xf32>, vector<8x8xf32> -> vector<8x32xf32>
    %441 = arith.truncf %440 : vector<8x32xf32> to vector<8x32xbf16>
    %cst_126 = arith.constant dense<0.000000e+00> : vector<8x32xf32>
    %442 = tpu.matmul %441, %372, %cst_126 {dimension_numbers = #tpu.dot_dimension_numbers<[1], [0], [0], [1], [0, 0, 1, 1], [], []>} : vector<8x32xbf16>, vector<32x32xbf16>, vector<8x32xf32> -> vector<8x32xf32>
    %443 = vector.broadcast %264 : vector<1x32xf32> to vector<8x32xf32>
    %444 = arith.addf %442, %443 : vector<8x32xf32>
    %445 = arith.addf %366, %444 : vector<8x32xf32>
    %cst_127 = arith.constant dense<0.000000e+00> : vector<8xf32>
    %446 = vector.multi_reduction <add>, %445, %cst_127 [1] : vector<8x32xf32> to vector<8xf32>
    %447 = vector.shape_cast %446 : vector<8xf32> to vector<8x1xf32>
    %cst_128 = arith.constant 3.200000e+01 : f32
    %448 = vector.broadcast %cst_128 : f32 to vector<8x1xf32>
    %449 = arith.divf %447, %448 : vector<8x1xf32>
    %450 = vector.broadcast %449 : vector<8x1xf32> to vector<8x32xf32>
    %451 = arith.subf %445, %450 : vector<8x32xf32>
    %452 = arith.mulf %451, %451 : vector<8x32xf32>
    %cst_129 = arith.constant dense<0.000000e+00> : vector<8xf32>
    %453 = vector.multi_reduction <add>, %452, %cst_129 [1] : vector<8x32xf32> to vector<8xf32>
    %454 = vector.shape_cast %453 : vector<8xf32> to vector<8x1xf32>
    %cst_130 = arith.constant 3.200000e+01 : f32
    %455 = vector.broadcast %cst_130 : f32 to vector<8x1xf32>
    %456 = arith.divf %454, %455 : vector<8x1xf32>
    %cst_131 = arith.constant 9.99999974E-6 : f32
    %457 = vector.broadcast %cst_131 : f32 to vector<8x1xf32>
    %458 = arith.addf %456, %457 : vector<8x1xf32>
    %459 = math.rsqrt %458 : vector<8x1xf32>
    %460 = vector.broadcast %459 : vector<8x1xf32> to vector<8x32xf32>
    %461 = arith.mulf %451, %460 : vector<8x32xf32>
    %462 = vector.broadcast %268 : vector<1x32xf32> to vector<8x32xf32>
    %463 = arith.mulf %461, %462 : vector<8x32xf32>
    %464 = vector.broadcast %269 : vector<1x32xf32> to vector<8x32xf32>
    %465 = arith.addf %463, %464 : vector<8x32xf32>
    %466 = arith.truncf %465 : vector<8x32xf32> to vector<8x32xbf16>
    %c1_132 = arith.constant 1 : index
    %c0_133 = arith.constant 0 : index
    %c0_134 = arith.constant 0 : index
    %467 = vector.load %arg9[%c1_132, %c0_133, %c0_134] : memref<2x32x64xbf16, #tpu.memory_space<vmem>>, vector<1x32x64xbf16>
    %468 = vector.shape_cast %467 : vector<1x32x64xbf16> to vector<32x64xbf16>
    %cst_135 = arith.constant dense<0.000000e+00> : vector<8x64xf32>
    %469 = tpu.matmul %466, %468, %cst_135 {dimension_numbers = #tpu.dot_dimension_numbers<[1], [0], [0], [1], [0, 0, 1, 1], [], []>} : vector<8x32xbf16>, vector<32x64xbf16>, vector<8x64xf32> -> vector<8x64xf32>
    %c1_136 = arith.constant 1 : index
    %c0_137 = arith.constant 0 : index
    %c0_138 = arith.constant 0 : index
    %470 = vector.load %arg10[%c1_136, %c0_137, %c0_138] : memref<2x1x64xf32, #tpu.memory_space<vmem>>, vector<1x1x64xf32>
    %471 = vector.shape_cast %470 : vector<1x1x64xf32> to vector<1x64xf32>
    %472 = vector.broadcast %471 : vector<1x64xf32> to vector<8x64xf32>
    %473 = arith.addf %469, %472 : vector<8x64xf32>
    %cst_139 = arith.constant 0.000000e+00 : f32
    %474 = vector.broadcast %cst_139 : f32 to vector<8x64xf32>
    %475 = arith.maximumf %473, %474 : vector<8x64xf32>
    %476 = arith.truncf %475 : vector<8x64xf32> to vector<8x64xbf16>
    %c1_140 = arith.constant 1 : index
    %c0_141 = arith.constant 0 : index
    %c0_142 = arith.constant 0 : index
    %477 = vector.load %arg11[%c1_140, %c0_141, %c0_142] : memref<2x64x32xbf16, #tpu.memory_space<vmem>>, vector<1x64x32xbf16>
    %478 = vector.shape_cast %477 : vector<1x64x32xbf16> to vector<64x32xbf16>
    %cst_143 = arith.constant dense<0.000000e+00> : vector<8x32xf32>
    %479 = tpu.matmul %476, %478, %cst_143 {dimension_numbers = #tpu.dot_dimension_numbers<[1], [0], [0], [1], [0, 0, 1, 1], [], []>} : vector<8x64xbf16>, vector<64x32xbf16>, vector<8x32xf32> -> vector<8x32xf32>
    %480 = vector.broadcast %265 : vector<1x32xf32> to vector<8x32xf32>
    %481 = arith.addf %479, %480 : vector<8x32xf32>
    %482 = arith.addf %465, %481 : vector<8x32xf32>
    %cst_144 = arith.constant dense<0.000000e+00> : vector<8xf32>
    %483 = vector.multi_reduction <add>, %482, %cst_144 [1] : vector<8x32xf32> to vector<8xf32>
    %484 = vector.shape_cast %483 : vector<8xf32> to vector<8x1xf32>
    %cst_145 = arith.constant 3.200000e+01 : f32
    %485 = vector.broadcast %cst_145 : f32 to vector<8x1xf32>
    %486 = arith.divf %484, %485 : vector<8x1xf32>
    %487 = vector.broadcast %486 : vector<8x1xf32> to vector<8x32xf32>
    %488 = arith.subf %482, %487 : vector<8x32xf32>
    %489 = arith.mulf %488, %488 : vector<8x32xf32>
    %cst_146 = arith.constant dense<0.000000e+00> : vector<8xf32>
    %490 = vector.multi_reduction <add>, %489, %cst_146 [1] : vector<8x32xf32> to vector<8xf32>
    %491 = vector.shape_cast %490 : vector<8xf32> to vector<8x1xf32>
    %cst_147 = arith.constant 3.200000e+01 : f32
    %492 = vector.broadcast %cst_147 : f32 to vector<8x1xf32>
    %493 = arith.divf %491, %492 : vector<8x1xf32>
    %cst_148 = arith.constant 9.99999974E-6 : f32
    %494 = vector.broadcast %cst_148 : f32 to vector<8x1xf32>
    %495 = arith.addf %493, %494 : vector<8x1xf32>
    %496 = math.rsqrt %495 : vector<8x1xf32>
    %497 = vector.broadcast %496 : vector<8x1xf32> to vector<8x32xf32>
    %498 = arith.mulf %488, %497 : vector<8x32xf32>
    %499 = vector.broadcast %270 : vector<1x32xf32> to vector<8x32xf32>
    %500 = arith.mulf %498, %499 : vector<8x32xf32>
    %501 = vector.broadcast %271 : vector<1x32xf32> to vector<8x32xf32>
    %502 = arith.addf %500, %501 : vector<8x32xf32>
    %c0_149 = arith.constant 0 : index
    %c0_150 = arith.constant 0 : index
    %503 = vector.load %arg13[%c0_149, %c0_150] : memref<2x32xf32, #tpu.memory_space<vmem>>, vector<1x32xf32>
    %c1_151 = arith.constant 1 : index
    %c0_152 = arith.constant 0 : index
    %504 = vector.load %arg13[%c1_151, %c0_152] : memref<2x32xf32, #tpu.memory_space<vmem>>, vector<1x32xf32>
    %cst_153 = arith.constant dense<0.000000e+00> : vector<8xf32>
    %505 = vector.multi_reduction <add>, %502, %cst_153 [1] : vector<8x32xf32> to vector<8xf32>
    %506 = vector.shape_cast %505 : vector<8xf32> to vector<8x1xf32>
    %cst_154 = arith.constant 3.200000e+01 : f32
    %507 = vector.broadcast %cst_154 : f32 to vector<8x1xf32>
    %508 = arith.divf %506, %507 : vector<8x1xf32>
    %509 = vector.broadcast %508 : vector<8x1xf32> to vector<8x32xf32>
    %510 = arith.subf %502, %509 : vector<8x32xf32>
    %511 = arith.mulf %510, %510 : vector<8x32xf32>
    %cst_155 = arith.constant dense<0.000000e+00> : vector<8xf32>
    %512 = vector.multi_reduction <add>, %511, %cst_155 [1] : vector<8x32xf32> to vector<8xf32>
    %513 = vector.shape_cast %512 : vector<8xf32> to vector<8x1xf32>
    %cst_156 = arith.constant 3.200000e+01 : f32
    %514 = vector.broadcast %cst_156 : f32 to vector<8x1xf32>
    %515 = arith.divf %513, %514 : vector<8x1xf32>
    %cst_157 = arith.constant 9.99999974E-6 : f32
    %516 = vector.broadcast %cst_157 : f32 to vector<8x1xf32>
    %517 = arith.addf %515, %516 : vector<8x1xf32>
    %518 = math.rsqrt %517 : vector<8x1xf32>
    %519 = vector.broadcast %518 : vector<8x1xf32> to vector<8x32xf32>
    %520 = arith.mulf %510, %519 : vector<8x32xf32>
    %521 = vector.broadcast %503 : vector<1x32xf32> to vector<8x32xf32>
    %522 = arith.mulf %520, %521 : vector<8x32xf32>
    %523 = vector.broadcast %504 : vector<1x32xf32> to vector<8x32xf32>
    %524 = arith.addf %522, %523 : vector<8x32xf32>
    %525 = arith.truncf %524 : vector<8x32xf32> to vector<8x32xbf16>
    %c0_158 = arith.constant 0 : index
    %c0_159 = arith.constant 0 : index
    %526 = vector.load %arg14[%c0_158, %c0_159] : memref<32x16xbf16, #tpu.memory_space<vmem>>, vector<32x16xbf16>
    %cst_160 = arith.constant dense<0.000000e+00> : vector<8x16xf32>
    %527 = tpu.matmul %525, %526, %cst_160 {dimension_numbers = #tpu.dot_dimension_numbers<[1], [0], [0], [1], [0, 0, 1, 1], [], []>} : vector<8x32xbf16>, vector<32x16xbf16>, vector<8x16xf32> -> vector<8x16xf32>
    %c0_161 = arith.constant 0 : index
    %c0_162 = arith.constant 0 : index
    %528 = vector.load %arg15[%c0_161, %c0_162] : memref<1x16xf32, #tpu.memory_space<vmem>>, vector<1x16xf32>
    %529 = vector.broadcast %528 : vector<1x16xf32> to vector<8x16xf32>
    %530 = arith.addf %527, %529 : vector<8x16xf32>
    %531 = vector.extract_strided_slice %530 {offsets = [0, 0], sizes = [1, 16], strides = [1, 1]} : vector<8x16xf32> to vector<1x16xf32>
    %532 = vector.extract_strided_slice %530 {offsets = [1, 0], sizes = [1, 16], strides = [1, 1]} : vector<8x16xf32> to vector<1x16xf32>
    %533 = vector.extract_strided_slice %530 {offsets = [2, 0], sizes = [1, 16], strides = [1, 1]} : vector<8x16xf32> to vector<1x16xf32>
    %534 = vector.extract_strided_slice %530 {offsets = [3, 0], sizes = [1, 16], strides = [1, 1]} : vector<8x16xf32> to vector<1x16xf32>
    %535 = vector.extract_strided_slice %530 {offsets = [4, 0], sizes = [1, 16], strides = [1, 1]} : vector<8x16xf32> to vector<1x16xf32>
    %536 = vector.extract_strided_slice %530 {offsets = [5, 0], sizes = [1, 16], strides = [1, 1]} : vector<8x16xf32> to vector<1x16xf32>
    %537 = vector.extract_strided_slice %530 {offsets = [6, 0], sizes = [1, 16], strides = [1, 1]} : vector<8x16xf32> to vector<1x16xf32>
    %538 = vector.extract_strided_slice %530 {offsets = [7, 0], sizes = [1, 16], strides = [1, 1]} : vector<8x16xf32> to vector<1x16xf32>
    %539 = tpu.concatenate %531, %532, %533, %534, %535, %536, %537, %538 in 1 : vector<1x16xf32>, vector<1x16xf32>, vector<1x16xf32>, vector<1x16xf32>, vector<1x16xf32>, vector<1x16xf32>, vector<1x16xf32>, vector<1x16xf32> -> vector<1x128xf32>
    %540 = vector.shape_cast %539 : vector<1x128xf32> to vector<1x1x128xf32>
    %c0_163 = arith.constant 0 : index
    %c0_164 = arith.constant 0 : index
    %c0_165 = arith.constant 0 : index
    %541 = vector.load %arg16[%c0_163, %c0_164, %c0_165] : memref<1x1x128xf32, #tpu.memory_space<vmem>>, vector<1x1x128xf32>
    tpu.vector_store %arg16[%c0_163, %c0_164, %c0_165], %540 {strides = array<i32>} : memref<1x1x128xf32, #tpu.memory_space<vmem>>, vector<1x1x128xf32>,
    return
  }
  func.func @transform_0(%arg0: i32) -> (i32, i32, i32) {
    %c0_i32 = arith.constant 0 : i32
    %c0_i32_0 = arith.constant 0 : i32
    %c0_i32_1 = arith.constant 0 : i32
    return %arg0, %c0_i32, %c0_i32_0 : i32, i32, i32
  }
  func.func @transform_1(%arg0: i32) -> (i32, i32, i32) {
    %c0_i32 = arith.constant 0 : i32
    %c0_i32_0 = arith.constant 0 : i32
    %c0_i32_1 = arith.constant 0 : i32
    return %arg0, %c0_i32, %c0_i32_0 : i32, i32, i32
  }
  func.func @transform_2(%arg0: i32) -> (i32, i32) {
    %c0_i32 = arith.constant 0 : i32
    %c0_i32_0 = arith.constant 0 : i32
    %c0_i32_1 = arith.constant 0 : i32
    return %c0_i32, %c0_i32_0 : i32, i32
  }
  func.func @transform_3(%arg0: i32) -> (i32, i32) {
    %c0_i32 = arith.constant 0 : i32
    %c0_i32_0 = arith.constant 0 : i32
    %c0_i32_1 = arith.constant 0 : i32
    return %c0_i32, %c0_i32_0 : i32, i32
  }
  func.func @transform_4(%arg0: i32) -> (i32, i32) {
    %c0_i32 = arith.constant 0 : i32
    %c0_i32_0 = arith.constant 0 : i32
    %c0_i32_1 = arith.constant 0 : i32
    return %c0_i32, %c0_i32_0 : i32, i32
  }
  func.func @transform_5(%arg0: i32) -> (i32, i32, i32, i32) {
    %c0_i32 = arith.constant 0 : i32
    %c0_i32_0 = arith.constant 0 : i32
    %c0_i32_1 = arith.constant 0 : i32
    %c0_i32_2 = arith.constant 0 : i32
    %c0_i32_3 = arith.constant 0 : i32
    return %c0_i32, %c0_i32_0, %c0_i32_1, %c0_i32_2 : i32, i32, i32, i32
  }
  func.func @transform_6(%arg0: i32) -> (i32, i32, i32, i32) {
    %c0_i32 = arith.constant 0 : i32
    %c0_i32_0 = arith.constant 0 : i32
    %c0_i32_1 = arith.constant 0 : i32
    %c0_i32_2 = arith.constant 0 : i32
    %c0_i32_3 = arith.constant 0 : i32
    return %c0_i32, %c0_i32_0, %c0_i32_1, %c0_i32_2 : i32, i32, i32, i32
  }
  func.func @transform_7(%arg0: i32) -> (i32, i32, i32, i32) {
    %c0_i32 = arith.constant 0 : i32
    %c0_i32_0 = arith.constant 0 : i32
    %c0_i32_1 = arith.constant 0 : i32
    %c0_i32_2 = arith.constant 0 : i32
    %c0_i32_3 = arith.constant 0 : i32
    return %c0_i32, %c0_i32_0, %c0_i32_1, %c0_i32_2 : i32, i32, i32, i32
  }
  func.func @transform_8(%arg0: i32) -> (i32, i32, i32) {
    %c0_i32 = arith.constant 0 : i32
    %c0_i32_0 = arith.constant 0 : i32
    %c0_i32_1 = arith.constant 0 : i32
    %c0_i32_2 = arith.constant 0 : i32
    return %c0_i32, %c0_i32_0, %c0_i32_1 : i32, i32, i32
  }
  func.func @transform_9(%arg0: i32) -> (i32, i32, i32) {
    %c0_i32 = arith.constant 0 : i32
    %c0_i32_0 = arith.constant 0 : i32
    %c0_i32_1 = arith.constant 0 : i32
    %c0_i32_2 = arith.constant 0 : i32
    return %c0_i32, %c0_i32_0, %c0_i32_1 : i32, i32, i32
  }
  func.func @transform_10(%arg0: i32) -> (i32, i32, i32) {
    %c0_i32 = arith.constant 0 : i32
    %c0_i32_0 = arith.constant 0 : i32
    %c0_i32_1 = arith.constant 0 : i32
    %c0_i32_2 = arith.constant 0 : i32
    return %c0_i32, %c0_i32_0, %c0_i32_1 : i32, i32, i32
  }
  func.func @transform_11(%arg0: i32) -> (i32, i32, i32) {
    %c0_i32 = arith.constant 0 : i32
    %c0_i32_0 = arith.constant 0 : i32
    %c0_i32_1 = arith.constant 0 : i32
    %c0_i32_2 = arith.constant 0 : i32
    return %c0_i32, %c0_i32_0, %c0_i32_1 : i32, i32, i32
  }
  func.func @transform_12(%arg0: i32) -> (i32, i32) {
    %c0_i32 = arith.constant 0 : i32
    %c0_i32_0 = arith.constant 0 : i32
    %c0_i32_1 = arith.constant 0 : i32
    return %c0_i32, %c0_i32_0 : i32, i32
  }
  func.func @transform_13(%arg0: i32) -> (i32, i32) {
    %c0_i32 = arith.constant 0 : i32
    %c0_i32_0 = arith.constant 0 : i32
    %c0_i32_1 = arith.constant 0 : i32
    return %c0_i32, %c0_i32_0 : i32, i32
  }
  func.func @transform_14(%arg0: i32) -> (i32, i32) {
    %c0_i32 = arith.constant 0 : i32
    %c0_i32_0 = arith.constant 0 : i32
    %c0_i32_1 = arith.constant 0 : i32
    return %c0_i32, %c0_i32_0 : i32, i32
  }
  func.func @transform_15(%arg0: i32) -> (i32, i32, i32) {
    %c0_i32 = arith.constant 0 : i32
    %c0_i32_0 = arith.constant 0 : i32
    %c0_i32_1 = arith.constant 0 : i32
    return %arg0, %c0_i32, %c0_i32_0 : i32, i32, i32
  }
}

</mosaic_0001>

<llo_original>
// kernel: tpu_custom_call.1
$region0: #{tpu_custom_call.1}
  #allocation0 [shape = 'u32[]', space=smem, size = 0x4, offset = 0x4, fixed_abs, tag = 'smem constant byte address 0x4 - core index']
  #allocation1 [shape = 'u32[72,128]{1,0:T(1,128)}', space=vmem, size = 0x9000, scoped, tag = 'internal scratch']
  %s0 = inlined_call_operand.hbm [shape: s32[2,1,8], index: 0, kind: input, shape index: {}]
  %s1 = inlined_call_operand.vmem [shape: f32[2,4,32], index: 1, kind: input, shape index: {}]
  %s2 = inlined_call_operand.vmem [shape: f32[8,32], index: 2, kind: input, shape index: {}]
  %s3 = inlined_call_operand.vmem [shape: f32[8,8], index: 3, kind: input, shape index: {}]
  %s4 = inlined_call_operand.hbm [shape: bf16[16,32], index: 4, kind: input, shape index: {}]
  %s5 = inlined_call_operand.vmem [shape: bf16[2,2,32,96], index: 5, kind: input, shape index: {}]
  %s6 = inlined_call_operand.vmem [shape: f32[2,2,1,96], index: 6, kind: input, shape index: {}]
  %s7 = inlined_call_operand.hbm [shape: bf16[2,2,32,32], index: 7, kind: input, shape index: {}]
  %s8 = inlined_call_operand.vmem [shape: bf16[2,32,64], index: 8, kind: input, shape index: {}]
  %s9 = inlined_call_operand.hbm [shape: f32[2,1,64], index: 9, kind: input, shape index: {}]
  %s10 = inlined_call_operand.vmem [shape: bf16[2,64,32], index: 10, kind: input, shape index: {}]
  %s11 = inlined_call_operand.vmem [shape: f32[2,9,32], index: 11, kind: input, shape index: {}]
  %s12 = inlined_call_operand.hbm [shape: f32[2,32], index: 12, kind: input, shape index: {}]
  %s13 = inlined_call_operand.vmem [shape: bf16[32,16], index: 13, kind: input, shape index: {}]
  %s14 = inlined_call_operand.vmem [shape: f32[1,16], index: 14, kind: input, shape index: {}]
  %s15 = inlined_call_operand.hbm [shape: f32[2,1,128], index: 15, kind: output, shape index: {}]
  %s16 = sld [smem:[#allocation0]]
  $region113: #{tpu_custom_call.1} parent=0
    _
  %s18 = ssub.s32 1, %s16
  %s19 = scalar_select 0, %s18, %s16
  $region1: #{tpu_custom_call.1} parent=0
    #allocation2 [shape = 'u8[1024]{0}', space=vmem, size = 0x400, scoped, tag = 'input window, operand 0']
    #allocation3 [shape = 's32[2]{0}', space=sflag, size = 0x8, scoped, tag = 'scoped memory for tpu_custom_call.1']
    #allocation4 [shape = 's32[2]{0}', space=sflag, size = 0x8, scoped, tag = 'scoped memory for tpu_custom_call.1']
    #allocation5 [shape = 'u8[4096]{0}', space=vmem, size = 0x1000, scoped, tag = 'input window, operand 4, single buffered']
    #allocation6 [shape = 's32[1]{0}', space=sflag, size = 0x4, scoped, tag = 'scoped memory for tpu_custom_call.1']
    #allocation7 [shape = 'u8[32768]{0}', space=vmem, size = 0x8000, scoped, tag = 'input window, operand 7, single buffered']
    #allocation8 [shape = 'u8[1024]{0}', space=vmem, size = 0x400, scoped, tag = 'input window, operand 9, single buffered']
    #allocation9 [shape = 's32[1]{0}', space=sflag, size = 0x4, scoped, tag = 'scoped memory for tpu_custom_call.1']
    #allocation10 [shape = 'u8[1024]{0}', space=vmem, size = 0x400, scoped, tag = 'input window, operand 12, single buffered']
    #allocation11 [shape = 'u8[1024]{0}', space=vmem, size = 0x400, scoped, tag = 'output window, operand 0']
    %20 = vsyncpa [#allocation3], 0
    %s21 = scalar_lea.sflag [#allocation3], 1
    %22 = vsyncpa %s21, 0
    %23 = vsyncpa [#allocation6], 0
    %24 = vsyncpa [#allocation9], 0
    %25 = vsyncpa [#allocation4], 0
    %s26 = scalar_lea.sflag [#allocation4], 1
    %27 = vsyncpa %s26, 0
    loop: start=0, step=1, limit=4
    $region2: #{tpu_custom_call.1} parent=1 // loop_pre_header
      _
    $region3: #{tpu_custom_call.1} parent=1 // loop_header
      %s29 = sphi 0, %s33
      %p30 = scmp.ge.s32.totalorder %s29, 4
      %s39 = sphi 0, %s41
      %s42 = sphi 0, %s39
      %s43 = sphi 0, %s42
      %s59 = sphi 0, %s43
      %s65 = sphi 0, %s67
      %s68 = sphi 0, %s65
      %s69 = sphi 0, %s68
      %s85 = sphi 0, %s69
      %s89 = sphi 0, %s89
      %s91 = sphi 0, %s89
      %s92 = sphi 0, %s91
      %s106 = sphi 0, %s92
      %s110 = sphi 0, %s110
      %s112 = sphi 0, %s110
      %s113 = sphi 0, %s112
      %s127 = sphi 0, %s113
      %s131 = sphi 0, %s131
      %s133 = sphi 0, %s131
      %s134 = sphi 0, %s133
      %s148 = sphi 0, %s134
      %s152 = sphi 0, %s152
      %s154 = sphi 0, %s152
      %s155 = sphi 0, %s154
      %s169 = sphi 0, %s155
      %s173 = sphi 0, %s173
      %s175 = sphi 0, %s173
      %s176 = sphi 0, %s175
      %s190 = sphi 0, %s176
      %s194 = sphi 0, %s194
      %s196 = sphi 0, %s194
      %s197 = sphi 0, %s196
      %s211 = sphi 0, %s197
      %s215 = sphi 0, %s215
      %s217 = sphi 0, %s215
      %s218 = sphi 0, %s217
      %s232 = sphi 0, %s218
      %s236 = sphi 0, %s236
      %s238 = sphi 0, %s236
      %s239 = sphi 0, %s238
      %s253 = sphi 0, %s239
      %s257 = sphi 0, %s257
      %s259 = sphi 0, %s257
      %s260 = sphi 0, %s259
      %s274 = sphi 0, %s260
      %s278 = sphi 0, %s278
      %s280 = sphi 0, %s278
      %s281 = sphi 0, %s280
      %s295 = sphi 0, %s281
      %s299 = sphi 0, %s299
      %s301 = sphi 0, %s299
      %s302 = sphi 0, %s301
      %s316 = sphi 0, %s302
      %s320 = sphi 0, %s320
      %s322 = sphi 0, %s320
      %s323 = sphi 0, %s322
      %s337 = sphi 0, %s323
      %s341 = sphi 0, %s341
      %s343 = sphi 0, %s341
      %s344 = sphi 0, %s343
      %s358 = sphi 0, %s344
      %s364 = sphi 0, %s366
      %s367 = sphi 0, %s364
      %s368 = sphi 0, %s367
      %s384 = sphi 0, %s368
    $region4: #{tpu_custom_call.1} parent=1 // loop_header_branch
      %32 = sbr.rel (%p30) target = $region8
    $region5: #{tpu_custom_call.1} parent=1 // loop_body
      %s34 = ssub.s32 %s29, 1
      %s35 = ssub.s32 %s29, 2
      %s36 = sadd.s32 %s29, 1
      %s37 = ssub.s32 %s29, %s36
      %p38 = scmp.eq.s32.totalorder %s37, 0
      %s40 = sadd.s32 %s39, 1
      %s41 = scalar_select %p38, %s39, %s40
      %p44 = pneg %p38
      %p45 = scmp.eq.s32.totalorder %s29, 1
      %p46 = por %p44, %p45
      %p47 = scmp.ne.s32.totalorder %s39, %s42
      %p48 = scmp.eq.s32.totalorder %s29, 0
      %p49 = por %p47, %p48
      %p50 = scmp.ne.s32.totalorder %s39, %s42
      %p51 = scmp.eq.s32.totalorder %s34, 1
      %p52 = por %p50, %p51
      %p53 = scmp.ne.s32.totalorder %s42, %s43
      %p54 = scmp.eq.s32.totalorder %s34, 0
      %p55 = por %p53, %p54
      %p56 = scmp.ne.s32.totalorder %s42, %s43
      %p57 = scmp.eq.s32.totalorder %s35, 1
      %p58 = por %p56, %p57
      %p60 = scmp.ne.s32.totalorder %s43, %s59
      %p61 = scmp.eq.s32.totalorder %s35, 0
      %p62 = por %p60, %p61
      %s63 = ssub.s32 %s29, %s36
      %p64 = scmp.eq.s32.totalorder %s63, 0
      %s66 = sadd.s32 %s65, 1
      %s67 = scalar_select %p64, %s65, %s66
      %p70 = pneg %p64
      %p71 = scmp.eq.s32.totalorder %s29, 1
      %p72 = por %p70, %p71
      %p73 = scmp.ne.s32.totalorder %s65, %s68
      %p74 = scmp.eq.s32.totalorder %s29, 0
      %p75 = por %p73, %p74
      %p76 = scmp.ne.s32.totalorder %s65, %s68
      %p77 = scmp.eq.s32.totalorder %s34, 1
      %p78 = por %p76, %p77
      %p79 = scmp.ne.s32.totalorder %s68, %s69
      %p80 = scmp.eq.s32.totalorder %s34, 0
      %p81 = por %p79, %p80
      %p82 = scmp.ne.s32.totalorder %s68, %s69
      %p83 = scmp.eq.s32.totalorder %s35, 1
      %p84 = por %p82, %p83
      %p86 = scmp.ne.s32.totalorder %s69, %s85
      %p87 = scmp.eq.s32.totalorder %s35, 0
      %p88 = por %p86, %p87
      %s90 = sadd.s32 %s89, 1
      %p93 = scmp.eq.s32.totalorder %s29, 1
      %p94 = scmp.ne.s32.totalorder %s89, %s91
      %p95 = scmp.eq.s32.totalorder %s29, 0
      %p96 = por %p94, %p95
      %p97 = scmp.ne.s32.totalorder %s89, %s91
      %p98 = scmp.eq.s32.totalorder %s34, 1
      %p99 = por %p97, %p98
      %p100 = scmp.ne.s32.totalorder %s91, %s92
      %p101 = scmp.eq.s32.totalorder %s34, 0
      %p102 = por %p100, %p101
      %p103 = scmp.ne.s32.totalorder %s91, %s92
      %p104 = scmp.eq.s32.totalorder %s35, 1
      %p105 = por %p103, %p104
      %p107 = scmp.ne.s32.totalorder %s92, %s106
      %p108 = scmp.eq.s32.totalorder %s35, 0
      %p109 = por %p107, %p108
      %s111 = sadd.s32 %s110, 1
      %p114 = scmp.eq.s32.totalorder %s29, 1
      %p115 = scmp.ne.s32.totalorder %s110, %s112
      %p116 = scmp.eq.s32.totalorder %s29, 0
      %p117 = por %p115, %p116
      %p118 = scmp.ne.s32.totalorder %s110, %s112
      %p119 = scmp.eq.s32.totalorder %s34, 1
      %p120 = por %p118, %p119
      %p121 = scmp.ne.s32.totalorder %s112, %s113
      %p122 = scmp.eq.s32.totalorder %s34, 0
      %p123 = por %p121, %p122
      %p124 = scmp.ne.s32.totalorder %s112, %s113
      %p125 = scmp.eq.s32.totalorder %s35, 1
      %p126 = por %p124, %p125
      %p128 = scmp.ne.s32.totalorder %s113, %s127
      %p129 = scmp.eq.s32.totalorder %s35, 0
      %p130 = por %p128, %p129
      %s132 = sadd.s32 %s131, 1
      %p135 = scmp.eq.s32.totalorder %s29, 1
      %p136 = scmp.ne.s32.totalorder %s131, %s133
      %p137 = scmp.eq.s32.totalorder %s29, 0
      %p138 = por %p136, %p137
      %p139 = scmp.ne.s32.totalorder %s131, %s133
      %p140 = scmp.eq.s32.totalorder %s34, 1
      %p141 = por %p139, %p140
      %p142 = scmp.ne.s32.totalorder %s133, %s134
      %p143 = scmp.eq.s32.totalorder %s34, 0
      %p144 = por %p142, %p143
      %p145 = scmp.ne.s32.totalorder %s133, %s134
      %p146 = scmp.eq.s32.totalorder %s35, 1
      %p147 = por %p145, %p146
      %p149 = scmp.ne.s32.totalorder %s134, %s148
      %p150 = scmp.eq.s32.totalorder %s35, 0
      %p151 = por %p149, %p150
      %s153 = sadd.s32 %s152, 1
      %p156 = scmp.eq.s32.totalorder %s29, 1
      %p157 = scmp.ne.s32.totalorder %s152, %s154
      %p158 = scmp.eq.s32.totalorder %s29, 0
      %p159 = por %p157, %p158
      %p160 = scmp.ne.s32.totalorder %s152, %s154
      %p161 = scmp.eq.s32.totalorder %s34, 1
      %p162 = por %p160, %p161
      %p163 = scmp.ne.s32.totalorder %s154, %s155
      %p164 = scmp.eq.s32.totalorder %s34, 0
      %p165 = por %p163, %p164
      %p166 = scmp.ne.s32.totalorder %s154, %s155
      %p167 = scmp.eq.s32.totalorder %s35, 1
      %p168 = por %p166, %p167
      %p170 = scmp.ne.s32.totalorder %s155, %s169
      %p171 = scmp.eq.s32.totalorder %s35, 0
      %p172 = por %p170, %p171
      %s174 = sadd.s32 %s173, 1
      %p177 = scmp.eq.s32.totalorder %s29, 1
      %p178 = scmp.ne.s32.totalorder %s173, %s175
      %p179 = scmp.eq.s32.totalorder %s29, 0
      %p180 = por %p178, %p179
      %p181 = scmp.ne.s32.totalorder %s173, %s175
      %p182 = scmp.eq.s32.totalorder %s34, 1
      %p183 = por %p181, %p182
      %p184 = scmp.ne.s32.totalorder %s175, %s176
      %p185 = scmp.eq.s32.totalorder %s34, 0
      %p186 = por %p184, %p185
      %p187 = scmp.ne.s32.totalorder %s175, %s176
      %p188 = scmp.eq.s32.totalorder %s35, 1
      %p189 = por %p187, %p188
      %p191 = scmp.ne.s32.totalorder %s176, %s190
      %p192 = scmp.eq.s32.totalorder %s35, 0
      %p193 = por %p191, %p192
      %s195 = sadd.s32 %s194, 1
      %p198 = scmp.eq.s32.totalorder %s29, 1
      %p199 = scmp.ne.s32.totalorder %s194, %s196
      %p200 = scmp.eq.s32.totalorder %s29, 0
      %p201 = por %p199, %p200
      %p202 = scmp.ne.s32.totalorder %s194, %s196
      %p203 = scmp.eq.s32.totalorder %s34, 1
      %p204 = por %p202, %p203
      %p205 = scmp.ne.s32.totalorder %s196, %s197
      %p206 = scmp.eq.s32.totalorder %s34, 0
      %p207 = por %p205, %p206
      %p208 = scmp.ne.s32.totalorder %s196, %s197
      %p209 = scmp.eq.s32.totalorder %s35, 1
      %p210 = por %p208, %p209
      %p212 = scmp.ne.s32.totalorder %s197, %s211
      %p213 = scmp.eq.s32.totalorder %s35, 0
      %p214 = por %p212, %p213
      %s216 = sadd.s32 %s215, 1
      %p219 = scmp.eq.s32.totalorder %s29, 1
      %p220 = scmp.ne.s32.totalorder %s215, %s217
      %p221 = scmp.eq.s32.totalorder %s29, 0
      %p222 = por %p220, %p221
      %p223 = scmp.ne.s32.totalorder %s215, %s217
      %p224 = scmp.eq.s32.totalorder %s34, 1
      %p225 = por %p223, %p224
      %p226 = scmp.ne.s32.totalorder %s217, %s218
      %p227 = scmp.eq.s32.totalorder %s34, 0
      %p228 = por %p226, %p227
      %p229 = scmp.ne.s32.totalorder %s217, %s218
      %p230 = scmp.eq.s32.totalorder %s35, 1
      %p231 = por %p229, %p230
      %p233 = scmp.ne.s32.totalorder %s218, %s232
      %p234 = scmp.eq.s32.totalorder %s35, 0
      %p235 = por %p233, %p234
      %s237 = sadd.s32 %s236, 1
      %p240 = scmp.eq.s32.totalorder %s29, 1
      %p241 = scmp.ne.s32.totalorder %s236, %s238
      %p242 = scmp.eq.s32.totalorder %s29, 0
      %p243 = por %p241, %p242
      %p244 = scmp.ne.s32.totalorder %s236, %s238
      %p245 = scmp.eq.s32.totalorder %s34, 1
      %p246 = por %p244, %p245
      %p247 = scmp.ne.s32.totalorder %s238, %s239
      %p248 = scmp.eq.s32.totalorder %s34, 0
      %p249 = por %p247, %p248
      %p250 = scmp.ne.s32.totalorder %s238, %s239
      %p251 = scmp.eq.s32.totalorder %s35, 1
      %p252 = por %p250, %p251
      %p254 = scmp.ne.s32.totalorder %s239, %s253
      %p255 = scmp.eq.s32.totalorder %s35, 0
      %p256 = por %p254, %p255
      %s258 = sadd.s32 %s257, 1
      %p261 = scmp.eq.s32.totalorder %s29, 1
      %p262 = scmp.ne.s32.totalorder %s257, %s259
      %p263 = scmp.eq.s32.totalorder %s29, 0
      %p264 = por %p262, %p263
      %p265 = scmp.ne.s32.totalorder %s257, %s259
      %p266 = scmp.eq.s32.totalorder %s34, 1
      %p267 = por %p265, %p266
      %p268 = scmp.ne.s32.totalorder %s259, %s260
      %p269 = scmp.eq.s32.totalorder %s34, 0
      %p270 = por %p268, %p269
      %p271 = scmp.ne.s32.totalorder %s259, %s260
      %p272 = scmp.eq.s32.totalorder %s35, 1
      %p273 = por %p271, %p272
      %p275 = scmp.ne.s32.totalorder %s260, %s274
      %p276 = scmp.eq.s32.totalorder %s35, 0
      %p277 = por %p275, %p276
      %s279 = sadd.s32 %s278, 1
      %p282 = scmp.eq.s32.totalorder %s29, 1
      %p283 = scmp.ne.s32.totalorder %s278, %s280
      %p284 = scmp.eq.s32.totalorder %s29, 0
      %p285 = por %p283, %p284
      %p286 = scmp.ne.s32.totalorder %s278, %s280
      %p287 = scmp.eq.s32.totalorder %s34, 1
      %p288 = por %p286, %p287
      %p289 = scmp.ne.s32.totalorder %s280, %s281
      %p290 = scmp.eq.s32.totalorder %s34, 0
      %p291 = por %p289, %p290
      %p292 = scmp.ne.s32.totalorder %s280, %s281
      %p293 = scmp.eq.s32.totalorder %s35, 1
      %p294 = por %p292, %p293
      %p296 = scmp.ne.s32.totalorder %s281, %s295
      %p297 = scmp.eq.s32.totalorder %s35, 0
      %p298 = por %p296, %p297
      %s300 = sadd.s32 %s299, 1
      %p303 = scmp.eq.s32.totalorder %s29, 1
      %p304 = scmp.ne.s32.totalorder %s299, %s301
      %p305 = scmp.eq.s32.totalorder %s29, 0
      %p306 = por %p304, %p305
      %p307 = scmp.ne.s32.totalorder %s299, %s301
      %p308 = scmp.eq.s32.totalorder %s34, 1
      %p309 = por %p307, %p308
      %p310 = scmp.ne.s32.totalorder %s301, %s302
      %p311 = scmp.eq.s32.totalorder %s34, 0
      %p312 = por %p310, %p311
      %p313 = scmp.ne.s32.totalorder %s301, %s302
      %p314 = scmp.eq.s32.totalorder %s35, 1
      %p315 = por %p313, %p314
      %p317 = scmp.ne.s32.totalorder %s302, %s316
      %p318 = scmp.eq.s32.totalorder %s35, 0
      %p319 = por %p317, %p318
      %s321 = sadd.s32 %s320, 1
      %p324 = scmp.eq.s32.totalorder %s29, 1
      %p325 = scmp.ne.s32.totalorder %s320, %s322
      %p326 = scmp.eq.s32.totalorder %s29, 0
      %p327 = por %p325, %p326
      %p328 = scmp.ne.s32.totalorder %s320, %s322
      %p329 = scmp.eq.s32.totalorder %s34, 1
      %p330 = por %p328, %p329
      %p331 = scmp.ne.s32.totalorder %s322, %s323
      %p332 = scmp.eq.s32.totalorder %s34, 0
      %p333 = por %p331, %p332
      %p334 = scmp.ne.s32.totalorder %s322, %s323
      %p335 = scmp.eq.s32.totalorder %s35, 1
      %p336 = por %p334, %p335
      %p338 = scmp.ne.s32.totalorder %s323, %s337
      %p339 = scmp.eq.s32.totalorder %s35, 0
      %p340 = por %p338, %p339
      %s342 = sadd.s32 %s341, 1
      %p345 = scmp.eq.s32.totalorder %s29, 1
      %p346 = scmp.ne.s32.totalorder %s341, %s343
      %p347 = scmp.eq.s32.totalorder %s29, 0
      %p348 = por %p346, %p347
      %p349 = scmp.ne.s32.totalorder %s341, %s343
      %p350 = scmp.eq.s32.totalorder %s34, 1
      %p351 = por %p349, %p350
      %p352 = scmp.ne.s32.totalorder %s343, %s344
      %p353 = scmp.eq.s32.totalorder %s34, 0
      %p354 = por %p352, %p353
      %p355 = scmp.ne.s32.totalorder %s343, %s344
      %p356 = scmp.eq.s32.totalorder %s35, 1
      %p357 = por %p355, %p356
      %p359 = scmp.ne.s32.totalorder %s344, %s358
      %p360 = scmp.eq.s32.totalorder %s35, 0
      %p361 = por %p359, %p360
      %s362 = ssub.s32 %s29, %s36
      %p363 = scmp.eq.s32.totalorder %s362, 0
      %s365 = sadd.s32 %s364, 1
      %s366 = scalar_select %p363, %s364, %s365
      %p369 = pneg %p363
      %p370 = scmp.eq.s32.totalorder %s29, 1
      %p371 = por %p369, %p370
      %p372 = scmp.ne.s32.totalorder %s364, %s367
      %p373 = scmp.eq.s32.totalorder %s29, 0
      %p374 = por %p372, %p373
      %p375 = scmp.ne.s32.totalorder %s364, %s367
      %p376 = scmp.eq.s32.totalorder %s34, 1
      %p377 = por %p375, %p376
      %p378 = scmp.ne.s32.totalorder %s367, %s368
      %p379 = scmp.eq.s32.totalorder %s34, 0
      %p380 = por %p378, %p379
      %p381 = scmp.ne.s32.totalorder %s367, %s368
      %p382 = scmp.eq.s32.totalorder %s35, 1
      %p383 = por %p381, %p382
      %p385 = scmp.ne.s32.totalorder %s368, %s384
      %p386 = scmp.eq.s32.totalorder %s35, 0
      %p387 = por %p385, %p386
      %p388 = scmp.le.s32.totalorder 1, %s29
      %p389 = scmp.lt.s32.totalorder %s29, 3
      %p390 = pnand %p388, %p389
      %p391 = pneg %p390
      // Predicated region
      $region9: #{tpu_custom_call.1} parent=5 // pred_check
        _
      $region10: #{tpu_custom_call.1} parent=5 // pred_check_branch
        %393 = sbr.rel (%p390) target = $region12
      $region11: #{tpu_custom_call.1} parent=5 // pred_region
        %s394 = ssub.s32 %s29, 1
        // Predicated region
        $region13: #{tpu_custom_call.1} parent=11 // pred_check
          %p395 = pneg %p102
        $region14: #{tpu_custom_call.1} parent=11 // pred_check_branch
          %397 = sbr.rel (%p395) target = $region16
        $region15: #{tpu_custom_call.1} parent=11 // pred_region
          _
        $region16: #{tpu_custom_call.1} parent=11 // pred_fallthru
          _
        // Predicated region
        $region17: #{tpu_custom_call.1} parent=11 // pred_check
          %p398 = pneg %p123
        $region18: #{tpu_custom_call.1} parent=11 // pred_check_branch
          %400 = sbr.rel (%p398) target = $region20
        $region19: #{tpu_custom_call.1} parent=11 // pred_region
          _
        $region20: #{tpu_custom_call.1} parent=11 // pred_fallthru
          _
        // Predicated region
        $region21: #{tpu_custom_call.1} parent=11 // pred_check
          %p401 = pneg %p144
        $region22: #{tpu_custom_call.1} parent=11 // pred_check_branch
          %403 = sbr.rel (%p401) target = $region24
        $region23: #{tpu_custom_call.1} parent=11 // pred_region
          %405 = vsyncadd [#allocation6], 0
          %s406 = sshll.u32 %s4, 4
          %s407 = int_to_ptr.hbm [resolvable:$true] %s406
          %s408 = sshll.u32 [#allocation5], 4
          %s409 = int_to_ptr.vmem [resolvable:$true] %s408
          %414 = dma.hbm_to_vmem [thread:$0]  %s407, 128, %s409, [#allocation6], 64, 64, 4
        $region24: #{tpu_custom_call.1} parent=11 // pred_fallthru
          _
        // Predicated region
        $region25: #{tpu_custom_call.1} parent=11 // pred_check
          %p415 = pneg %p165
        $region26: #{tpu_custom_call.1} parent=11 // pred_check_branch
          %417 = sbr.rel (%p415) target = $region28
        $region27: #{tpu_custom_call.1} parent=11 // pred_region
          _
        $region28: #{tpu_custom_call.1} parent=11 // pred_fallthru
          _
        // Predicated region
        $region29: #{tpu_custom_call.1} parent=11 // pred_check
          %p418 = pneg %p186
        $region30: #{tpu_custom_call.1} parent=11 // pred_check_branch
          %420 = sbr.rel (%p418) target = $region32
        $region31: #{tpu_custom_call.1} parent=11 // pred_region
          _
        $region32: #{tpu_custom_call.1} parent=11 // pred_fallthru
          _
        // Predicated region
        $region33: #{tpu_custom_call.1} parent=11 // pred_check
          %p421 = pneg %p207
        $region34: #{tpu_custom_call.1} parent=11 // pred_check_branch
          %423 = sbr.rel (%p421) target = $region36
        $region35: #{tpu_custom_call.1} parent=11 // pred_region
          %425 = vsyncadd [#allocation6], 0
          %s426 = sshll.u32 %s7, 4
          %s427 = int_to_ptr.hbm [resolvable:$true] %s426
          %s428 = sshll.u32 [#allocation7], 4
          %s429 = int_to_ptr.vmem [resolvable:$true] %s428
          %434 = dma.hbm_to_vmem [thread:$0]  %s427, 1024, %s429, [#allocation6], 64, 64, 4
        $region36: #{tpu_custom_call.1} parent=11 // pred_fallthru
          _
        // Predicated region
        $region37: #{tpu_custom_call.1} parent=11 // pred_check
          %p435 = pneg %p228
        $region38: #{tpu_custom_call.1} parent=11 // pred_check_branch
          %437 = sbr.rel (%p435) target = $region40
        $region39: #{tpu_custom_call.1} parent=11 // pred_region
          _
        $region40: #{tpu_custom_call.1} parent=11 // pred_fallthru
          _
        // Predicated region
        $region41: #{tpu_custom_call.1} parent=11 // pred_check
          %p438 = pneg %p249
        $region42: #{tpu_custom_call.1} parent=11 // pred_check_branch
          %440 = sbr.rel (%p438) target = $region44
        $region43: #{tpu_custom_call.1} parent=11 // pred_region
          %442 = vsyncadd [#allocation9], 0
          %s443 = sshll.u32 %s9, 4
          %s444 = int_to_ptr.hbm [resolvable:$true] %s443
          %s445 = sshll.u32 [#allocation8], 4
          %s446 = int_to_ptr.vmem [resolvable:$true] %s445
          %451 = dma.hbm_to_vmem [thread:$0]  %s444, 32, %s446, [#allocation9], 16, 16, 1
        $region44: #{tpu_custom_call.1} parent=11 // pred_fallthru
          _
        // Predicated region
        $region45: #{tpu_custom_call.1} parent=11 // pred_check
          %p452 = pneg %p270
        $region46: #{tpu_custom_call.1} parent=11 // pred_check_branch
          %454 = sbr.rel (%p452) target = $region48
        $region47: #{tpu_custom_call.1} parent=11 // pred_region
          _
        $region48: #{tpu_custom_call.1} parent=11 // pred_fallthru
          _
        // Predicated region
        $region49: #{tpu_custom_call.1} parent=11 // pred_check
          %p455 = pneg %p291
        $region50: #{tpu_custom_call.1} parent=11 // pred_check_branch
          %457 = sbr.rel (%p455) target = $region52
        $region51: #{tpu_custom_call.1} parent=11 // pred_region
          _
        $region52: #{tpu_custom_call.1} parent=11 // pred_fallthru
          _
        // Predicated region
        $region53: #{tpu_custom_call.1} parent=11 // pred_check
          %p458 = pneg %p312
        $region54: #{tpu_custom_call.1} parent=11 // pred_check_branch
          %460 = sbr.rel (%p458) target = $region56
        $region55: #{tpu_custom_call.1} parent=11 // pred_region
          %462 = vsyncadd [#allocation9], 0
          %s464 = sshll.u32 %s12, 4
          %s465 = int_to_ptr.hbm [resolvable:$true] %s464
          %s466 = sshll.u32 [#allocation10], 4
          %s467 = int_to_ptr.vmem [resolvable:$true] %s466
          %469 = dma.hbm_to_vmem [thread:$0]  %s465, 32, %s467, [#allocation9]
        $region56: #{tpu_custom_call.1} parent=11 // pred_fallthru
          _
        // Predicated region
        $region57: #{tpu_custom_call.1} parent=11 // pred_check
          %p470 = pneg %p333
        $region58: #{tpu_custom_call.1} parent=11 // pred_check_branch
          %472 = sbr.rel (%p470) target = $region60
        $region59: #{tpu_custom_call.1} parent=11 // pred_region
          _
        $region60: #{tpu_custom_call.1} parent=11 // pred_fallthru
          _
        // Predicated region
        $region61: #{tpu_custom_call.1} parent=11 // pred_check
          %p473 = pneg %p354
        $region62: #{tpu_custom_call.1} parent=11 // pred_check_branch
          %475 = sbr.rel (%p473) target = $region64
        $region63: #{tpu_custom_call.1} parent=11 // pred_region
          _
        $region64: #{tpu_custom_call.1} parent=11 // pred_fallthru
          _
      $region12: #{tpu_custom_call.1} parent=5 // pred_fallthru
        _
      %p476 = scmp.lt.s32.totalorder %s29, 2
      // Predicated region
      $region65: #{tpu_custom_call.1} parent=5 // pred_check
        %p477 = pneg %p476
      $region66: #{tpu_custom_call.1} parent=5 // pred_check_branch
        %479 = sbr.rel (%p477) target = $region68
      $region67: #{tpu_custom_call.1} parent=5 // pred_region
        // Predicated region
        $region69: #{tpu_custom_call.1} parent=67 // pred_check
          %p480 = pneg %p49
        $region70: #{tpu_custom_call.1} parent=67 // pred_check_branch
          %482 = sbr.rel (%p480) target = $region72
        $region71: #{tpu_custom_call.1} parent=67 // pred_region
          %s483 = sand.u32 %s39, 1
          %s484 = scalar_lea.sflag [#allocation3], %s483
          %s485 = sand.u32 %s39, 1
          %s486 = scalar_lea.vmem [#allocation2], %s485
          %488 = vsyncadd %s484, 0
          %s489 = scalar_lea.hbm %s0, %s29
          %s491 = sshll.u32 %s489, 4
          %s492 = int_to_ptr.hbm [resolvable:$true] %s491
          %s493 = sshll.u32 %s486, 4
          %s494 = int_to_ptr.vmem [resolvable:$true] %s493
          %496 = dma.hbm_to_vmem [thread:$0]  %s492, 16, %s494, %s484
        $region72: #{tpu_custom_call.1} parent=67 // pred_fallthru
          _
        // Predicated region
        $region73: #{tpu_custom_call.1} parent=67 // pred_check
          %p497 = pneg %p75
        $region74: #{tpu_custom_call.1} parent=67 // pred_check_branch
          %499 = sbr.rel (%p497) target = $region76
        $region75: #{tpu_custom_call.1} parent=67 // pred_region
          %p500 = scmp.lt.s32.totalorder %s29, 1
          %s501 = scalar_select %p500, %s29, 1
          %s502 = smul.addr %s501, 4
          %s503 = scalar_lea.vmem %s1, %s502
        $region76: #{tpu_custom_call.1} parent=67 // pred_fallthru
          _
      $region68: #{tpu_custom_call.1} parent=5 // pred_fallthru
        _
      %p504 = scmp.le.s32.totalorder 1, %s29
      %p505 = scmp.lt.s32.totalorder %s29, 3
      %p506 = pnand %p504, %p505
      %p507 = pneg %p506
      // Predicated region
      $region77: #{tpu_custom_call.1} parent=5 // pred_check
        _
      $region78: #{tpu_custom_call.1} parent=5 // pred_check_branch
        %509 = sbr.rel (%p506) target = $region80
      $region79: #{tpu_custom_call.1} parent=5 // pred_region
        %s510 = ssub.s32 %s29, 1
        %s511 = sand.u32 %s42, 1
        %s512 = scalar_lea.sflag [#allocation3], %s511
        %s513 = sand.u32 %s42, 1
        %s514 = scalar_lea.vmem [#allocation2], %s513
        // Predicated region
        $region81: #{tpu_custom_call.1} parent=79 // pred_check
          %p515 = pneg %p55
        $region82: #{tpu_custom_call.1} parent=79 // pred_check_branch
          %517 = sbr.rel (%p515) target = $region84
        $region83: #{tpu_custom_call.1} parent=79 // pred_region
          %519 = dma.done %s512, 16
        $region84: #{tpu_custom_call.1} parent=79 // pred_fallthru
          _
        // Predicated region
        $region85: #{tpu_custom_call.1} parent=79 // pred_check
          %p520 = pneg %p144
        $region86: #{tpu_custom_call.1} parent=79 // pred_check_branch
          %522 = sbr.rel (%p520) target = $region88
        $region87: #{tpu_custom_call.1} parent=79 // pred_region
          %524 = dma.done [#allocation6], 128
        $region88: #{tpu_custom_call.1} parent=79 // pred_fallthru
          _
        // Predicated region
        $region89: #{tpu_custom_call.1} parent=79 // pred_check
          %p525 = pneg %p207
        $region90: #{tpu_custom_call.1} parent=79 // pred_check_branch
          %527 = sbr.rel (%p525) target = $region92
        $region91: #{tpu_custom_call.1} parent=79 // pred_region
          %529 = dma.done [#allocation6], 1024
        $region92: #{tpu_custom_call.1} parent=79 // pred_fallthru
          _
        // Predicated region
        $region93: #{tpu_custom_call.1} parent=79 // pred_check
          %p530 = pneg %p249
        $region94: #{tpu_custom_call.1} parent=79 // pred_check_branch
          %532 = sbr.rel (%p530) target = $region96
        $region95: #{tpu_custom_call.1} parent=79 // pred_region
          %534 = dma.done [#allocation9], 32
        $region96: #{tpu_custom_call.1} parent=79 // pred_fallthru
          _
        // Predicated region
        $region97: #{tpu_custom_call.1} parent=79 // pred_check
          %p535 = pneg %p312
        $region98: #{tpu_custom_call.1} parent=79 // pred_check_branch
          %537 = sbr.rel (%p535) target = $region100
        $region99: #{tpu_custom_call.1} parent=79 // pred_region
          %539 = dma.done [#allocation9], 32
        $region100: #{tpu_custom_call.1} parent=79 // pred_fallthru
          _
        %s540 = sand.u32 %s42, 1
        %s541 = scalar_lea.sflag [#allocation3], %s540
        %s542 = sand.u32 %s42, 1
        %s543 = scalar_lea.vmem [#allocation2], %s542
        %p544 = pneg %p55
        %p545 = pneg %p52
        %p546 = scmp.lt.s32.totalorder %s34, 1
        %s547 = scalar_select %p546, %s34, 1
        %s548 = smul.addr %s547, 4
        %s549 = scalar_lea.vmem %s1, %s548
        %p550 = pneg %p81
        %p551 = pneg %p78
        %p552 = pneg %p102
        %p553 = pneg %p99
        %p554 = pneg %p123
        %p555 = pneg %p120
        %p556 = pneg %p144
        %p557 = pneg %p141
        %p558 = pneg %p165
        %p559 = pneg %p162
        %p560 = pneg %p186
        %p561 = pneg %p183
        %p562 = pneg %p207
        %p563 = pneg %p204
        %p564 = pneg %p228
        %p565 = pneg %p225
        %p566 = pneg %p249
        %p567 = pneg %p246
        %p568 = pneg %p270
        %p569 = pneg %p267
        %p570 = pneg %p291
        %p571 = pneg %p288
        %p572 = pneg %p312
        %p573 = pneg %p309
        %p574 = pneg %p333
        %p575 = pneg %p330
        %p576 = pneg %p354
        %p577 = pneg %p351
        %p578 = pneg %p380
        %p579 = pneg %p377
        %s580 = sand.u32 %s367, 1
        %s581 = scalar_lea.sflag [#allocation4], %s580
        %s582 = sand.u32 %s367, 1
        %s583 = scalar_lea.vmem [#allocation11], %s582
        %p584 = scmp.lt.s32.totalorder %s34, 1
        %s585 = scalar_select %p584, %s34, 1
        %s586 = smul.addr %s585, 4
        %s587 = scalar_lea.vmem %s1, %s586
        %v589 = vld [vmem:[%s514] sm:$0x1]
        %v590 = vlaneseq
        %v591 = vshrl.u32 %v590, 7
        %v592 = vadd.s32 %v591, 8
        %v593 = vperm.slane %v589, 0
        %vm594 = vcmp.eq.s32.totalorder %v591, %v593
        %vm595 = vcmp.eq.s32.totalorder %v592, %v593
        %v596 = vsel %vm594, 1, 0
        %v597 = vsel %vm595, 1, 0
        %v598 = vcvt.s32.f32 %v596
        %v599 = vcvt.s32.f32 %v597
        %v600 = vpack.c.bf16 %v599, %v598
        %v601 = vld [vmem:[#allocation5] sm:$0xf]
        %v602 = vld [vmem:[#allocation5 + $0x4] sm:$0xf]
        %603 = vxpose.xlu0.c.b16.start [1/8] %v600, 128
        %604 = vxpose.xlu0.c.b16.cont [2/8] 0, 128
        %605 = vxpose.xlu0.c.b16.cont [3/8] 0, 128
        %606 = vxpose.xlu0.c.b16.cont [4/8] 0, 128
        %607 = vxpose.xlu0.c.b16.cont [5/8] 0, 128
        %608 = vxpose.xlu0.c.b16.cont [6/8] 0, 128
        %609 = vxpose.xlu0.c.b16.cont [7/8] 0, 128
        %610 = vxpose.xlu0.c.b16.end [8/8] 0, 128
        %v611 = vpop.trf.xlu0
        %v612 = vpop.trf.xlu0
        %v613 = vpop.trf.xlu0
        %v614 = vpop.trf.xlu0
        %v615 = vpop.trf.xlu0
        %v616 = vpop.trf.xlu0
        %v617 = vpop.trf.xlu0
        %v618 = vpop.trf.xlu0
        %v621 = vunpack.c.l.b16 %v601
        %v622 = vunpack.c.l.b16 %v602
        %v623 = vpack.c.b16 %v622, %v621
        %vm625 = vcmask 130048
        %v627 = vsel %vm625, %v611, 0
        %629 = vmatpush.bf16.msra.mxu0 0
        %630 = vmatpush.bf16.msra.mxu0 0
        %631 = vmatpush.bf16.msra.mxu0 0
        %632 = vmatpush.bf16.msra.mxu0 0
        %633 = vmatpush.bf16.msra.mxu0 0
        %634 = vmatpush.bf16.msra.mxu0 0
        %635 = vmatpush.bf16.msra.mxu0 0
        %636 = vmatpush.bf16.msra.mxu0 %v623
        %637 = vmatmul.bf16.gmra.mxu0 %v627
        %v638 = vpop.f32.mrf.mxu0
        %v639 = vadd.f32 0.0, %v638
        %v640 = vpop.f32.mrf.mxu0
        %641 = vdwg.mxu0
        %v642 = vld [vmem:[%s2] sm:$0xff]
        %v643 = vmul.f32 %v639, 5.656854
        %v644 = vadd.f32 %v643, %v642
        %v645 = vld [vmem:[%s587] sm:$0xf]
        %v646 = vadd.f32 %v645, %v642
        %v647 = vld [vmem:[%s3] sm:$0xff]
        %v648 = vld [vmem:[%s11] sm:$0xff]
        %v649 = vld [vmem:[%s11 + $0x8] sm:$0x1]
        %v650 = vld [vmem:[%s5] sm:$0xf]
        %v651 = vld [vmem:[%s5 + $0x4] sm:$0xf]
        %v652 = vld [vmem:[%s5 + $0x8] sm:$0xf]
        %v653 = vld [vmem:[%s5 + $0xc] sm:$0xf]
        %v654 = vld [vmem:[%s6] sm:$0x1]
        %v655 = vld [vmem:[#allocation7] sm:$0xf]
        %v656 = vld [vmem:[#allocation7 + $0x4] sm:$0xf]
        %v657 = vld [vmem:[#allocation7 + $0x8] sm:$0xf]
        %v658 = vld [vmem:[#allocation7 + $0xc] sm:$0xf]
        %v659 = vpack.c.bf16 %v644, %v644
        %v661 = vperm.slane %v654, 0
        %v667 = vunpack.c.l.b16 %v650
        %v668 = vunpack.c.l.b16 %v651
        %v669 = vunpack.c.l.b16 %v652
        %v670 = vunpack.c.l.b16 %v653
        %v671 = vpack.c.b16 %v668, %v667
        %v672 = vpack.c.b16 %v670, %v669
        %vm675 = vcmask 261120
        %v677 = vsel %vm675, %v659, 0
        %679 = vmatpush.bf16.msra.mxu0 0
        %680 = vmatpush.bf16.msra.mxu0 0
        %681 = vmatpush.bf16.msra.mxu0 0
        %682 = vmatpush.bf16.msra.mxu0 0
        %683 = vmatpush.bf16.msra.mxu0 0
        %684 = vmatpush.bf16.msra.mxu0 0
        %685 = vmatpush.bf16.msra.mxu0 %v672
        %686 = vmatpush.bf16.msra.mxu0 %v671
        %687 = vmatmul.bf16.gmra.mxu0 %v677
        %v688 = vpop.f32.mrf.mxu0
        %v689 = vadd.f32 %v661, %v688
        %v690 = vpop.f32.mrf.mxu0
        %691 = vdwg.mxu0
        %v692 = vpack.c.bf16 %v689, %v689
        %694 = vrot.lane.b32.xlu0 %v692, 120
        %v695 = vpop.permute.xlu0 %694
        %696 = vrot.lane.b32.xlu0 %v692, 112
        %v697 = vpop.permute.xlu0 %696
        %698 = vrot.lane.b32.xlu0 %v692, 104
        %v699 = vpop.permute.xlu0 %698
        %v700 = vunpack.c.l.b16 %v692
        %v701 = vpack.c.b16 %v700, %v700
        %702 = vrot.lane.b32.xlu0 %v701, 96
        %v703 = vpop.permute.xlu0 %702
        %vm704 = vcmask 64512
        %v706 = vsel %vm704, %v692, 0
        %v709 = vsel %vm704, %v703, 0
        %711 = vmatpush.bf16.xpose.msra.mxu0 0
        %712 = vmatpush.bf16.xpose.msra.mxu0 0
        %713 = vmatpush.bf16.xpose.msra.mxu0 0
        %714 = vmatpush.bf16.xpose.msra.mxu0 0
        %715 = vmatpush.bf16.xpose.msra.mxu0 0
        %716 = vmatpush.bf16.xpose.msra.mxu0 0
        %717 = vmatpush.bf16.xpose.msra.mxu0 0
        %718 = vmatpush.bf16.xpose.msra.mxu0 %v709
        %719 = vmatmul.bf16.gmra.mxu0 %v706
        %v720 = vpop.f32.mrf.mxu0
        %v721 = vadd.f32 0.0, %v720
        %v722 = vpop.f32.mrf.mxu0
        %723 = vdwg.mxu0
        %v724 = vunpack.c.l.b16 %v695
        %v725 = vpack.c.b16 %v724, %v724
        %726 = vrot.lane.b32.xlu0 %v725, 96
        %v727 = vpop.permute.xlu0 %726
        %v729 = vsel %vm704, %v695, 0
        %v732 = vsel %vm704, %v727, 0
        %734 = vmatpush.bf16.xpose.msra.mxu0 0
        %735 = vmatpush.bf16.xpose.msra.mxu0 0
        %736 = vmatpush.bf16.xpose.msra.mxu0 0
        %737 = vmatpush.bf16.xpose.msra.mxu0 0
        %738 = vmatpush.bf16.xpose.msra.mxu0 0
        %739 = vmatpush.bf16.xpose.msra.mxu0 0
        %740 = vmatpush.bf16.xpose.msra.mxu0 0
        %741 = vmatpush.bf16.xpose.msra.mxu0 %v732
        %742 = vmatmul.bf16.gmra.mxu0 %v729
        %v743 = vpop.f32.mrf.mxu0
        %v744 = vadd.f32 0.0, %v743
        %v745 = vpop.f32.mrf.mxu0
        %746 = vdwg.mxu0
        %v747 = vunpack.c.l.b16 %v697
        %v748 = vpack.c.b16 %v747, %v747
        %749 = vrot.lane.b32.xlu0 %v748, 96
        %v750 = vpop.permute.xlu0 %749
        %v752 = vsel %vm704, %v697, 0
        %v755 = vsel %vm704, %v750, 0
        %757 = vmatpush.bf16.xpose.msra.mxu0 0
        %758 = vmatpush.bf16.xpose.msra.mxu0 0
        %759 = vmatpush.bf16.xpose.msra.mxu0 0
        %760 = vmatpush.bf16.xpose.msra.mxu0 0
        %761 = vmatpush.bf16.xpose.msra.mxu0 0
        %762 = vmatpush.bf16.xpose.msra.mxu0 0
        %763 = vmatpush.bf16.xpose.msra.mxu0 0
        %764 = vmatpush.bf16.xpose.msra.mxu0 %v755
        %765 = vmatmul.bf16.gmra.mxu0 %v752
        %v766 = vpop.f32.mrf.mxu0
        %v767 = vadd.f32 0.0, %v766
        %v768 = vpop.f32.mrf.mxu0
        %769 = vdwg.mxu0
        %v770 = vunpack.c.l.b16 %v699
        %v771 = vpack.c.b16 %v770, %v770
        %772 = vrot.lane.b32.xlu0 %v771, 96
        %v773 = vpop.permute.xlu0 %772
        %v775 = vsel %vm704, %v699, 0
        %v778 = vsel %vm704, %v773, 0
        %780 = vmatpush.bf16.xpose.msra.mxu0 0
        %781 = vmatpush.bf16.xpose.msra.mxu0 0
        %782 = vmatpush.bf16.xpose.msra.mxu0 0
        %783 = vmatpush.bf16.xpose.msra.mxu0 0
        %784 = vmatpush.bf16.xpose.msra.mxu0 0
        %785 = vmatpush.bf16.xpose.msra.mxu0 0
        %786 = vmatpush.bf16.xpose.msra.mxu0 0
        %787 = vmatpush.bf16.xpose.msra.mxu0 %v778
        %788 = vmatmul.bf16.gmra.mxu0 %v775
        %v789 = vpop.f32.mrf.mxu0
        %v790 = vadd.f32 0.0, %v789
        %v791 = vpop.f32.mrf.mxu0
        %792 = vdwg.mxu0
        %v793 = vmul.f32 %v721, 0.35355338
        %v794 = vmul.f32 %v744, 0.35355338
        %v795 = vmul.f32 %v767, 0.35355338
        %v796 = vmul.f32 %v790, 0.35355338
        %v797 = vadd.f32 %v793, %v647
        %v798 = vadd.f32 %v794, %v647
        %v799 = vadd.f32 %v795, %v647
        %v800 = vadd.f32 %v796, %v647
        %v801 = vsel %vm704, %v797, -inf
        %802 = vmax.xlane.f32.xlu0 %v801
        %v803 = vpop.xlane.xlu0 %802
        %v804 = vsel %vm704, %v798, -inf
        %805 = vmax.xlane.f32.xlu0 %v804
        %v806 = vpop.xlane.xlu0 %805
        %v807 = vsel %vm704, %v799, -inf
        %808 = vmax.xlane.f32.xlu0 %v807
        %v809 = vpop.xlane.xlu0 %808
        %v810 = vsel %vm704, %v800, -inf
        %811 = vmax.xlane.f32.xlu0 %v810
        %v812 = vpop.xlane.xlu0 %811
        %v813 = vsub.f32 %v797, %v803
        %v814 = vsub.f32 %v798, %v806
        %v815 = vsub.f32 %v799, %v809
        %v816 = vsub.f32 %v800, %v812
        %v817 = vmul.f32 %v813, 1.442695
        %v818 = vpow.pop %v817
        %v819 = vmul.f32 %v814, 1.442695
        %v820 = vpow.pop %v819
        %v821 = vmul.f32 %v815, 1.442695
        %v822 = vpow.pop %v821
        %v823 = vmul.f32 %v816, 1.442695
        %v824 = vpow.pop %v823
        %v825 = vsel %vm704, %v818, 0.0
        %826 = vadd.xlane.f32.xlu0 %v825
        %v827 = vpop.xlane.xlu0 %826
        %v828 = vsel %vm704, %v820, 0.0
        %829 = vadd.xlane.f32.xlu0 %v828
        %v830 = vpop.xlane.xlu0 %829
        %v831 = vsel %vm704, %v822, 0.0
        %832 = vadd.xlane.f32.xlu0 %v831
        %v833 = vpop.xlane.xlu0 %832
        %v834 = vsel %vm704, %v824, 0.0
        %835 = vadd.xlane.f32.xlu0 %v834
        %v836 = vpop.xlane.xlu0 %835
        %v837 = vrcp.pop %v827
        %v838 = vrcp.pop %v830
        %v839 = vrcp.pop %v833
        %v840 = vrcp.pop %v836
        %v841 = vmul.f32 %v818, %v837
        %v842 = vmul.f32 %v820, %v838
        %v843 = vmul.f32 %v822, %v839
        %v844 = vmul.f32 %v824, %v840
        %v845 = vpack.c.bf16 %v841, %v841
        %v846 = vpack.c.bf16 %v842, %v842
        %v847 = vpack.c.bf16 %v843, %v843
        %v848 = vpack.c.bf16 %v844, %v844
        %849 = vrot.lane.b32.xlu0 %v701, 64
        %v850 = vpop.permute.xlu0 %849
        %v852 = vsel %vm704, %v845, 0
        %vm854 = vcmask 1043456
        %v856 = vsel %vm854, %v850, 0
        %858 = vmatpush.bf16.msra.mxu0 0
        %859 = vmatpush.bf16.msra.mxu0 0
        %860 = vmatpush.bf16.msra.mxu0 0
        %861 = vmatpush.bf16.msra.mxu0 0
        %862 = vmatpush.bf16.msra.mxu0 0
        %863 = vmatpush.bf16.msra.mxu0 0
        %864 = vmatpush.bf16.msra.mxu0 0
        %865 = vmatpush.bf16.msra.mxu0 %v856
        %866 = vmatmul.bf16.gmra.mxu0 %v852
        %v867 = vpop.f32.mrf.mxu0
        %v868 = vadd.f32 0.0, %v867
        %v869 = vpop.f32.mrf.mxu0
        %870 = vdwg.mxu0
        %871 = vrot.lane.b32.xlu0 %v725, 64
        %v872 = vpop.permute.xlu0 %871
        %v874 = vsel %vm704, %v846, 0
        %v877 = vsel %vm854, %v872, 0
        %879 = vmatpush.bf16.msra.mxu0 0
        %880 = vmatpush.bf16.msra.mxu0 0
        %881 = vmatpush.bf16.msra.mxu0 0
        %882 = vmatpush.bf16.msra.mxu0 0
        %883 = vmatpush.bf16.msra.mxu0 0
        %884 = vmatpush.bf16.msra.mxu0 0
        %885 = vmatpush.bf16.msra.mxu0 0
        %886 = vmatpush.bf16.msra.mxu0 %v877
        %887 = vmatmul.bf16.gmra.mxu0 %v874
        %v888 = vpop.f32.mrf.mxu0
        %v889 = vadd.f32 0.0, %v888
        %v890 = vpop.f32.mrf.mxu0
        %891 = vdwg.mxu0
        %892 = vrot.lane.b32.xlu0 %v748, 64
        %v893 = vpop.permute.xlu0 %892
        %v895 = vsel %vm704, %v847, 0
        %v898 = vsel %vm854, %v893, 0
        %900 = vmatpush.bf16.msra.mxu0 0
        %901 = vmatpush.bf16.msra.mxu0 0
        %902 = vmatpush.bf16.msra.mxu0 0
        %903 = vmatpush.bf16.msra.mxu0 0
        %904 = vmatpush.bf16.msra.mxu0 0
        %905 = vmatpush.bf16.msra.mxu0 0
        %906 = vmatpush.bf16.msra.mxu0 0
        %907 = vmatpush.bf16.msra.mxu0 %v898
        %908 = vmatmul.bf16.gmra.mxu0 %v895
        %v909 = vpop.f32.mrf.mxu0
        %v910 = vadd.f32 0.0, %v909
        %v911 = vpop.f32.mrf.mxu0
        %912 = vdwg.mxu0
        %913 = vrot.lane.b32.xlu0 %v771, 64
        %v914 = vpop.permute.xlu0 %913
        %v916 = vsel %vm704, %v848, 0
        %v919 = vsel %vm854, %v914, 0
        %921 = vmatpush.bf16.msra.mxu0 0
        %922 = vmatpush.bf16.msra.mxu0 0
        %923 = vmatpush.bf16.msra.mxu0 0
        %924 = vmatpush.bf16.msra.mxu0 0
        %925 = vmatpush.bf16.msra.mxu0 0
        %926 = vmatpush.bf16.msra.mxu0 0
        %927 = vmatpush.bf16.msra.mxu0 0
        %928 = vmatpush.bf16.msra.mxu0 %v919
        %929 = vmatmul.bf16.gmra.mxu0 %v916
        %v930 = vpop.f32.mrf.mxu0
        %v931 = vadd.f32 0.0, %v930
        %v932 = vpop.f32.mrf.mxu0
        %933 = vdwg.mxu0
        %935 = vrot.lane.b32.xlu0 %v889, 8
        %v936 = vpop.permute.xlu0 %935
        %939 = vrot.lane.b32.xlu0 %v910, 16
        %v940 = vpop.permute.xlu0 %939
        %943 = vrot.lane.b32.xlu0 %v931, 24
        %v944 = vpop.permute.xlu0 %943
        %v946 = vsel %vm704, %v868, %v936
        %v947 = vsel %vm625, %v946, %v940
        %vm948 = vcmask 195584
        %v949 = vsel %vm948, %v947, %v944
        %v950 = vpack.c.bf16 %v949, %v949
        %v951 = vperm.slane %v648, 0
        %v956 = vunpack.c.l.b16 %v655
        %v957 = vunpack.c.l.b16 %v656
        %v958 = vunpack.c.l.b16 %v657
        %v959 = vunpack.c.l.b16 %v658
        %v960 = vpack.c.b16 %v957, %v956
        %v961 = vpack.c.b16 %v959, %v958
        %v965 = vsel %vm675, %v950, 0
        %967 = vmatpush.bf16.msra.mxu0 0
        %968 = vmatpush.bf16.msra.mxu0 0
        %969 = vmatpush.bf16.msra.mxu0 0
        %970 = vmatpush.bf16.msra.mxu0 0
        %971 = vmatpush.bf16.msra.mxu0 0
        %972 = vmatpush.bf16.msra.mxu0 0
        %973 = vmatpush.bf16.msra.mxu0 %v961
        %974 = vmatpush.bf16.msra.mxu0 %v960
        %975 = vmatmul.bf16.gmra.mxu0 %v965
        %v976 = vpop.f32.mrf.mxu0
        %v977 = vadd.f32 %v951, %v976
        %v978 = vpop.f32.mrf.mxu0
        %979 = vdwg.mxu0
        %v980 = vadd.f32 %v644, %v977
        %v981 = vsel %vm675, %v980, 0.0
        %982 = vadd.xlane.f32.xlu0 %v981
        %v983 = vpop.xlane.xlu0 %982
        %v984 = vrcp.pop 32.0
        %v985 = vmul.f32 32.0, %v984
        %v986 = vsub.f32 1.0, %v985
        %v987 = vmul.f32 %v984, %v986
        %v988 = vadd.f32 %v984, %v987
        %vm989 = vweird.f32 %v984
        %v990 = vsel %vm989, %v984, %v988
        %v991 = vmul.f32 %v983, %v990
        %v992 = vsub.f32 %v980, %v991
        %v993 = vmul.f32 %v992, %v992
        %v994 = vsel %vm675, %v993, 0.0
        %995 = vadd.xlane.f32.xlu0 %v994
        %v996 = vpop.xlane.xlu0 %995
        %v997 = vmul.f32 %v996, %v990
        %v998 = vadd.f32 %v997, 1e-05
        %v999 = vrsqrt.pop %v998
        %v1000 = vmul.f32 %v999, %v998
        %v1001 = vmul.f32 %v1000, %v999
        %v1002 = vmul.f32 0.5, %v1001
        %v1003 = vsub.f32 1.5, %v1002
        %v1004 = vmul.f32 %v999, %v1003
        %vm1005 = vweird.f32 %v998
        %vm1006 = vweird.f32 %v999
        %vm1007 = vmor %vm1005, %vm1006
        %v1008 = vsel %vm1007, %v999, %v1004
        %v1009 = vmul.f32 %v992, %v1008
        %v1010 = vperm.slane %v648, 3
        %v1011 = vmul.f32 %v1009, %v1010
        %v1012 = vperm.slane %v648, 4
        %v1013 = vadd.f32 %v1011, %v1012
        %s1014 = scalar_lea.vmem %s5, 16
        %v1015 = vld [vmem:[%s1014] sm:$0xf]
        %v1016 = vld [vmem:[%s1014 + $0x4] sm:$0xf]
        %v1017 = vld [vmem:[%s1014 + $0x8] sm:$0xf]
        %v1018 = vld [vmem:[%s1014 + $0xc] sm:$0xf]
        %s1019 = scalar_lea.vmem %s6, 1
        %v1020 = vld [vmem:[%s1019] sm:$0x1]
        %s1021 = scalar_lea.vmem [#allocation7], 16
        %v1022 = vld [vmem:[%s1021] sm:$0xf]
        %v1023 = vld [vmem:[%s1021 + $0x4] sm:$0xf]
        %v1024 = vld [vmem:[%s1021 + $0x8] sm:$0xf]
        %v1025 = vld [vmem:[%s1021 + $0xc] sm:$0xf]
        %v1026 = vpack.c.bf16 %v1013, %v1013
        %v1028 = vperm.slane %v1020, 0
        %v1034 = vunpack.c.l.b16 %v1015
        %v1035 = vunpack.c.l.b16 %v1016
        %v1036 = vunpack.c.l.b16 %v1017
        %v1037 = vunpack.c.l.b16 %v1018
        %v1038 = vpack.c.b16 %v1035, %v1034
        %v1039 = vpack.c.b16 %v1037, %v1036
        %v1043 = vsel %vm675, %v1026, 0
        %1045 = vmatpush.bf16.msra.mxu0 0
        %1046 = vmatpush.bf16.msra.mxu0 0
        %1047 = vmatpush.bf16.msra.mxu0 0
        %1048 = vmatpush.bf16.msra.mxu0 0
        %1049 = vmatpush.bf16.msra.mxu0 0
        %1050 = vmatpush.bf16.msra.mxu0 0
        %1051 = vmatpush.bf16.msra.mxu0 %v1039
        %1052 = vmatpush.bf16.msra.mxu0 %v1038
        %1053 = vmatmul.bf16.gmra.mxu0 %v1043
        %v1054 = vpop.f32.mrf.mxu0
        %v1055 = vadd.f32 %v1028, %v1054
        %v1056 = vpop.f32.mrf.mxu0
        %1057 = vdwg.mxu0
        %v1058 = vpack.c.bf16 %v646, %v646
        %1059 = vrot.lane.b32.xlu0 %v1038, 96
        %v1060 = vpop.permute.xlu0 %1059
        %1061 = vrot.lane.b32.xlu0 %v1039, 96
        %v1062 = vpop.permute.xlu0 %1061
        %1065 = vrot.lane.b32.xlu0 %v1028, 96
        %v1066 = vpop.permute.xlu0 %1065
        %v1069 = vsel %vm675, %v1058, 0
        %1071 = vmatpush.bf16.msra.mxu0 0
        %1072 = vmatpush.bf16.msra.mxu0 0
        %1073 = vmatpush.bf16.msra.mxu0 0
        %1074 = vmatpush.bf16.msra.mxu0 0
        %1075 = vmatpush.bf16.msra.mxu0 0
        %1076 = vmatpush.bf16.msra.mxu0 0
        %1077 = vmatpush.bf16.msra.mxu0 %v1062
        %1078 = vmatpush.bf16.msra.mxu0 %v1060
        %1079 = vmatmul.bf16.gmra.mxu0 %v1069
        %v1080 = vpop.f32.mrf.mxu0
        %v1081 = vadd.f32 %v1066, %v1080
        %v1082 = vpop.f32.mrf.mxu0
        %1083 = vdwg.mxu0
        %v1084 = vpack.c.bf16 %v1055, %v1055
        %1086 = vrot.lane.b32.xlu0 %v1084, 120
        %v1087 = vpop.permute.xlu0 %1086
        %1088 = vrot.lane.b32.xlu0 %v1084, 112
        %v1089 = vpop.permute.xlu0 %1088
        %1090 = vrot.lane.b32.xlu0 %v1084, 104
        %v1091 = vpop.permute.xlu0 %1090
        %v1092 = vpack.c.bf16 %v1081, %v1081
        %1094 = vrot.lane.b32.xlu0 %v1092, 120
        %v1095 = vpop.permute.xlu0 %1094
        %1096 = vrot.lane.b32.xlu0 %v1092, 112
        %v1097 = vpop.permute.xlu0 %1096
        %1098 = vrot.lane.b32.xlu0 %v1092, 104
        %v1099 = vpop.permute.xlu0 %1098
        %v1101 = vsel %vm704, %v1084, 0
        %v1104 = vsel %vm704, %v1092, 0
        %1106 = vmatpush.bf16.xpose.msra.mxu0 0
        %1107 = vmatpush.bf16.xpose.msra.mxu0 0
        %1108 = vmatpush.bf16.xpose.msra.mxu0 0
        %1109 = vmatpush.bf16.xpose.msra.mxu0 0
        %1110 = vmatpush.bf16.xpose.msra.mxu0 0
        %1111 = vmatpush.bf16.xpose.msra.mxu0 0
        %1112 = vmatpush.bf16.xpose.msra.mxu0 0
        %1113 = vmatpush.bf16.xpose.msra.mxu0 %v1104
        %1114 = vmatmul.bf16.gmra.mxu0 %v1101
        %v1115 = vpop.f32.mrf.mxu0
        %v1116 = vadd.f32 0.0, %v1115
        %v1117 = vpop.f32.mrf.mxu0
        %1118 = vdwg.mxu0
        %v1120 = vsel %vm704, %v1087, 0
        %v1123 = vsel %vm704, %v1095, 0
        %1125 = vmatpush.bf16.xpose.msra.mxu0 0
        %1126 = vmatpush.bf16.xpose.msra.mxu0 0
        %1127 = vmatpush.bf16.xpose.msra.mxu0 0
        %1128 = vmatpush.bf16.xpose.msra.mxu0 0
        %1129 = vmatpush.bf16.xpose.msra.mxu0 0
        %1130 = vmatpush.bf16.xpose.msra.mxu0 0
        %1131 = vmatpush.bf16.xpose.msra.mxu0 0
        %1132 = vmatpush.bf16.xpose.msra.mxu0 %v1123
        %1133 = vmatmul.bf16.gmra.mxu0 %v1120
        %v1134 = vpop.f32.mrf.mxu0
        %v1135 = vadd.f32 0.0, %v1134
        %v1136 = vpop.f32.mrf.mxu0
        %1137 = vdwg.mxu0
        %v1139 = vsel %vm704, %v1089, 0
        %v1142 = vsel %vm704, %v1097, 0
        %1144 = vmatpush.bf16.xpose.msra.mxu0 0
        %1145 = vmatpush.bf16.xpose.msra.mxu0 0
        %1146 = vmatpush.bf16.xpose.msra.mxu0 0
        %1147 = vmatpush.bf16.xpose.msra.mxu0 0
        %1148 = vmatpush.bf16.xpose.msra.mxu0 0
        %1149 = vmatpush.bf16.xpose.msra.mxu0 0
        %1150 = vmatpush.bf16.xpose.msra.mxu0 0
        %1151 = vmatpush.bf16.xpose.msra.mxu0 %v1142
        %1152 = vmatmul.bf16.gmra.mxu0 %v1139
        %v1153 = vpop.f32.mrf.mxu0
        %v1154 = vadd.f32 0.0, %v1153
        %v1155 = vpop.f32.mrf.mxu0
        %1156 = vdwg.mxu0
        %v1158 = vsel %vm704, %v1091, 0
        %v1161 = vsel %vm704, %v1099, 0
        %1163 = vmatpush.bf16.xpose.msra.mxu0 0
        %1164 = vmatpush.bf16.xpose.msra.mxu0 0
        %1165 = vmatpush.bf16.xpose.msra.mxu0 0
        %1166 = vmatpush.bf16.xpose.msra.mxu0 0
        %1167 = vmatpush.bf16.xpose.msra.mxu0 0
        %1168 = vmatpush.bf16.xpose.msra.mxu0 0
        %1169 = vmatpush.bf16.xpose.msra.mxu0 0
        %1170 = vmatpush.bf16.xpose.msra.mxu0 %v1161
        %1171 = vmatmul.bf16.gmra.mxu0 %v1158
        %v1172 = vpop.f32.mrf.mxu0
        %v1173 = vadd.f32 0.0, %v1172
        %v1174 = vpop.f32.mrf.mxu0
        %1175 = vdwg.mxu0
        %v1176 = vmul.f32 %v1116, 0.35355338
        %v1177 = vmul.f32 %v1135, 0.35355338
        %v1178 = vmul.f32 %v1154, 0.35355338
        %v1179 = vmul.f32 %v1173, 0.35355338
        %vm1180 = vcmask 31744
        %v1181 = vsel %vm1180, %v1176, -inf
        %1182 = vmax.xlane.f32.xlu0 %v1181
        %v1183 = vpop.xlane.xlu0 %1182
        %v1184 = vsel %vm1180, %v1177, -inf
        %1185 = vmax.xlane.f32.xlu0 %v1184
        %v1186 = vpop.xlane.xlu0 %1185
        %v1187 = vsel %vm1180, %v1178, -inf
        %1188 = vmax.xlane.f32.xlu0 %v1187
        %v1189 = vpop.xlane.xlu0 %1188
        %v1190 = vsel %vm1180, %v1179, -inf
        %1191 = vmax.xlane.f32.xlu0 %v1190
        %v1192 = vpop.xlane.xlu0 %1191
        %v1193 = vsub.f32 %v1176, %v1183
        %v1194 = vsub.f32 %v1177, %v1186
        %v1195 = vsub.f32 %v1178, %v1189
        %v1196 = vsub.f32 %v1179, %v1192
        %v1197 = vmul.f32 %v1193, 1.442695
        %v1198 = vpow.pop %v1197
        %v1199 = vmul.f32 %v1194, 1.442695
        %v1200 = vpow.pop %v1199
        %v1201 = vmul.f32 %v1195, 1.442695
        %v1202 = vpow.pop %v1201
        %v1203 = vmul.f32 %v1196, 1.442695
        %v1204 = vpow.pop %v1203
        %v1205 = vsel %vm1180, %v1198, 0.0
        %1206 = vadd.xlane.f32.xlu0 %v1205
        %v1207 = vpop.xlane.xlu0 %1206
        %v1208 = vsel %vm1180, %v1200, 0.0
        %1209 = vadd.xlane.f32.xlu0 %v1208
        %v1210 = vpop.xlane.xlu0 %1209
        %v1211 = vsel %vm1180, %v1202, 0.0
        %1212 = vadd.xlane.f32.xlu0 %v1211
        %v1213 = vpop.xlane.xlu0 %1212
        %v1214 = vsel %vm1180, %v1204, 0.0
        %1215 = vadd.xlane.f32.xlu0 %v1214
        %v1216 = vpop.xlane.xlu0 %1215
        %v1217 = vrcp.pop %v1207
        %v1218 = vrcp.pop %v1210
        %v1219 = vrcp.pop %v1213
        %v1220 = vrcp.pop %v1216
        %v1221 = vmul.f32 %v1198, %v1217
        %v1222 = vmul.f32 %v1200, %v1218
        %v1223 = vmul.f32 %v1202, %v1219
        %v1224 = vmul.f32 %v1204, %v1220
        %v1225 = vpack.c.bf16 %v1221, %v1221
        %v1226 = vpack.c.bf16 %v1222, %v1222
        %v1227 = vpack.c.bf16 %v1223, %v1223
        %v1228 = vpack.c.bf16 %v1224, %v1224
        %v1229 = vunpack.c.l.b16 %v1092
        %v1230 = vpack.c.b16 %v1229, %v1229
        %1231 = vrot.lane.b32.xlu0 %v1230, 96
        %v1232 = vpop.permute.xlu0 %1231
        %v1234 = vsel %vm1180, %v1225, 0
        %vm1236 = vcmask 1041408
        %v1238 = vsel %vm1236, %v1232, 0
        %1240 = vmatpush.bf16.msra.mxu0 0
        %1241 = vmatpush.bf16.msra.mxu0 0
        %1242 = vmatpush.bf16.msra.mxu0 0
        %1243 = vmatpush.bf16.msra.mxu0 0
        %1244 = vmatpush.bf16.msra.mxu0 0
        %1245 = vmatpush.bf16.msra.mxu0 0
        %1246 = vmatpush.bf16.msra.mxu0 0
        %1247 = vmatpush.bf16.msra.mxu0 %v1238
        %1248 = vmatmul.bf16.gmra.mxu0 %v1234
        %v1249 = vpop.f32.mrf.mxu0
        %v1250 = vadd.f32 0.0, %v1249
        %v1251 = vpop.f32.mrf.mxu0
        %1252 = vdwg.mxu0
        %v1253 = vunpack.c.l.b16 %v1095
        %v1254 = vpack.c.b16 %v1253, %v1253
        %1255 = vrot.lane.b32.xlu0 %v1254, 96
        %v1256 = vpop.permute.xlu0 %1255
        %v1258 = vsel %vm1180, %v1226, 0
        %v1261 = vsel %vm1236, %v1256, 0
        %1263 = vmatpush.bf16.msra.mxu0 0
        %1264 = vmatpush.bf16.msra.mxu0 0
        %1265 = vmatpush.bf16.msra.mxu0 0
        %1266 = vmatpush.bf16.msra.mxu0 0
        %1267 = vmatpush.bf16.msra.mxu0 0
        %1268 = vmatpush.bf16.msra.mxu0 0
        %1269 = vmatpush.bf16.msra.mxu0 0
        %1270 = vmatpush.bf16.msra.mxu0 %v1261
        %1271 = vmatmul.bf16.gmra.mxu0 %v1258
        %v1272 = vpop.f32.mrf.mxu0
        %v1273 = vadd.f32 0.0, %v1272
        %v1274 = vpop.f32.mrf.mxu0
        %1275 = vdwg.mxu0
        %v1276 = vunpack.c.l.b16 %v1097
        %v1277 = vpack.c.b16 %v1276, %v1276
        %1278 = vrot.lane.b32.xlu0 %v1277, 96
        %v1279 = vpop.permute.xlu0 %1278
        %v1281 = vsel %vm1180, %v1227, 0
        %v1284 = vsel %vm1236, %v1279, 0
        %1286 = vmatpush.bf16.msra.mxu0 0
        %1287 = vmatpush.bf16.msra.mxu0 0
        %1288 = vmatpush.bf16.msra.mxu0 0
        %1289 = vmatpush.bf16.msra.mxu0 0
        %1290 = vmatpush.bf16.msra.mxu0 0
        %1291 = vmatpush.bf16.msra.mxu0 0
        %1292 = vmatpush.bf16.msra.mxu0 0
        %1293 = vmatpush.bf16.msra.mxu0 %v1284
        %1294 = vmatmul.bf16.gmra.mxu0 %v1281
        %v1295 = vpop.f32.mrf.mxu0
        %v1296 = vadd.f32 0.0, %v1295
        %v1297 = vpop.f32.mrf.mxu0
        %1298 = vdwg.mxu0
        %v1299 = vunpack.c.l.b16 %v1099
        %v1300 = vpack.c.b16 %v1299, %v1299
        %1301 = vrot.lane.b32.xlu0 %v1300, 96
        %v1302 = vpop.permute.xlu0 %1301
        %v1304 = vsel %vm1180, %v1228, 0
        %v1307 = vsel %vm1236, %v1302, 0
        %1309 = vmatpush.bf16.msra.mxu0 0
        %1310 = vmatpush.bf16.msra.mxu0 0
        %1311 = vmatpush.bf16.msra.mxu0 0
        %1312 = vmatpush.bf16.msra.mxu0 0
        %1313 = vmatpush.bf16.msra.mxu0 0
        %1314 = vmatpush.bf16.msra.mxu0 0
        %1315 = vmatpush.bf16.msra.mxu0 0
        %1316 = vmatpush.bf16.msra.mxu0 %v1307
        %1317 = vmatmul.bf16.gmra.mxu0 %v1304
        %v1318 = vpop.f32.mrf.mxu0
        %v1319 = vadd.f32 0.0, %v1318
        %v1320 = vpop.f32.mrf.mxu0
        %1321 = vdwg.mxu0
        %1323 = vrot.lane.b32.xlu0 %v1273, 8
        %v1324 = vpop.permute.xlu0 %1323
        %1327 = vrot.lane.b32.xlu0 %v1296, 16
        %v1328 = vpop.permute.xlu0 %1327
        %1331 = vrot.lane.b32.xlu0 %v1319, 24
        %v1332 = vpop.permute.xlu0 %1331
        %v1334 = vsel %vm704, %v1250, %v1324
        %v1335 = vsel %vm625, %v1334, %v1328
        %v1336 = vsel %vm948, %v1335, %v1332
        %v1337 = vpack.c.bf16 %v1336, %v1336
        %v1338 = vperm.slane %v648, 1
        %v1343 = vunpack.c.l.b16 %v1022
        %v1344 = vunpack.c.l.b16 %v1023
        %v1345 = vunpack.c.l.b16 %v1024
        %v1346 = vunpack.c.l.b16 %v1025
        %v1347 = vpack.c.b16 %v1344, %v1343
        %v1348 = vpack.c.b16 %v1346, %v1345
        %v1352 = vsel %vm675, %v1337, 0
        %1354 = vmatpush.bf16.msra.mxu0 0
        %1355 = vmatpush.bf16.msra.mxu0 0
        %1356 = vmatpush.bf16.msra.mxu0 0
        %1357 = vmatpush.bf16.msra.mxu0 0
        %1358 = vmatpush.bf16.msra.mxu0 0
        %1359 = vmatpush.bf16.msra.mxu0 0
        %1360 = vmatpush.bf16.msra.mxu0 %v1348
        %1361 = vmatpush.bf16.msra.mxu0 %v1347
        %1362 = vmatmul.bf16.gmra.mxu0 %v1352
        %v1363 = vpop.f32.mrf.mxu0
        %v1364 = vadd.f32 %v1338, %v1363
        %v1365 = vpop.f32.mrf.mxu0
        %1366 = vdwg.mxu0
        %v1367 = vadd.f32 %v1013, %v1364
        %v1368 = vsel %vm675, %v1367, 0.0
        %1369 = vadd.xlane.f32.xlu0 %v1368
        %v1370 = vpop.xlane.xlu0 %1369
        %v1371 = vmul.f32 %v1370, %v990
        %v1372 = vsub.f32 %v1367, %v1371
        %v1373 = vmul.f32 %v1372, %v1372
        %v1374 = vsel %vm675, %v1373, 0.0
        %1375 = vadd.xlane.f32.xlu0 %v1374
        %v1376 = vpop.xlane.xlu0 %1375
        %v1377 = vmul.f32 %v1376, %v990
        %v1378 = vadd.f32 %v1377, 1e-05
        %v1379 = vrsqrt.pop %v1378
        %v1380 = vmul.f32 %v1379, %v1378
        %v1381 = vmul.f32 %v1380, %v1379
        %v1382 = vmul.f32 0.5, %v1381
        %v1383 = vsub.f32 1.5, %v1382
        %v1384 = vmul.f32 %v1379, %v1383
        %vm1385 = vweird.f32 %v1378
        %vm1386 = vweird.f32 %v1379
        %vm1387 = vmor %vm1385, %vm1386
        %v1388 = vsel %vm1387, %v1379, %v1384
        %v1389 = vmul.f32 %v1372, %v1388
        %v1390 = vperm.slane %v648, 5
        %v1391 = vmul.f32 %v1389, %v1390
        %v1392 = vperm.slane %v648, 6
        %v1393 = vadd.f32 %v1391, %v1392
        %v1394 = vpack.c.bf16 %v1393, %v1393
        %v1395 = vld [vmem:[%s8] sm:$0xf]
        %v1396 = vld [vmem:[%s8 + $0x4] sm:$0xf]
        %v1397 = vld [vmem:[%s8 + $0x8] sm:$0xf]
        %v1398 = vld [vmem:[%s8 + $0xc] sm:$0xf]
        %v1399 = vld [vmem:[#allocation8] sm:$0x1]
        %v1401 = vperm.slane %v1399, 0
        %v1407 = vunpack.c.l.b16 %v1395
        %v1408 = vunpack.c.l.b16 %v1396
        %v1409 = vunpack.c.l.b16 %v1397
        %v1410 = vunpack.c.l.b16 %v1398
        %v1411 = vpack.c.b16 %v1408, %v1407
        %v1412 = vpack.c.b16 %v1410, %v1409
        %v1416 = vsel %vm675, %v1394, 0
        %1418 = vmatpush.bf16.msra.mxu0 0
        %1419 = vmatpush.bf16.msra.mxu0 0
        %1420 = vmatpush.bf16.msra.mxu0 0
        %1421 = vmatpush.bf16.msra.mxu0 0
        %1422 = vmatpush.bf16.msra.mxu0 0
        %1423 = vmatpush.bf16.msra.mxu0 0
        %1424 = vmatpush.bf16.msra.mxu0 %v1412
        %1425 = vmatpush.bf16.msra.mxu0 %v1411
        %1426 = vmatmul.bf16.gmra.mxu0 %v1416
        %v1427 = vpop.f32.mrf.mxu0
        %v1428 = vadd.f32 %v1401, %v1427
        %v1429 = vpop.f32.mrf.mxu0
        %1430 = vdwg.mxu0
        %v1431 = vmax.f32 %v1428, 0.0
        %v1432 = vpack.c.bf16 %v1431, %v1431
        %v1433 = vld [vmem:[%s10] sm:$0xf]
        %v1434 = vld [vmem:[%s10 + $0x4] sm:$0xf]
        %v1435 = vld [vmem:[%s10 + $0x8] sm:$0xf]
        %v1436 = vld [vmem:[%s10 + $0xc] sm:$0xf]
        %v1437 = vld [vmem:[%s10 + $0x10] sm:$0xf]
        %v1438 = vld [vmem:[%s10 + $0x14] sm:$0xf]
        %v1439 = vld [vmem:[%s10 + $0x18] sm:$0xf]
        %v1440 = vld [vmem:[%s10 + $0x1c] sm:$0xf]
        %v1441 = vperm.slane %v648, 2
        %v1450 = vunpack.c.l.b16 %v1433
        %v1451 = vunpack.c.l.b16 %v1434
        %v1452 = vunpack.c.l.b16 %v1435
        %v1453 = vunpack.c.l.b16 %v1436
        %v1454 = vunpack.c.l.b16 %v1437
        %v1455 = vunpack.c.l.b16 %v1438
        %v1456 = vunpack.c.l.b16 %v1439
        %v1457 = vunpack.c.l.b16 %v1440
        %v1458 = vpack.c.b16 %v1451, %v1450
        %v1459 = vpack.c.b16 %v1453, %v1452
        %v1460 = vpack.c.b16 %v1455, %v1454
        %v1461 = vpack.c.b16 %v1457, %v1456
        %vm1466 = vcmask 523264
        %v1468 = vsel %vm1466, %v1432, 0
        %1470 = vmatpush.bf16.msra.mxu0 0
        %1471 = vmatpush.bf16.msra.mxu0 0
        %1472 = vmatpush.bf16.msra.mxu0 0
        %1473 = vmatpush.bf16.msra.mxu0 0
        %1474 = vmatpush.bf16.msra.mxu0 %v1461
        %1475 = vmatpush.bf16.msra.mxu0 %v1460
        %1476 = vmatpush.bf16.msra.mxu0 %v1459
        %1477 = vmatpush.bf16.msra.mxu0 %v1458
        %1478 = vmatmul.bf16.gmra.mxu0 %v1468
        %v1479 = vpop.f32.mrf.mxu0
        %v1480 = vadd.f32 %v1441, %v1479
        %v1481 = vpop.f32.mrf.mxu0
        %1482 = vdwg.mxu0
        %v1483 = vadd.f32 %v1393, %v1480
        %v1484 = vsel %vm675, %v1483, 0.0
        %1485 = vadd.xlane.f32.xlu0 %v1484
        %v1486 = vpop.xlane.xlu0 %1485
        %v1487 = vmul.f32 %v1486, %v990
        %v1488 = vsub.f32 %v1483, %v1487
        %v1489 = vmul.f32 %v1488, %v1488
        %v1490 = vsel %vm675, %v1489, 0.0
        %1491 = vadd.xlane.f32.xlu0 %v1490
        %v1492 = vpop.xlane.xlu0 %1491
        %v1493 = vmul.f32 %v1492, %v990
        %v1494 = vadd.f32 %v1493, 1e-05
        %v1495 = vrsqrt.pop %v1494
        %v1496 = vmul.f32 %v1495, %v1494
        %v1497 = vmul.f32 %v1496, %v1495
        %v1498 = vmul.f32 0.5, %v1497
        %v1499 = vsub.f32 1.5, %v1498
        %v1500 = vmul.f32 %v1495, %v1499
        %vm1501 = vweird.f32 %v1494
        %vm1502 = vweird.f32 %v1495
        %vm1503 = vmor %vm1501, %vm1502
        %v1504 = vsel %vm1503, %v1495, %v1500
        %v1505 = vmul.f32 %v1488, %v1504
        %v1506 = vperm.slane %v648, 7
        %v1507 = vmul.f32 %v1505, %v1506
        %v1508 = vperm.slane %v649, 0
        %v1509 = vadd.f32 %v1507, %v1508
        %s1510 = scalar_lea.vmem %s11, 16
        %v1511 = vld [vmem:[%s1510] sm:$0xff]
        %v1512 = vld [vmem:[%s1510 + $0x8] sm:$0x1]
        %s1513 = scalar_lea.vmem %s5, 32
        %v1514 = vld [vmem:[%s1513] sm:$0xf]
        %v1515 = vld [vmem:[%s1513 + $0x4] sm:$0xf]
        %v1516 = vld [vmem:[%s1513 + $0x8] sm:$0xf]
        %v1517 = vld [vmem:[%s1513 + $0xc] sm:$0xf]
        %s1518 = scalar_lea.vmem %s6, 2
        %v1519 = vld [vmem:[%s1518] sm:$0x1]
        %s1520 = scalar_lea.vmem [#allocation7], 32
        %v1521 = vld [vmem:[%s1520] sm:$0xf]
        %v1522 = vld [vmem:[%s1520 + $0x4] sm:$0xf]
        %v1523 = vld [vmem:[%s1520 + $0x8] sm:$0xf]
        %v1524 = vld [vmem:[%s1520 + $0xc] sm:$0xf]
        %v1525 = vpack.c.bf16 %v1509, %v1509
        %v1527 = vperm.slane %v1519, 0
        %v1533 = vunpack.c.l.b16 %v1514
        %v1534 = vunpack.c.l.b16 %v1515
        %v1535 = vunpack.c.l.b16 %v1516
        %v1536 = vunpack.c.l.b16 %v1517
        %v1537 = vpack.c.b16 %v1534, %v1533
        %v1538 = vpack.c.b16 %v1536, %v1535
        %v1542 = vsel %vm675, %v1525, 0
        %1544 = vmatpush.bf16.msra.mxu0 0
        %1545 = vmatpush.bf16.msra.mxu0 0
        %1546 = vmatpush.bf16.msra.mxu0 0
        %1547 = vmatpush.bf16.msra.mxu0 0
        %1548 = vmatpush.bf16.msra.mxu0 0
        %1549 = vmatpush.bf16.msra.mxu0 0
        %1550 = vmatpush.bf16.msra.mxu0 %v1538
        %1551 = vmatpush.bf16.msra.mxu0 %v1537
        %1552 = vmatmul.bf16.gmra.mxu0 %v1542
        %v1553 = vpop.f32.mrf.mxu0
        %v1554 = vadd.f32 %v1527, %v1553
        %v1555 = vpop.f32.mrf.mxu0
        %1556 = vdwg.mxu0
        %v1557 = vpack.c.bf16 %v1554, %v1554
        %1559 = vrot.lane.b32.xlu0 %v1557, 120
        %v1560 = vpop.permute.xlu0 %1559
        %1561 = vrot.lane.b32.xlu0 %v1557, 112
        %v1562 = vpop.permute.xlu0 %1561
        %1563 = vrot.lane.b32.xlu0 %v1557, 104
        %v1564 = vpop.permute.xlu0 %1563
        %v1565 = vunpack.c.l.b16 %v1557
        %v1566 = vpack.c.b16 %v1565, %v1565
        %1567 = vrot.lane.b32.xlu0 %v1566, 96
        %v1568 = vpop.permute.xlu0 %1567
        %v1570 = vsel %vm704, %v1557, 0
        %v1573 = vsel %vm704, %v1568, 0
        %1575 = vmatpush.bf16.xpose.msra.mxu0 0
        %1576 = vmatpush.bf16.xpose.msra.mxu0 0
        %1577 = vmatpush.bf16.xpose.msra.mxu0 0
        %1578 = vmatpush.bf16.xpose.msra.mxu0 0
        %1579 = vmatpush.bf16.xpose.msra.mxu0 0
        %1580 = vmatpush.bf16.xpose.msra.mxu0 0
        %1581 = vmatpush.bf16.xpose.msra.mxu0 0
        %1582 = vmatpush.bf16.xpose.msra.mxu0 %v1573
        %1583 = vmatmul.bf16.gmra.mxu0 %v1570
        %v1584 = vpop.f32.mrf.mxu0
        %v1585 = vadd.f32 0.0, %v1584
        %v1586 = vpop.f32.mrf.mxu0
        %1587 = vdwg.mxu0
        %v1588 = vunpack.c.l.b16 %v1560
        %v1589 = vpack.c.b16 %v1588, %v1588
        %1590 = vrot.lane.b32.xlu0 %v1589, 96
        %v1591 = vpop.permute.xlu0 %1590
        %v1593 = vsel %vm704, %v1560, 0
        %v1596 = vsel %vm704, %v1591, 0
        %1598 = vmatpush.bf16.xpose.msra.mxu0 0
        %1599 = vmatpush.bf16.xpose.msra.mxu0 0
        %1600 = vmatpush.bf16.xpose.msra.mxu0 0
        %1601 = vmatpush.bf16.xpose.msra.mxu0 0
        %1602 = vmatpush.bf16.xpose.msra.mxu0 0
        %1603 = vmatpush.bf16.xpose.msra.mxu0 0
        %1604 = vmatpush.bf16.xpose.msra.mxu0 0
        %1605 = vmatpush.bf16.xpose.msra.mxu0 %v1596
        %1606 = vmatmul.bf16.gmra.mxu0 %v1593
        %v1607 = vpop.f32.mrf.mxu0
        %v1608 = vadd.f32 0.0, %v1607
        %v1609 = vpop.f32.mrf.mxu0
        %1610 = vdwg.mxu0
        %v1611 = vunpack.c.l.b16 %v1562
        %v1612 = vpack.c.b16 %v1611, %v1611
        %1613 = vrot.lane.b32.xlu0 %v1612, 96
        %v1614 = vpop.permute.xlu0 %1613
        %v1616 = vsel %vm704, %v1562, 0
        %v1619 = vsel %vm704, %v1614, 0
        %1621 = vmatpush.bf16.xpose.msra.mxu0 0
        %1622 = vmatpush.bf16.xpose.msra.mxu0 0
        %1623 = vmatpush.bf16.xpose.msra.mxu0 0
        %1624 = vmatpush.bf16.xpose.msra.mxu0 0
        %1625 = vmatpush.bf16.xpose.msra.mxu0 0
        %1626 = vmatpush.bf16.xpose.msra.mxu0 0
        %1627 = vmatpush.bf16.xpose.msra.mxu0 0
        %1628 = vmatpush.bf16.xpose.msra.mxu0 %v1619
        %1629 = vmatmul.bf16.gmra.mxu0 %v1616
        %v1630 = vpop.f32.mrf.mxu0
        %v1631 = vadd.f32 0.0, %v1630
        %v1632 = vpop.f32.mrf.mxu0
        %1633 = vdwg.mxu0
        %v1634 = vunpack.c.l.b16 %v1564
        %v1635 = vpack.c.b16 %v1634, %v1634
        %1636 = vrot.lane.b32.xlu0 %v1635, 96
        %v1637 = vpop.permute.xlu0 %1636
        %v1639 = vsel %vm704, %v1564, 0
        %v1642 = vsel %vm704, %v1637, 0
        %1644 = vmatpush.bf16.xpose.msra.mxu0 0
        %1645 = vmatpush.bf16.xpose.msra.mxu0 0
        %1646 = vmatpush.bf16.xpose.msra.mxu0 0
        %1647 = vmatpush.bf16.xpose.msra.mxu0 0
        %1648 = vmatpush.bf16.xpose.msra.mxu0 0
        %1649 = vmatpush.bf16.xpose.msra.mxu0 0
        %1650 = vmatpush.bf16.xpose.msra.mxu0 0
        %1651 = vmatpush.bf16.xpose.msra.mxu0 %v1642
        %1652 = vmatmul.bf16.gmra.mxu0 %v1639
        %v1653 = vpop.f32.mrf.mxu0
        %v1654 = vadd.f32 0.0, %v1653
        %v1655 = vpop.f32.mrf.mxu0
        %1656 = vdwg.mxu0
        %v1657 = vmul.f32 %v1585, 0.35355338
        %v1658 = vmul.f32 %v1608, 0.35355338
        %v1659 = vmul.f32 %v1631, 0.35355338
        %v1660 = vmul.f32 %v1654, 0.35355338
        %v1661 = vadd.f32 %v1657, %v647
        %v1662 = vadd.f32 %v1658, %v647
        %v1663 = vadd.f32 %v1659, %v647
        %v1664 = vadd.f32 %v1660, %v647
        %v1665 = vsel %vm704, %v1661, -inf
        %1666 = vmax.xlane.f32.xlu0 %v1665
        %v1667 = vpop.xlane.xlu0 %1666
        %v1668 = vsel %vm704, %v1662, -inf
        %1669 = vmax.xlane.f32.xlu0 %v1668
        %v1670 = vpop.xlane.xlu0 %1669
        %v1671 = vsel %vm704, %v1663, -inf
        %1672 = vmax.xlane.f32.xlu0 %v1671
        %v1673 = vpop.xlane.xlu0 %1672
        %v1674 = vsel %vm704, %v1664, -inf
        %1675 = vmax.xlane.f32.xlu0 %v1674
        %v1676 = vpop.xlane.xlu0 %1675
        %v1677 = vsub.f32 %v1661, %v1667
        %v1678 = vsub.f32 %v1662, %v1670
        %v1679 = vsub.f32 %v1663, %v1673
        %v1680 = vsub.f32 %v1664, %v1676
        %v1681 = vmul.f32 %v1677, 1.442695
        %v1682 = vpow.pop %v1681
        %v1683 = vmul.f32 %v1678, 1.442695
        %v1684 = vpow.pop %v1683
        %v1685 = vmul.f32 %v1679, 1.442695
        %v1686 = vpow.pop %v1685
        %v1687 = vmul.f32 %v1680, 1.442695
        %v1688 = vpow.pop %v1687
        %v1689 = vsel %vm704, %v1682, 0.0
        %1690 = vadd.xlane.f32.xlu0 %v1689
        %v1691 = vpop.xlane.xlu0 %1690
        %v1692 = vsel %vm704, %v1684, 0.0
        %1693 = vadd.xlane.f32.xlu0 %v1692
        %v1694 = vpop.xlane.xlu0 %1693
        %v1695 = vsel %vm704, %v1686, 0.0
        %1696 = vadd.xlane.f32.xlu0 %v1695
        %v1697 = vpop.xlane.xlu0 %1696
        %v1698 = vsel %vm704, %v1688, 0.0
        %1699 = vadd.xlane.f32.xlu0 %v1698
        %v1700 = vpop.xlane.xlu0 %1699
        %v1701 = vrcp.pop %v1691
        %v1702 = vrcp.pop %v1694
        %v1703 = vrcp.pop %v1697
        %v1704 = vrcp.pop %v1700
        %v1705 = vmul.f32 %v1682, %v1701
        %v1706 = vmul.f32 %v1684, %v1702
        %v1707 = vmul.f32 %v1686, %v1703
        %v1708 = vmul.f32 %v1688, %v1704
        %v1709 = vpack.c.bf16 %v1705, %v1705
        %v1710 = vpack.c.bf16 %v1706, %v1706
        %v1711 = vpack.c.bf16 %v1707, %v1707
        %v1712 = vpack.c.bf16 %v1708, %v1708
        %1713 = vrot.lane.b32.xlu0 %v1566, 64
        %v1714 = vpop.permute.xlu0 %1713
        %v1716 = vsel %vm704, %v1709, 0
        %v1719 = vsel %vm854, %v1714, 0
        %1721 = vmatpush.bf16.msra.mxu0 0
        %1722 = vmatpush.bf16.msra.mxu0 0
        %1723 = vmatpush.bf16.msra.mxu0 0
        %1724 = vmatpush.bf16.msra.mxu0 0
        %1725 = vmatpush.bf16.msra.mxu0 0
        %1726 = vmatpush.bf16.msra.mxu0 0
        %1727 = vmatpush.bf16.msra.mxu0 0
        %1728 = vmatpush.bf16.msra.mxu0 %v1719
        %1729 = vmatmul.bf16.gmra.mxu0 %v1716
        %v1730 = vpop.f32.mrf.mxu0
        %v1731 = vadd.f32 0.0, %v1730
        %v1732 = vpop.f32.mrf.mxu0
        %1733 = vdwg.mxu0
        %1734 = vrot.lane.b32.xlu0 %v1589, 64
        %v1735 = vpop.permute.xlu0 %1734
        %v1737 = vsel %vm704, %v1710, 0
        %v1740 = vsel %vm854, %v1735, 0
        %1742 = vmatpush.bf16.msra.mxu0 0
        %1743 = vmatpush.bf16.msra.mxu0 0
        %1744 = vmatpush.bf16.msra.mxu0 0
        %1745 = vmatpush.bf16.msra.mxu0 0
        %1746 = vmatpush.bf16.msra.mxu0 0
        %1747 = vmatpush.bf16.msra.mxu0 0
        %1748 = vmatpush.bf16.msra.mxu0 0
        %1749 = vmatpush.bf16.msra.mxu0 %v1740
        %1750 = vmatmul.bf16.gmra.mxu0 %v1737
        %v1751 = vpop.f32.mrf.mxu0
        %v1752 = vadd.f32 0.0, %v1751
        %v1753 = vpop.f32.mrf.mxu0
        %1754 = vdwg.mxu0
        %1755 = vrot.lane.b32.xlu0 %v1612, 64
        %v1756 = vpop.permute.xlu0 %1755
        %v1758 = vsel %vm704, %v1711, 0
        %v1761 = vsel %vm854, %v1756, 0
        %1763 = vmatpush.bf16.msra.mxu0 0
        %1764 = vmatpush.bf16.msra.mxu0 0
        %1765 = vmatpush.bf16.msra.mxu0 0
        %1766 = vmatpush.bf16.msra.mxu0 0
        %1767 = vmatpush.bf16.msra.mxu0 0
        %1768 = vmatpush.bf16.msra.mxu0 0
        %1769 = vmatpush.bf16.msra.mxu0 0
        %1770 = vmatpush.bf16.msra.mxu0 %v1761
        %1771 = vmatmul.bf16.gmra.mxu0 %v1758
        %v1772 = vpop.f32.mrf.mxu0
        %v1773 = vadd.f32 0.0, %v1772
        %v1774 = vpop.f32.mrf.mxu0
        %1775 = vdwg.mxu0
        %1776 = vrot.lane.b32.xlu0 %v1635, 64
        %v1777 = vpop.permute.xlu0 %1776
        %v1779 = vsel %vm704, %v1712, 0
        %v1782 = vsel %vm854, %v1777, 0
        %1784 = vmatpush.bf16.msra.mxu0 0
        %1785 = vmatpush.bf16.msra.mxu0 0
        %1786 = vmatpush.bf16.msra.mxu0 0
        %1787 = vmatpush.bf16.msra.mxu0 0
        %1788 = vmatpush.bf16.msra.mxu0 0
        %1789 = vmatpush.bf16.msra.mxu0 0
        %1790 = vmatpush.bf16.msra.mxu0 0
        %1791 = vmatpush.bf16.msra.mxu0 %v1782
        %1792 = vmatmul.bf16.gmra.mxu0 %v1779
        %v1793 = vpop.f32.mrf.mxu0
        %v1794 = vadd.f32 0.0, %v1793
        %v1795 = vpop.f32.mrf.mxu0
        %1796 = vdwg.mxu0
        %1798 = vrot.lane.b32.xlu0 %v1752, 8
        %v1799 = vpop.permute.xlu0 %1798
        %1802 = vrot.lane.b32.xlu0 %v1773, 16
        %v1803 = vpop.permute.xlu0 %1802
        %1806 = vrot.lane.b32.xlu0 %v1794, 24
        %v1807 = vpop.permute.xlu0 %1806
        %v1809 = vsel %vm704, %v1731, %v1799
        %v1810 = vsel %vm625, %v1809, %v1803
        %v1811 = vsel %vm948, %v1810, %v1807
        %v1812 = vpack.c.bf16 %v1811, %v1811
        %v1813 = vperm.slane %v1511, 0
        %v1818 = vunpack.c.l.b16 %v1521
        %v1819 = vunpack.c.l.b16 %v1522
        %v1820 = vunpack.c.l.b16 %v1523
        %v1821 = vunpack.c.l.b16 %v1524
        %v1822 = vpack.c.b16 %v1819, %v1818
        %v1823 = vpack.c.b16 %v1821, %v1820
        %v1827 = vsel %vm675, %v1812, 0
        %1829 = vmatpush.bf16.msra.mxu0 0
        %1830 = vmatpush.bf16.msra.mxu0 0
        %1831 = vmatpush.bf16.msra.mxu0 0
        %1832 = vmatpush.bf16.msra.mxu0 0
        %1833 = vmatpush.bf16.msra.mxu0 0
        %1834 = vmatpush.bf16.msra.mxu0 0
        %1835 = vmatpush.bf16.msra.mxu0 %v1823
        %1836 = vmatpush.bf16.msra.mxu0 %v1822
        %1837 = vmatmul.bf16.gmra.mxu0 %v1827
        %v1838 = vpop.f32.mrf.mxu0
        %v1839 = vadd.f32 %v1813, %v1838
        %v1840 = vpop.f32.mrf.mxu0
        %1841 = vdwg.mxu0
        %v1842 = vadd.f32 %v1509, %v1839
        %v1843 = vsel %vm675, %v1842, 0.0
        %1844 = vadd.xlane.f32.xlu0 %v1843
        %v1845 = vpop.xlane.xlu0 %1844
        %v1846 = vmul.f32 %v1845, %v990
        %v1847 = vsub.f32 %v1842, %v1846
        %v1848 = vmul.f32 %v1847, %v1847
        %v1849 = vsel %vm675, %v1848, 0.0
        %1850 = vadd.xlane.f32.xlu0 %v1849
        %v1851 = vpop.xlane.xlu0 %1850
        %v1852 = vmul.f32 %v1851, %v990
        %v1853 = vadd.f32 %v1852, 1e-05
        %v1854 = vrsqrt.pop %v1853
        %v1855 = vmul.f32 %v1854, %v1853
        %v1856 = vmul.f32 %v1855, %v1854
        %v1857 = vmul.f32 0.5, %v1856
        %v1858 = vsub.f32 1.5, %v1857
        %v1859 = vmul.f32 %v1854, %v1858
        %vm1860 = vweird.f32 %v1853
        %vm1861 = vweird.f32 %v1854
        %vm1862 = vmor %vm1860, %vm1861
        %v1863 = vsel %vm1862, %v1854, %v1859
        %v1864 = vmul.f32 %v1847, %v1863
        %v1865 = vperm.slane %v1511, 3
        %v1866 = vmul.f32 %v1864, %v1865
        %v1867 = vperm.slane %v1511, 4
        %v1868 = vadd.f32 %v1866, %v1867
        %s1869 = scalar_lea.vmem %s5, 48
        %v1870 = vld [vmem:[%s1869] sm:$0xf]
        %v1871 = vld [vmem:[%s1869 + $0x4] sm:$0xf]
        %v1872 = vld [vmem:[%s1869 + $0x8] sm:$0xf]
        %v1873 = vld [vmem:[%s1869 + $0xc] sm:$0xf]
        %s1874 = scalar_lea.vmem %s6, 3
        %v1875 = vld [vmem:[%s1874] sm:$0x1]
        %s1876 = scalar_lea.vmem [#allocation7], 48
        %v1877 = vld [vmem:[%s1876] sm:$0xf]
        %v1878 = vld [vmem:[%s1876 + $0x4] sm:$0xf]
        %v1879 = vld [vmem:[%s1876 + $0x8] sm:$0xf]
        %v1880 = vld [vmem:[%s1876 + $0xc] sm:$0xf]
        %v1881 = vpack.c.bf16 %v1868, %v1868
        %v1883 = vperm.slane %v1875, 0
        %v1889 = vunpack.c.l.b16 %v1870
        %v1890 = vunpack.c.l.b16 %v1871
        %v1891 = vunpack.c.l.b16 %v1872
        %v1892 = vunpack.c.l.b16 %v1873
        %v1893 = vpack.c.b16 %v1890, %v1889
        %v1894 = vpack.c.b16 %v1892, %v1891
        %v1898 = vsel %vm675, %v1881, 0
        %1900 = vmatpush.bf16.msra.mxu0 0
        %1901 = vmatpush.bf16.msra.mxu0 0
        %1902 = vmatpush.bf16.msra.mxu0 0
        %1903 = vmatpush.bf16.msra.mxu0 0
        %1904 = vmatpush.bf16.msra.mxu0 0
        %1905 = vmatpush.bf16.msra.mxu0 0
        %1906 = vmatpush.bf16.msra.mxu0 %v1894
        %1907 = vmatpush.bf16.msra.mxu0 %v1893
        %1908 = vmatmul.bf16.gmra.mxu0 %v1898
        %v1909 = vpop.f32.mrf.mxu0
        %v1910 = vadd.f32 %v1883, %v1909
        %v1911 = vpop.f32.mrf.mxu0
        %1912 = vdwg.mxu0
        %1913 = vrot.lane.b32.xlu0 %v1893, 96
        %v1914 = vpop.permute.xlu0 %1913
        %1915 = vrot.lane.b32.xlu0 %v1894, 96
        %v1916 = vpop.permute.xlu0 %1915
        %1919 = vrot.lane.b32.xlu0 %v1883, 96
        %v1920 = vpop.permute.xlu0 %1919
        %1922 = vmatpush.bf16.msra.mxu0 0
        %1923 = vmatpush.bf16.msra.mxu0 0
        %1924 = vmatpush.bf16.msra.mxu0 0
        %1925 = vmatpush.bf16.msra.mxu0 0
        %1926 = vmatpush.bf16.msra.mxu0 0
        %1927 = vmatpush.bf16.msra.mxu0 0
        %1928 = vmatpush.bf16.msra.mxu0 %v1916
        %1929 = vmatpush.bf16.msra.mxu0 %v1914
        %1930 = vmatmul.bf16.gmra.mxu0 %v1069
        %v1931 = vpop.f32.mrf.mxu0
        %v1932 = vadd.f32 %v1920, %v1931
        %v1933 = vpop.f32.mrf.mxu0
        %1934 = vdwg.mxu0
        %v1935 = vpack.c.bf16 %v1910, %v1910
        %1937 = vrot.lane.b32.xlu0 %v1935, 120
        %v1938 = vpop.permute.xlu0 %1937
        %1939 = vrot.lane.b32.xlu0 %v1935, 112
        %v1940 = vpop.permute.xlu0 %1939
        %1941 = vrot.lane.b32.xlu0 %v1935, 104
        %v1942 = vpop.permute.xlu0 %1941
        %v1943 = vpack.c.bf16 %v1932, %v1932
        %1945 = vrot.lane.b32.xlu0 %v1943, 120
        %v1946 = vpop.permute.xlu0 %1945
        %1947 = vrot.lane.b32.xlu0 %v1943, 112
        %v1948 = vpop.permute.xlu0 %1947
        %1949 = vrot.lane.b32.xlu0 %v1943, 104
        %v1950 = vpop.permute.xlu0 %1949
        %v1952 = vsel %vm704, %v1935, 0
        %v1955 = vsel %vm704, %v1943, 0
        %1957 = vmatpush.bf16.xpose.msra.mxu0 0
        %1958 = vmatpush.bf16.xpose.msra.mxu0 0
        %1959 = vmatpush.bf16.xpose.msra.mxu0 0
        %1960 = vmatpush.bf16.xpose.msra.mxu0 0
        %1961 = vmatpush.bf16.xpose.msra.mxu0 0
        %1962 = vmatpush.bf16.xpose.msra.mxu0 0
        %1963 = vmatpush.bf16.xpose.msra.mxu0 0
        %1964 = vmatpush.bf16.xpose.msra.mxu0 %v1955
        %1965 = vmatmul.bf16.gmra.mxu0 %v1952
        %v1966 = vpop.f32.mrf.mxu0
        %v1967 = vadd.f32 0.0, %v1966
        %v1968 = vpop.f32.mrf.mxu0
        %1969 = vdwg.mxu0
        %v1971 = vsel %vm704, %v1938, 0
        %v1974 = vsel %vm704, %v1946, 0
        %1976 = vmatpush.bf16.xpose.msra.mxu0 0
        %1977 = vmatpush.bf16.xpose.msra.mxu0 0
        %1978 = vmatpush.bf16.xpose.msra.mxu0 0
        %1979 = vmatpush.bf16.xpose.msra.mxu0 0
        %1980 = vmatpush.bf16.xpose.msra.mxu0 0
        %1981 = vmatpush.bf16.xpose.msra.mxu0 0
        %1982 = vmatpush.bf16.xpose.msra.mxu0 0
        %1983 = vmatpush.bf16.xpose.msra.mxu0 %v1974
        %1984 = vmatmul.bf16.gmra.mxu0 %v1971
        %v1985 = vpop.f32.mrf.mxu0
        %v1986 = vadd.f32 0.0, %v1985
        %v1987 = vpop.f32.mrf.mxu0
        %1988 = vdwg.mxu0
        %v1990 = vsel %vm704, %v1940, 0
        %v1993 = vsel %vm704, %v1948, 0
        %1995 = vmatpush.bf16.xpose.msra.mxu0 0
        %1996 = vmatpush.bf16.xpose.msra.mxu0 0
        %1997 = vmatpush.bf16.xpose.msra.mxu0 0
        %1998 = vmatpush.bf16.xpose.msra.mxu0 0
        %1999 = vmatpush.bf16.xpose.msra.mxu0 0
        %2000 = vmatpush.bf16.xpose.msra.mxu0 0
        %2001 = vmatpush.bf16.xpose.msra.mxu0 0
        %2002 = vmatpush.bf16.xpose.msra.mxu0 %v1993
        %2003 = vmatmul.bf16.gmra.mxu0 %v1990
        %v2004 = vpop.f32.mrf.mxu0
        %v2005 = vadd.f32 0.0, %v2004
        %v2006 = vpop.f32.mrf.mxu0
        %2007 = vdwg.mxu0
        %v2009 = vsel %vm704, %v1942, 0
        %v2012 = vsel %vm704, %v1950, 0
        %2014 = vmatpush.bf16.xpose.msra.mxu0 0
        %2015 = vmatpush.bf16.xpose.msra.mxu0 0
        %2016 = vmatpush.bf16.xpose.msra.mxu0 0
        %2017 = vmatpush.bf16.xpose.msra.mxu0 0
        %2018 = vmatpush.bf16.xpose.msra.mxu0 0
        %2019 = vmatpush.bf16.xpose.msra.mxu0 0
        %2020 = vmatpush.bf16.xpose.msra.mxu0 0
        %2021 = vmatpush.bf16.xpose.msra.mxu0 %v2012
        %2022 = vmatmul.bf16.gmra.mxu0 %v2009
        %v2023 = vpop.f32.mrf.mxu0
        %v2024 = vadd.f32 0.0, %v2023
        %v2025 = vpop.f32.mrf.mxu0
        %2026 = vdwg.mxu0
        %v2027 = vmul.f32 %v1967, 0.35355338
        %v2028 = vmul.f32 %v1986, 0.35355338
        %v2029 = vmul.f32 %v2005, 0.35355338
        %v2030 = vmul.f32 %v2024, 0.35355338
        %v2031 = vsel %vm1180, %v2027, -inf
        %2032 = vmax.xlane.f32.xlu0 %v2031
        %v2033 = vpop.xlane.xlu0 %2032
        %v2034 = vsel %vm1180, %v2028, -inf
        %2035 = vmax.xlane.f32.xlu0 %v2034
        %v2036 = vpop.xlane.xlu0 %2035
        %v2037 = vsel %vm1180, %v2029, -inf
        %2038 = vmax.xlane.f32.xlu0 %v2037
        %v2039 = vpop.xlane.xlu0 %2038
        %v2040 = vsel %vm1180, %v2030, -inf
        %2041 = vmax.xlane.f32.xlu0 %v2040
        %v2042 = vpop.xlane.xlu0 %2041
        %v2043 = vsub.f32 %v2027, %v2033
        %v2044 = vsub.f32 %v2028, %v2036
        %v2045 = vsub.f32 %v2029, %v2039
        %v2046 = vsub.f32 %v2030, %v2042
        %v2047 = vmul.f32 %v2043, 1.442695
        %v2048 = vpow.pop %v2047
        %v2049 = vmul.f32 %v2044, 1.442695
        %v2050 = vpow.pop %v2049
        %v2051 = vmul.f32 %v2045, 1.442695
        %v2052 = vpow.pop %v2051
        %v2053 = vmul.f32 %v2046, 1.442695
        %v2054 = vpow.pop %v2053
        %v2055 = vsel %vm1180, %v2048, 0.0
        %2056 = vadd.xlane.f32.xlu0 %v2055
        %v2057 = vpop.xlane.xlu0 %2056
        %v2058 = vsel %vm1180, %v2050, 0.0
        %2059 = vadd.xlane.f32.xlu0 %v2058
        %v2060 = vpop.xlane.xlu0 %2059
        %v2061 = vsel %vm1180, %v2052, 0.0
        %2062 = vadd.xlane.f32.xlu0 %v2061
        %v2063 = vpop.xlane.xlu0 %2062
        %v2064 = vsel %vm1180, %v2054, 0.0
        %2065 = vadd.xlane.f32.xlu0 %v2064
        %v2066 = vpop.xlane.xlu0 %2065
        %v2067 = vrcp.pop %v2057
        %v2068 = vrcp.pop %v2060
        %v2069 = vrcp.pop %v2063
        %v2070 = vrcp.pop %v2066
        %v2071 = vmul.f32 %v2048, %v2067
        %v2072 = vmul.f32 %v2050, %v2068
        %v2073 = vmul.f32 %v2052, %v2069
        %v2074 = vmul.f32 %v2054, %v2070
        %v2075 = vpack.c.bf16 %v2071, %v2071
        %v2076 = vpack.c.bf16 %v2072, %v2072
        %v2077 = vpack.c.bf16 %v2073, %v2073
        %v2078 = vpack.c.bf16 %v2074, %v2074
        %v2079 = vunpack.c.l.b16 %v1943
        %v2080 = vpack.c.b16 %v2079, %v2079
        %2081 = vrot.lane.b32.xlu0 %v2080, 96
        %v2082 = vpop.permute.xlu0 %2081
        %v2084 = vsel %vm1180, %v2075, 0
        %v2087 = vsel %vm1236, %v2082, 0
        %2089 = vmatpush.bf16.msra.mxu0 0
        %2090 = vmatpush.bf16.msra.mxu0 0
        %2091 = vmatpush.bf16.msra.mxu0 0
        %2092 = vmatpush.bf16.msra.mxu0 0
        %2093 = vmatpush.bf16.msra.mxu0 0
        %2094 = vmatpush.bf16.msra.mxu0 0
        %2095 = vmatpush.bf16.msra.mxu0 0
        %2096 = vmatpush.bf16.msra.mxu0 %v2087
        %2097 = vmatmul.bf16.gmra.mxu0 %v2084
        %v2098 = vpop.f32.mrf.mxu0
        %v2099 = vadd.f32 0.0, %v2098
        %v2100 = vpop.f32.mrf.mxu0
        %2101 = vdwg.mxu0
        %v2102 = vunpack.c.l.b16 %v1946
        %v2103 = vpack.c.b16 %v2102, %v2102
        %2104 = vrot.lane.b32.xlu0 %v2103, 96
        %v2105 = vpop.permute.xlu0 %2104
        %v2107 = vsel %vm1180, %v2076, 0
        %v2110 = vsel %vm1236, %v2105, 0
        %2112 = vmatpush.bf16.msra.mxu0 0
        %2113 = vmatpush.bf16.msra.mxu0 0
        %2114 = vmatpush.bf16.msra.mxu0 0
        %2115 = vmatpush.bf16.msra.mxu0 0
        %2116 = vmatpush.bf16.msra.mxu0 0
        %2117 = vmatpush.bf16.msra.mxu0 0
        %2118 = vmatpush.bf16.msra.mxu0 0
        %2119 = vmatpush.bf16.msra.mxu0 %v2110
        %2120 = vmatmul.bf16.gmra.mxu0 %v2107
        %v2121 = vpop.f32.mrf.mxu0
        %v2122 = vadd.f32 0.0, %v2121
        %v2123 = vpop.f32.mrf.mxu0
        %2124 = vdwg.mxu0
        %v2125 = vunpack.c.l.b16 %v1948
        %v2126 = vpack.c.b16 %v2125, %v2125
        %2127 = vrot.lane.b32.xlu0 %v2126, 96
        %v2128 = vpop.permute.xlu0 %2127
        %v2130 = vsel %vm1180, %v2077, 0
        %v2133 = vsel %vm1236, %v2128, 0
        %2135 = vmatpush.bf16.msra.mxu0 0
        %2136 = vmatpush.bf16.msra.mxu0 0
        %2137 = vmatpush.bf16.msra.mxu0 0
        %2138 = vmatpush.bf16.msra.mxu0 0
        %2139 = vmatpush.bf16.msra.mxu0 0
        %2140 = vmatpush.bf16.msra.mxu0 0
        %2141 = vmatpush.bf16.msra.mxu0 0
        %2142 = vmatpush.bf16.msra.mxu0 %v2133
        %2143 = vmatmul.bf16.gmra.mxu0 %v2130
        %v2144 = vpop.f32.mrf.mxu0
        %v2145 = vadd.f32 0.0, %v2144
        %v2146 = vpop.f32.mrf.mxu0
        %2147 = vdwg.mxu0
        %v2148 = vunpack.c.l.b16 %v1950
        %v2149 = vpack.c.b16 %v2148, %v2148
        %2150 = vrot.lane.b32.xlu0 %v2149, 96
        %v2151 = vpop.permute.xlu0 %2150
        %v2153 = vsel %vm1180, %v2078, 0
        %v2156 = vsel %vm1236, %v2151, 0
        %2158 = vmatpush.bf16.msra.mxu0 0
        %2159 = vmatpush.bf16.msra.mxu0 0
        %2160 = vmatpush.bf16.msra.mxu0 0
        %2161 = vmatpush.bf16.msra.mxu0 0
        %2162 = vmatpush.bf16.msra.mxu0 0
        %2163 = vmatpush.bf16.msra.mxu0 0
        %2164 = vmatpush.bf16.msra.mxu0 0
        %2165 = vmatpush.bf16.msra.mxu0 %v2156
        %2166 = vmatmul.bf16.gmra.mxu0 %v2153
        %v2167 = vpop.f32.mrf.mxu0
        %v2168 = vadd.f32 0.0, %v2167
        %v2169 = vpop.f32.mrf.mxu0
        %2170 = vdwg.mxu0
        %2172 = vrot.lane.b32.xlu0 %v2122, 8
        %v2173 = vpop.permute.xlu0 %2172
        %2176 = vrot.lane.b32.xlu0 %v2145, 16
        %v2177 = vpop.permute.xlu0 %2176
        %2180 = vrot.lane.b32.xlu0 %v2168, 24
        %v2181 = vpop.permute.xlu0 %2180
        %v2183 = vsel %vm704, %v2099, %v2173
        %v2184 = vsel %vm625, %v2183, %v2177
        %v2185 = vsel %vm948, %v2184, %v2181
        %v2186 = vpack.c.bf16 %v2185, %v2185
        %v2187 = vperm.slane %v1511, 1
        %v2192 = vunpack.c.l.b16 %v1877
        %v2193 = vunpack.c.l.b16 %v1878
        %v2194 = vunpack.c.l.b16 %v1879
        %v2195 = vunpack.c.l.b16 %v1880
        %v2196 = vpack.c.b16 %v2193, %v2192
        %v2197 = vpack.c.b16 %v2195, %v2194
        %v2201 = vsel %vm675, %v2186, 0
        %2203 = vmatpush.bf16.msra.mxu0 0
        %2204 = vmatpush.bf16.msra.mxu0 0
        %2205 = vmatpush.bf16.msra.mxu0 0
        %2206 = vmatpush.bf16.msra.mxu0 0
        %2207 = vmatpush.bf16.msra.mxu0 0
        %2208 = vmatpush.bf16.msra.mxu0 0
        %2209 = vmatpush.bf16.msra.mxu0 %v2197
        %2210 = vmatpush.bf16.msra.mxu0 %v2196
        %2211 = vmatmul.bf16.gmra.mxu0 %v2201
        %v2212 = vpop.f32.mrf.mxu0
        %v2213 = vadd.f32 %v2187, %v2212
        %v2214 = vpop.f32.mrf.mxu0
        %2215 = vdwg.mxu0
        %v2216 = vadd.f32 %v1868, %v2213
        %v2217 = vsel %vm675, %v2216, 0.0
        %2218 = vadd.xlane.f32.xlu0 %v2217
        %v2219 = vpop.xlane.xlu0 %2218
        %v2220 = vmul.f32 %v2219, %v990
        %v2221 = vsub.f32 %v2216, %v2220
        %v2222 = vmul.f32 %v2221, %v2221
        %v2223 = vsel %vm675, %v2222, 0.0
        %2224 = vadd.xlane.f32.xlu0 %v2223
        %v2225 = vpop.xlane.xlu0 %2224
        %v2226 = vmul.f32 %v2225, %v990
        %v2227 = vadd.f32 %v2226, 1e-05
        %v2228 = vrsqrt.pop %v2227
        %v2229 = vmul.f32 %v2228, %v2227
        %v2230 = vmul.f32 %v2229, %v2228
        %v2231 = vmul.f32 0.5, %v2230
        %v2232 = vsub.f32 1.5, %v2231
        %v2233 = vmul.f32 %v2228, %v2232
        %vm2234 = vweird.f32 %v2227
        %vm2235 = vweird.f32 %v2228
        %vm2236 = vmor %vm2234, %vm2235
        %v2237 = vsel %vm2236, %v2228, %v2233
        %v2238 = vmul.f32 %v2221, %v2237
        %v2239 = vperm.slane %v1511, 5
        %v2240 = vmul.f32 %v2238, %v2239
        %v2241 = vperm.slane %v1511, 6
        %v2242 = vadd.f32 %v2240, %v2241
        %v2243 = vpack.c.bf16 %v2242, %v2242
        %s2244 = scalar_lea.vmem %s8, 16
        %v2245 = vld [vmem:[%s2244] sm:$0xf]
        %v2246 = vld [vmem:[%s2244 + $0x4] sm:$0xf]
        %v2247 = vld [vmem:[%s2244 + $0x8] sm:$0xf]
        %v2248 = vld [vmem:[%s2244 + $0xc] sm:$0xf]
        %s2249 = scalar_lea.vmem [#allocation8], 1
        %v2250 = vld [vmem:[%s2249] sm:$0x1]
        %v2252 = vperm.slane %v2250, 0
        %v2258 = vunpack.c.l.b16 %v2245
        %v2259 = vunpack.c.l.b16 %v2246
        %v2260 = vunpack.c.l.b16 %v2247
        %v2261 = vunpack.c.l.b16 %v2248
        %v2262 = vpack.c.b16 %v2259, %v2258
        %v2263 = vpack.c.b16 %v2261, %v2260
        %v2267 = vsel %vm675, %v2243, 0
        %2269 = vmatpush.bf16.msra.mxu0 0
        %2270 = vmatpush.bf16.msra.mxu0 0
        %2271 = vmatpush.bf16.msra.mxu0 0
        %2272 = vmatpush.bf16.msra.mxu0 0
        %2273 = vmatpush.bf16.msra.mxu0 0
        %2274 = vmatpush.bf16.msra.mxu0 0
        %2275 = vmatpush.bf16.msra.mxu0 %v2263
        %2276 = vmatpush.bf16.msra.mxu0 %v2262
        %2277 = vmatmul.bf16.gmra.mxu0 %v2267
        %v2278 = vpop.f32.mrf.mxu0
        %v2279 = vadd.f32 %v2252, %v2278
        %v2280 = vpop.f32.mrf.mxu0
        %2281 = vdwg.mxu0
        %v2282 = vmax.f32 %v2279, 0.0
        %v2283 = vpack.c.bf16 %v2282, %v2282
        %s2284 = scalar_lea.vmem %s10, 32
        %v2285 = vld [vmem:[%s2284] sm:$0xf]
        %v2286 = vld [vmem:[%s2284 + $0x4] sm:$0xf]
        %v2287 = vld [vmem:[%s2284 + $0x8] sm:$0xf]
        %v2288 = vld [vmem:[%s2284 + $0xc] sm:$0xf]
        %v2289 = vld [vmem:[%s2284 + $0x10] sm:$0xf]
        %v2290 = vld [vmem:[%s2284 + $0x14] sm:$0xf]
        %v2291 = vld [vmem:[%s2284 + $0x18] sm:$0xf]
        %v2292 = vld [vmem:[%s2284 + $0x1c] sm:$0xf]
        %v2293 = vperm.slane %v1511, 2
        %v2302 = vunpack.c.l.b16 %v2285
        %v2303 = vunpack.c.l.b16 %v2286
        %v2304 = vunpack.c.l.b16 %v2287
        %v2305 = vunpack.c.l.b16 %v2288
        %v2306 = vunpack.c.l.b16 %v2289
        %v2307 = vunpack.c.l.b16 %v2290
        %v2308 = vunpack.c.l.b16 %v2291
        %v2309 = vunpack.c.l.b16 %v2292
        %v2310 = vpack.c.b16 %v2303, %v2302
        %v2311 = vpack.c.b16 %v2305, %v2304
        %v2312 = vpack.c.b16 %v2307, %v2306
        %v2313 = vpack.c.b16 %v2309, %v2308
        %v2319 = vsel %vm1466, %v2283, 0
        %2321 = vmatpush.bf16.msra.mxu0 0
        %2322 = vmatpush.bf16.msra.mxu0 0
        %2323 = vmatpush.bf16.msra.mxu0 0
        %2324 = vmatpush.bf16.msra.mxu0 0
        %2325 = vmatpush.bf16.msra.mxu0 %v2313
        %2326 = vmatpush.bf16.msra.mxu0 %v2312
        %2327 = vmatpush.bf16.msra.mxu0 %v2311
        %2328 = vmatpush.bf16.msra.mxu0 %v2310
        %2329 = vmatmul.bf16.gmra.mxu0 %v2319
        %v2330 = vpop.f32.mrf.mxu0
        %v2331 = vadd.f32 %v2293, %v2330
        %v2332 = vpop.f32.mrf.mxu0
        %2333 = vdwg.mxu0
        %v2334 = vadd.f32 %v2242, %v2331
        %v2335 = vsel %vm675, %v2334, 0.0
        %2336 = vadd.xlane.f32.xlu0 %v2335
        %v2337 = vpop.xlane.xlu0 %2336
        %v2338 = vmul.f32 %v2337, %v990
        %v2339 = vsub.f32 %v2334, %v2338
        %v2340 = vmul.f32 %v2339, %v2339
        %v2341 = vsel %vm675, %v2340, 0.0
        %2342 = vadd.xlane.f32.xlu0 %v2341
        %v2343 = vpop.xlane.xlu0 %2342
        %v2344 = vmul.f32 %v2343, %v990
        %v2345 = vadd.f32 %v2344, 1e-05
        %v2346 = vrsqrt.pop %v2345
        %v2347 = vmul.f32 %v2346, %v2345
        %v2348 = vmul.f32 %v2347, %v2346
        %v2349 = vmul.f32 0.5, %v2348
        %v2350 = vsub.f32 1.5, %v2349
        %v2351 = vmul.f32 %v2346, %v2350
        %vm2352 = vweird.f32 %v2345
        %vm2353 = vweird.f32 %v2346
        %vm2354 = vmor %vm2352, %vm2353
        %v2355 = vsel %vm2354, %v2346, %v2351
        %v2356 = vmul.f32 %v2339, %v2355
        %v2357 = vperm.slane %v1511, 7
        %v2358 = vmul.f32 %v2356, %v2357
        %v2359 = vperm.slane %v1512, 0
        %v2360 = vadd.f32 %v2358, %v2359
        %v2361 = vld [vmem:[#allocation10] sm:$0x1]
        %v2362 = vld [vmem:[#allocation10 + $0x1] sm:$0x1]
        %v2363 = vsel %vm675, %v2360, 0.0
        %2364 = vadd.xlane.f32.xlu0 %v2363
        %v2365 = vpop.xlane.xlu0 %2364
        %v2366 = vmul.f32 %v2365, %v990
        %v2367 = vsub.f32 %v2360, %v2366
        %v2368 = vmul.f32 %v2367, %v2367
        %v2369 = vsel %vm675, %v2368, 0.0
        %2370 = vadd.xlane.f32.xlu0 %v2369
        %v2371 = vpop.xlane.xlu0 %2370
        %v2372 = vmul.f32 %v2371, %v990
        %v2373 = vadd.f32 %v2372, 1e-05
        %v2374 = vrsqrt.pop %v2373
        %v2375 = vmul.f32 %v2374, %v2373
        %v2376 = vmul.f32 %v2375, %v2374
        %v2377 = vmul.f32 0.5, %v2376
        %v2378 = vsub.f32 1.5, %v2377
        %v2379 = vmul.f32 %v2374, %v2378
        %vm2380 = vweird.f32 %v2373
        %vm2381 = vweird.f32 %v2374
        %vm2382 = vmor %vm2380, %vm2381
        %v2383 = vsel %vm2382, %v2374, %v2379
        %v2384 = vmul.f32 %v2367, %v2383
        %v2385 = vperm.slane %v2361, 0
        %v2386 = vmul.f32 %v2384, %v2385
        %v2387 = vperm.slane %v2362, 0
        %v2388 = vadd.f32 %v2386, %v2387
        %v2389 = vpack.c.bf16 %v2388, %v2388
        %v2390 = vld [vmem:[%s13] sm:$0xf]
        %v2391 = vld [vmem:[%s13 + $0x4] sm:$0xf]
        %v2392 = vld [vmem:[%s13 + $0x8] sm:$0xf]
        %v2393 = vld [vmem:[%s13 + $0xc] sm:$0xf]
        %v2394 = vld [vmem:[%s14] sm:$0x1]
        %v2396 = vperm.slane %v2394, 0
        %v2402 = vunpack.c.l.b16 %v2390
        %v2403 = vunpack.c.l.b16 %v2391
        %v2404 = vunpack.c.l.b16 %v2392
        %v2405 = vunpack.c.l.b16 %v2393
        %v2406 = vpack.c.b16 %v2403, %v2402
        %v2407 = vpack.c.b16 %v2405, %v2404
        %v2411 = vsel %vm675, %v2389, 0
        %2413 = vmatpush.bf16.msra.mxu0 0
        %2414 = vmatpush.bf16.msra.mxu0 0
        %2415 = vmatpush.bf16.msra.mxu0 0
        %2416 = vmatpush.bf16.msra.mxu0 0
        %2417 = vmatpush.bf16.msra.mxu0 0
        %2418 = vmatpush.bf16.msra.mxu0 0
        %2419 = vmatpush.bf16.msra.mxu0 %v2407
        %2420 = vmatpush.bf16.msra.mxu0 %v2406
        %2421 = vmatmul.bf16.gmra.mxu0 %v2411
        %v2422 = vpop.f32.mrf.mxu0
        %v2423 = vadd.f32 %v2396, %v2422
        %v2424 = vpop.f32.mrf.mxu0
        %2425 = vdwg.mxu0
        %v2427 = vrot.slane %v2423, 1
        %2428 = vrot.lane.b32.xlu0 %v2427, 16
        %v2429 = vpop.permute.xlu0 %2428
        %v2431 = vrot.slane %v2423, 2
        %2432 = vrot.lane.b32.xlu0 %v2431, 32
        %v2433 = vpop.permute.xlu0 %2432
        %v2435 = vrot.slane %v2423, 3
        %2436 = vrot.lane.b32.xlu0 %v2435, 48
        %v2437 = vpop.permute.xlu0 %2436
        %v2439 = vrot.slane %v2423, 4
        %2440 = vrot.lane.b32.xlu0 %v2439, 64
        %v2441 = vpop.permute.xlu0 %2440
        %v2443 = vrot.slane %v2423, 5
        %2444 = vrot.lane.b32.xlu0 %v2443, 80
        %v2445 = vpop.permute.xlu0 %2444
        %v2447 = vrot.slane %v2423, 6
        %2448 = vrot.lane.b32.xlu0 %v2447, 96
        %v2449 = vpop.permute.xlu0 %2448
        %v2451 = vrot.slane %v2423, 7
        %2452 = vrot.lane.b32.xlu0 %v2451, 112
        %v2453 = vpop.permute.xlu0 %2452
        %v2455 = vsel %vm625, %v2423, %v2429
        %v2456 = vsel %vm675, %v2455, %v2433
        %vm2457 = vcmask 392192
        %v2458 = vsel %vm2457, %v2456, %v2437
        %v2459 = vsel %vm1466, %v2458, %v2441
        %vm2460 = vcmask 654336
        %v2461 = vsel %vm2460, %v2459, %v2445
        %vm2462 = vcmask 785408
        %v2463 = vsel %vm2462, %v2461, %v2449
        %vm2464 = vcmask 916480
        %v2465 = vsel %vm2464, %v2463, %v2453
        %2466 = vst [vmem:[%s583] sm:$0x1] %v2465
        %s2467 = sand.u32 %s367, 1
        %s2468 = scalar_lea.sflag [#allocation4], %s2467
        %s2469 = sand.u32 %s367, 1
        %s2470 = scalar_lea.vmem [#allocation11], %s2469
        // Predicated region
        $region101: #{tpu_custom_call.1} parent=79 // pred_check
          %p2471 = pneg %p377
        $region102: #{tpu_custom_call.1} parent=79 // pred_check_branch
          %2473 = sbr.rel (%p2471) target = $region104
        $region103: #{tpu_custom_call.1} parent=79 // pred_region
          %2475 = vsyncadd %s2468, 0
          %s2476 = scalar_lea.hbm %s15, %s34
          %s2478 = sshll.u32 %s2470, 4
          %s2479 = int_to_ptr.vmem [resolvable:$true] %s2478
          %s2480 = sshll.u32 %s2476, 4
          %s2481 = int_to_ptr.hbm [resolvable:$true] %s2480
          %2483 = dma.vmem_to_hbm [thread:$0]  %s2479, 16, %s2481, %s2468
        $region104: #{tpu_custom_call.1} parent=79 // pred_fallthru
          _
      $region80: #{tpu_custom_call.1} parent=5 // pred_fallthru
        _
      %p2484 = scmp.le.s32.totalorder 2, %s29
      // Predicated region
      $region105: #{tpu_custom_call.1} parent=5 // pred_check
        %p2485 = pneg %p2484
      $region106: #{tpu_custom_call.1} parent=5 // pred_check_branch
        %2487 = sbr.rel (%p2485) target = $region108
      $region107: #{tpu_custom_call.1} parent=5 // pred_region
        %s2488 = ssub.s32 %s29, 2
        // Predicated region
        $region109: #{tpu_custom_call.1} parent=107 // pred_check
          %p2489 = pneg %p383
        $region110: #{tpu_custom_call.1} parent=107 // pred_check_branch
          %2491 = sbr.rel (%p2489) target = $region112
        $region111: #{tpu_custom_call.1} parent=107 // pred_region
          %s2492 = sand.u32 %s368, 1
          %s2493 = scalar_lea.sflag [#allocation4], %s2492
          %s2494 = sand.u32 %s368, 1
          %s2495 = scalar_lea.vmem [#allocation11], %s2494
          %2497 = dma.done %s2493, 16
        $region112: #{tpu_custom_call.1} parent=107 // pred_fallthru
          _
      $region108: #{tpu_custom_call.1} parent=5 // pred_fallthru
        _
    $region6: #{tpu_custom_call.1} parent=1 // loop_footer
      %s33 = sadd.s32 1, %s29
    $region7: #{tpu_custom_call.1} parent=1 // loop_footer_branch
      %28 = sbr.rel target = $region3
    $region8: #{tpu_custom_call.1} parent=1 // loop_exit
      _
    %2498 = vsyncpa [#allocation3], 1
    %s2499 = scalar_lea.sflag [#allocation3], 1
    %2500 = vsyncpa %s2499, 1
    %2501 = vsyncpa [#allocation6], 1
    %2502 = vsyncpa [#allocation9], 1
    %2503 = vsyncpa [#allocation4], 1
    %s2504 = scalar_lea.sflag [#allocation4], 1
    %2505 = vsyncpa %s2504, 1

</llo_original>
